<compile_context>
chip_gen: v7x
topology: tpu7x:2x2x1
jax: 0.10.0
libtpu: 0.0.40
codegen_flags: <defaults>
</compile_context>

<pallas_src>
import functools

import jax
import jax.numpy as jnp
from jax.experimental import pallas as pl
from jax.experimental.pallas import tpu as pltpu


def _round_up(x, m):
    return (x + m - 1) // m * m


# ----------------------------------------------------------------------------
# Pallas kernels
# ----------------------------------------------------------------------------
def _matmul_bias_kernel(x_ref, w_ref, b_ref, o_ref, acc_ref, *, relu):
    """Tiled matmul with f32 VMEM accumulator.  Grid = (M/tm, N/tn, K/tk);
    K is the innermost reduction axis ("arbitrary")."""
    k = pl.program_id(2)

    @pl.when(k == 0)
    def _():
        acc_ref[...] = jnp.zeros_like(acc_ref)

    acc_ref[...] += jnp.dot(x_ref[...], w_ref[...],
                            preferred_element_type=jnp.float32)

    # Write the output only once, at the last K step (keeps stores off the
    # critical path — matters on v5e's single vector-store slot).
    @pl.when(k == pl.num_programs(2) - 1)
    def _():
        acc = acc_ref[...] + b_ref[...]          # (tm, tn) + (1, tn) broadcast
        if relu:
            acc = jnp.maximum(acc, 0.0)
        o_ref[...] = acc.astype(o_ref.dtype)


def matmul_bias(x, w, b, relu=False, out_dtype=jnp.float32):
    """o = [relu](x @ w + b).  x:(M,K), w:(K,N), b:(N,).

    bf16 operands / f32 accumulation; M,N,K padded so every block satisfies
    the (16,128) tiling constraints and the output tile is lane-dense.
    """
    M, K = x.shape
    N = w.shape[1]

    # Tile sizes.
    tm = min(256, _round_up(M, 16))
    Np = _round_up(N, 128)
    if Np <= 256:
        tn = Np
    elif Np % 256 == 0:
        tn = 256
    else:
        tn = 128
    Kp = _round_up(K, 128)
    if Kp <= 512:
        tk = Kp
    elif Kp % 256 == 0:
        tk = 256
    else:
        tk = 128
    Mp = _round_up(M, tm)

    xp = jnp.pad(x, ((0, Mp - M), (0, Kp - K))).astype(jnp.bfloat16)
    wp = jnp.pad(w, ((0, Kp - K), (0, Np - N))).astype(jnp.bfloat16)
    bp = jnp.pad(b, (0, Np - N)).astype(jnp.float32).reshape(1, Np)

    out = pl.pallas_call(
        functools.partial(_matmul_bias_kernel, relu=relu),
        out_shape=jax.ShapeDtypeStruct((Mp, Np), out_dtype),
        grid=(Mp // tm, Np // tn, Kp // tk),
        in_specs=[
            pl.BlockSpec((tm, tk), lambda i, j, k: (i, k)),
            pl.BlockSpec((tk, tn), lambda i, j, k: (k, j)),
            pl.BlockSpec((1, tn), lambda i, j, k: (0, j)),
        ],
        out_specs=pl.BlockSpec((tm, tn), lambda i, j, k: (i, j)),
        scratch_shapes=[pltpu.VMEM((tm, tn), jnp.float32)],
        compiler_params=pltpu.CompilerParams(
            dimension_semantics=("parallel", "parallel", "arbitrary")),
    )(xp, wp, bp)
    return out[:M, :N]


def _log_softmax_c_kernel(x_ref, o_ref):
    x = x_ref[...].astype(jnp.float32)                       # (1, C, A)
    m = jnp.max(x, axis=1, keepdims=True)
    s = x - m
    lse = jnp.log(jnp.sum(jnp.exp(s), axis=1, keepdims=True))
    o_ref[...] = s - lse


def log_softmax_classdim(x):
    """log_softmax over axis=1 of (B, C, A): classes on sublanes, anchors on
    the lane-dense last dim.  Output is already the final permuted layout."""
    B, C, A = x.shape
    return pl.pallas_call(
        _log_softmax_c_kernel,
        out_shape=jax.ShapeDtypeStruct((B, C, A), jnp.float32),
        grid=(B,),
        in_specs=[pl.BlockSpec((1, C, A), lambda b: (b, 0, 0))],
        out_specs=pl.BlockSpec((1, C, A), lambda b: (b, 0, 0)),
        compiler_params=pltpu.CompilerParams(
            dimension_semantics=("parallel",)),
    )(x)


# ----------------------------------------------------------------------------
# Conv wrappers (im2col glue in JAX, matmul hot path in Pallas)
# ----------------------------------------------------------------------------
def _im2col_3x3(x, stride=1):
    """x: (B,H,W,C) -> ((B*Ho*Wo, 9*C), (Ho, Wo)); 'same' padding, strided
    gather (only the taps of the kept output pixels are materialized)."""
    B, H, W, C = x.shape
    xp = jnp.pad(x, ((0, 0), (1, 1), (1, 1), (0, 0)))
    cols = [xp[:, dy:dy + H:stride, dx:dx + W:stride, :]
            for dy in range(3) for dx in range(3)]
    cols = jnp.concatenate(cols, axis=-1)
    Ho, Wo = cols.shape[1], cols.shape[2]
    return cols.reshape(B * Ho * Wo, 9 * C), (Ho, Wo)


def conv3x3(x, w, b, stride=1, relu=False, out_dtype=jnp.bfloat16):
    """3x3 conv, padding=1, true strided (no overcompute+subsample)."""
    B, H, W, C = x.shape
    Cout = w.shape[-1]
    cols, (Ho, Wo) = _im2col_3x3(x, stride)
    out = matmul_bias(cols, w.reshape(9 * C, Cout), b,
                      relu=relu, out_dtype=out_dtype)
    return out.reshape(B, Ho, Wo, Cout)


def conv1x1(x, w, b, relu=False, out_dtype=jnp.bfloat16):
    B, H, W, C = x.shape
    Cout = w.shape[-1]
    out = matmul_bias(x.reshape(B * H * W, C), w.reshape(C, Cout), b,
                      relu=relu, out_dtype=out_dtype)
    return out.reshape(B, H, W, Cout)


def upsample2x_to(x, H, W):
    # TODO(synk): fuse nearest-neighbour upsample into the lateral conv1x1
    # kernel (write each output row twice) to save one HBM pass per level.
    up = jnp.repeat(jnp.repeat(x, 2, axis=1), 2, axis=2)
    return up[:, :H, :W, :]


# ----------------------------------------------------------------------------
# Deterministic parameter init
# ----------------------------------------------------------------------------
def _conv_init(key, kh, kw, cin, cout):
    fan_in = kh * kw * cin
    w = jax.random.normal(key, (kh, kw, cin, cout), jnp.float32) * (2.0 / fan_in) ** 0.5
    b = jnp.zeros((cout,), jnp.float32)
    return w, b


class SSDPallas:
    def __init__(self, classes, num_anchors=9, stem_channels=16,
                 mid_channels=32, fpn_channels=32, subnet_layers=2, seed=0):
        self.label2class = dict(zip(range(len(classes)), classes))
        self.num_classes = len(classes) + 1        # + background
        self.num_anchors = num_anchors

        key = jax.random.PRNGKey(seed)
        keys = iter(jax.random.split(key, 32))
        p = {}
        # ResNetFPN backbone (simplified)
        p['stem'] = _conv_init(next(keys), 3, 3, 3, stem_channels)
        p['c4'] = _conv_init(next(keys), 3, 3, stem_channels, mid_channels)
        p['c5'] = _conv_init(next(keys), 3, 3, mid_channels, mid_channels)
        p['lat3'] = _conv_init(next(keys), 1, 1, stem_channels, fpn_channels)
        p['lat4'] = _conv_init(next(keys), 1, 1, mid_channels, fpn_channels)
        p['lat5'] = _conv_init(next(keys), 1, 1, mid_channels, fpn_channels)
        p['smooth3'] = _conv_init(next(keys), 3, 3, fpn_channels, fpn_channels)
        p['smooth4'] = _conv_init(next(keys), 3, 3, fpn_channels, fpn_channels)
        p['smooth5'] = _conv_init(next(keys), 3, 3, fpn_channels, fpn_channels)

        # Subnets (weights shared across FPN levels, as in RetinaNet)
        def make_subnet(num_out):
            hidden = [_conv_init(next(keys), 3, 3, fpn_channels, fpn_channels)
                      for _ in range(subnet_layers)]
            out = _conv_init(next(keys), 3, 3, fpn_channels,
                             num_anchors * num_out)
            return {'hidden': hidden, 'out': out}

        p['bbox_subnet'] = make_subnet(4)
        p['label_subnet'] = make_subnet(self.num_classes)
        self.p = p
        self.fpn_channels = fpn_channels

    # ---- backbone: ResNetFPN ------------------------------------------------
    def backbone(self, x):
        c3 = conv3x3(x, *self.p['stem'], stride=2, relu=True)    # H/2
        c4 = conv3x3(c3, *self.p['c4'], stride=2, relu=True)     # H/4
        c5 = conv3x3(c4, *self.p['c5'], stride=2, relu=True)     # H/8
        p5 = conv1x1(c5, *self.p['lat5'])
        p4 = conv1x1(c4, *self.p['lat4']) + upsample2x_to(p5, c4.shape[1], c4.shape[2])
        p3 = conv1x1(c3, *self.p['lat3']) + upsample2x_to(p4, c3.shape[1], c3.shape[2])
        p3 = conv3x3(p3, *self.p['smooth3'])
        p4 = conv3x3(p4, *self.p['smooth4'])
        p5 = conv3x3(p5, *self.p['smooth5'])
        return [p3, p4, p5]

    # ---- Subnet -------------------------------------------------------------
    def _subnet(self, feature_maps, params, num_out):
        """Subnet weights are shared across FPN levels, so every level's
        im2col rows are concatenated into ONE matmul per layer (amortizes MXU
        drain / DMA / launch overhead and fills the M dimension)."""
        shapes = [fm.shape for fm in feature_maps]
        C = self.fpn_channels
        A = self.num_anchors

        def run_layer(fms, w, b, cout, relu, out_dtype):
            cols = [_im2col_3x3(fm)[0] for fm in fms]
            big = jnp.concatenate(cols, axis=0)          # (sum B*Hi*Wi, 9*C)
            out = matmul_bias(big, w.reshape(9 * C, cout), b,
                              relu=relu, out_dtype=out_dtype)
            flats, off = [], 0
            for (B, H, W, _) in shapes:
                n = B * H * W
                flats.append(out[off:off + n])
                off += n
            return flats

        h = feature_maps
        for (w, b) in params['hidden']:
            flats = run_layer(h, w, b, C, True, jnp.bfloat16)
            h = [f.reshape(B, H, W, C)
                 for f, (B, H, W, _) in zip(flats, shapes)]

        wo, bo = params['out']
        flats = run_layer(h, wo, bo, A * num_out, False, jnp.float32)
        outs = [f.reshape(B, H * W * A, num_out)
                for f, (B, H, W, _) in zip(flats, shapes)]
        return jnp.concatenate(outs, axis=1)             # (B, A_total, num_out)

    # ---- forward ------------------------------------------------------------
    def forward(self, x_nchw):
        x = jnp.transpose(x_nchw, (0, 2, 3, 1)).astype(jnp.bfloat16)  # NCHW -> NHWC
        feature_maps = self.backbone(x)
        multi_bboxes = self._subnet(feature_maps, self.p['bbox_subnet'], 4)
        multi_labels = self._subnet(feature_maps, self.p['label_subnet'],
                                    self.num_classes)
        # log_softmax over the class dim commutes with the permute, so run it
        # on the already-permuted (B, C+1, A_total) layout: classes on
        # sublanes, anchors lane-dense.  Result is the final output layout.
        multi_labels = jnp.transpose(multi_labels, (0, 2, 1))
        multi_labels = log_softmax_classdim(multi_labels)
        return multi_bboxes, multi_labels


if __name__ == "__main__":
    key = jax.random.PRNGKey(0)
    x = jax.random.normal(key, (2, 3, 16, 16), jnp.float32)   # NCHW, like PyTorch

    model = SSDPallas(classes=("person", "car", "dog"), seed=0)
    fwd = jax.jit(model.forward)
    multi_bboxes, multi_labels = fwd(x)
    jax.block_until_ready((multi_bboxes, multi_labels))

    # 16x16 input -> FPN levels 8x8, 4x4, 2x2; 9 anchors -> 9*(64+16+4) = 756
    assert multi_bboxes.shape == (2, 756, 4), multi_bboxes.shape
    assert multi_labels.shape == (2, 4, 756), multi_labels.shape
    # log_softmax sanity: exp sums to 1 along class dim
    s = jnp.sum(jnp.exp(multi_labels), axis=1)
    assert bool(jnp.allclose(s, 1.0, atol=1e-4)), "log_softmax check failed"

    print("KERNEL_OK")
</pallas_src>

<mosaic_0001>
module attributes {stable_mosaic.version = 11 : i64} {
  func.func @_matmul_bias_kernel(%arg0: i32, %arg1: i32, %arg2: i32, %arg3: memref<128x128xbf16, #tpu.memory_space<vmem>>, %arg4: memref<128x128xbf16, #tpu.memory_space<vmem>>, %arg5: memref<1x128xf32, #tpu.memory_space<vmem>>, %arg6: memref<128x128xbf16, #tpu.memory_space<vmem>>, %arg7: memref<128x128xf32, #tpu.memory_space<vmem>>) attributes {dimension_semantics = [#tpu.dimension_semantics<parallel>, #tpu.dimension_semantics<parallel>, #tpu.dimension_semantics<arbitrary>], iteration_bounds = array<i64: 1, 1, 1>, scalar_prefetch = 0 : i64, scratch_operands = 1 : i64, tpu.core_type = #tpu.core_type<tc>, window_params = [{transform_indices = @transform_0, window_bounds = array<i64: 128, 128>}, {transform_indices = @transform_1, window_bounds = array<i64: 128, 128>}, {transform_indices = @transform_2, window_bounds = array<i64: 1, 128>}, {transform_indices = @transform_3, window_bounds = array<i64: 128, 128>}]} {
    %c0_i32 = arith.constant 0 : i32
    %0 = arith.cmpi eq, %arg2, %c0_i32 : i32
    %1 = arith.extui %0 : i1 to i32
    %c0_i32_0 = arith.constant 0 : i32
    %2 = arith.cmpi ne, %1, %c0_i32_0 : i32
    scf.if %2 {
      %cst_10 = arith.constant 0.000000e+00 : f32
      %12 = vector.broadcast %cst_10 : f32 to vector<128x128xf32>
      %c0_11 = arith.constant 0 : index
      %c0_12 = arith.constant 0 : index
      %13 = vector.load %arg7[%c0_11, %c0_12] : memref<128x128xf32, #tpu.memory_space<vmem>>, vector<128x128xf32>
      tpu.vector_store %arg7[%c0_11, %c0_12], %12 {strides = array<i32>} : memref<128x128xf32, #tpu.memory_space<vmem>>, vector<128x128xf32>,
    } else {
    }
    %c0 = arith.constant 0 : index
    %c0_1 = arith.constant 0 : index
    %3 = vector.load %arg7[%c0, %c0_1] : memref<128x128xf32, #tpu.memory_space<vmem>>, vector<128x128xf32>
    %c0_2 = arith.constant 0 : index
    %c0_3 = arith.constant 0 : index
    %4 = vector.load %arg3[%c0_2, %c0_3] : memref<128x128xbf16, #tpu.memory_space<vmem>>, vector<128x128xbf16>
    %c0_4 = arith.constant 0 : index
    %c0_5 = arith.constant 0 : index
    %5 = vector.load %arg4[%c0_4, %c0_5] : memref<128x128xbf16, #tpu.memory_space<vmem>>, vector<128x128xbf16>
    %cst = arith.constant dense<0.000000e+00> : vector<128x128xf32>
    %6 = tpu.matmul %4, %5, %cst {dimension_numbers = #tpu.dot_dimension_numbers<[1], [0], [0], [1], [0, 0, 1, 1], [], []>} : vector<128x128xbf16>, vector<128x128xbf16>, vector<128x128xf32> -> vector<128x128xf32>
    %7 = arith.addf %3, %6 : vector<128x128xf32>
    %c0_6 = arith.constant 0 : index
    %c0_7 = arith.constant 0 : index
    %8 = vector.load %arg7[%c0_6, %c0_7] : memref<128x128xf32, #tpu.memory_space<vmem>>, vector<128x128xf32>
    tpu.vector_store %arg7[%c0_6, %c0_7], %7 {strides = array<i32>} : memref<128x128xf32, #tpu.memory_space<vmem>>, vector<128x128xf32>,
    %c0_i32_8 = arith.constant 0 : i32
    %9 = arith.cmpi eq, %arg2, %c0_i32_8 : i32
    %10 = arith.extui %9 : i1 to i32
    %c0_i32_9 = arith.constant 0 : i32
    %11 = arith.cmpi ne, %10, %c0_i32_9 : i32
    scf.if %11 {
      %c0_10 = arith.constant 0 : index
      %c0_11 = arith.constant 0 : index
      %12 = vector.load %arg7[%c0_10, %c0_11] : memref<128x128xf32, #tpu.memory_space<vmem>>, vector<128x128xf32>
      %c0_12 = arith.constant 0 : index
      %c0_13 = arith.constant 0 : index
      %13 = vector.load %arg5[%c0_12, %c0_13] : memref<1x128xf32, #tpu.memory_space<vmem>>, vector<1x128xf32>
      %14 = vector.broadcast %13 : vector<1x128xf32> to vector<128x128xf32>
      %15 = arith.addf %12, %14 : vector<128x128xf32>
      %cst_14 = arith.constant 0.000000e+00 : f32
      %16 = vector.broadcast %cst_14 : f32 to vector<128x128xf32>
      %17 = arith.maximumf %15, %16 : vector<128x128xf32>
      %18 = arith.truncf %17 : vector<128x128xf32> to vector<128x128xbf16>
      %c0_15 = arith.constant 0 : index
      %c0_16 = arith.constant 0 : index
      %19 = vector.load %arg6[%c0_15, %c0_16] : memref<128x128xbf16, #tpu.memory_space<vmem>>, vector<128x128xbf16>
      tpu.vector_store %arg6[%c0_15, %c0_16], %18 {strides = array<i32>} : memref<128x128xbf16, #tpu.memory_space<vmem>>, vector<128x128xbf16>,
    } else {
    }
    return
  }
  func.func @transform_0(%arg0: i32, %arg1: i32, %arg2: i32) -> (i32, i32) {
    %c0_i32 = arith.constant 0 : i32
    return %arg0, %arg2 : i32, i32
  }
  func.func @transform_1(%arg0: i32, %arg1: i32, %arg2: i32) -> (i32, i32) {
    %c0_i32 = arith.constant 0 : i32
    return %arg2, %arg1 : i32, i32
  }
  func.func @transform_2(%arg0: i32, %arg1: i32, %arg2: i32) -> (i32, i32) {
    %c0_i32 = arith.constant 0 : i32
    %c0_i32_0 = arith.constant 0 : i32
    return %c0_i32, %arg1 : i32, i32
  }
  func.func @transform_3(%arg0: i32, %arg1: i32, %arg2: i32) -> (i32, i32) {
    %c0_i32 = arith.constant 0 : i32
    return %arg0, %arg1 : i32, i32
  }
}

module attributes {stable_mosaic.version = 11 : i64} {
  func.func @_matmul_bias_kernel(%arg0: i32, %arg1: i32, %arg2: i32, %arg3: memref<128x128xbf16, #tpu.memory_space<vmem>>, %arg4: memref<128x128xbf16, #tpu.memory_space<vmem>>, %arg5: memref<1x128xf32, #tpu.memory_space<vmem>>, %arg6: memref<128x128xbf16, #tpu.memory_space<vmem>>, %arg7: memref<128x128xf32, #tpu.memory_space<vmem>>) attributes {dimension_semantics = [#tpu.dimension_semantics<parallel>, #tpu.dimension_semantics<parallel>, #tpu.dimension_semantics<arbitrary>], iteration_bounds = array<i64: 1, 1, 1>, scalar_prefetch = 0 : i64, scratch_operands = 1 : i64, tpu.core_type = #tpu.core_type<tc>, window_params = [{transform_indices = @transform_0, window_bounds = array<i64: 128, 128>}, {transform_indices = @transform_1, window_bounds = array<i64: 128, 128>}, {transform_indices = @transform_2, window_bounds = array<i64: 1, 128>}, {transform_indices = @transform_3, window_bounds = array<i64: 128, 128>}]} {
    %c0_i32 = arith.constant 0 : i32
    %0 = arith.cmpi eq, %arg2, %c0_i32 : i32
    %1 = arith.extui %0 : i1 to i32
    %c0_i32_0 = arith.constant 0 : i32
    %2 = arith.cmpi ne, %1, %c0_i32_0 : i32
    scf.if %2 {
      %cst_10 = arith.constant 0.000000e+00 : f32
      %12 = vector.broadcast %cst_10 : f32 to vector<128x128xf32>
      %c0_11 = arith.constant 0 : index
      %c0_12 = arith.constant 0 : index
      %13 = vector.load %arg7[%c0_11, %c0_12] : memref<128x128xf32, #tpu.memory_space<vmem>>, vector<128x128xf32>
      tpu.vector_store %arg7[%c0_11, %c0_12], %12 {strides = array<i32>} : memref<128x128xf32, #tpu.memory_space<vmem>>, vector<128x128xf32>,
    } else {
    }
    %c0 = arith.constant 0 : index
    %c0_1 = arith.constant 0 : index
    %3 = vector.load %arg7[%c0, %c0_1] : memref<128x128xf32, #tpu.memory_space<vmem>>, vector<128x128xf32>
    %c0_2 = arith.constant 0 : index
    %c0_3 = arith.constant 0 : index
    %4 = vector.load %arg3[%c0_2, %c0_3] : memref<128x128xbf16, #tpu.memory_space<vmem>>, vector<128x128xbf16>
    %c0_4 = arith.constant 0 : index
    %c0_5 = arith.constant 0 : index
    %5 = vector.load %arg4[%c0_4, %c0_5] : memref<128x128xbf16, #tpu.memory_space<vmem>>, vector<128x128xbf16>
    %cst = arith.constant dense<0.000000e+00> : vector<128x128xf32>
    %6 = tpu.matmul %4, %5, %cst {dimension_numbers = #tpu.dot_dimension_numbers<[1], [0], [0], [1], [0, 0, 1, 1], [], []>} : vector<128x128xbf16>, vector<128x128xbf16>, vector<128x128xf32> -> vector<128x128xf32>
    %7 = arith.addf %3, %6 : vector<128x128xf32>
    %c0_6 = arith.constant 0 : index
    %c0_7 = arith.constant 0 : index
    %8 = vector.load %arg7[%c0_6, %c0_7] : memref<128x128xf32, #tpu.memory_space<vmem>>, vector<128x128xf32>
    tpu.vector_store %arg7[%c0_6, %c0_7], %7 {strides = array<i32>} : memref<128x128xf32, #tpu.memory_space<vmem>>, vector<128x128xf32>,
    %c0_i32_8 = arith.constant 0 : i32
    %9 = arith.cmpi eq, %arg2, %c0_i32_8 : i32
    %10 = arith.extui %9 : i1 to i32
    %c0_i32_9 = arith.constant 0 : i32
    %11 = arith.cmpi ne, %10, %c0_i32_9 : i32
    scf.if %11 {
      %c0_10 = arith.constant 0 : index
      %c0_11 = arith.constant 0 : index
      %12 = vector.load %arg7[%c0_10, %c0_11] : memref<128x128xf32, #tpu.memory_space<vmem>>, vector<128x128xf32>
      %c0_12 = arith.constant 0 : index
      %c0_13 = arith.constant 0 : index
      %13 = vector.load %arg5[%c0_12, %c0_13] : memref<1x128xf32, #tpu.memory_space<vmem>>, vector<1x128xf32>
      %14 = vector.broadcast %13 : vector<1x128xf32> to vector<128x128xf32>
      %15 = arith.addf %12, %14 : vector<128x128xf32>
      %16 = arith.truncf %15 : vector<128x128xf32> to vector<128x128xbf16>
      %c0_14 = arith.constant 0 : index
      %c0_15 = arith.constant 0 : index
      %17 = vector.load %arg6[%c0_14, %c0_15] : memref<128x128xbf16, #tpu.memory_space<vmem>>, vector<128x128xbf16>
      tpu.vector_store %arg6[%c0_14, %c0_15], %16 {strides = array<i32>} : memref<128x128xbf16, #tpu.memory_space<vmem>>, vector<128x128xbf16>,
    } else {
    }
    return
  }
  func.func @transform_0(%arg0: i32, %arg1: i32, %arg2: i32) -> (i32, i32) {
    %c0_i32 = arith.constant 0 : i32
    return %arg0, %arg2 : i32, i32
  }
  func.func @transform_1(%arg0: i32, %arg1: i32, %arg2: i32) -> (i32, i32) {
    %c0_i32 = arith.constant 0 : i32
    return %arg2, %arg1 : i32, i32
  }
  func.func @transform_2(%arg0: i32, %arg1: i32, %arg2: i32) -> (i32, i32) {
    %c0_i32 = arith.constant 0 : i32
    %c0_i32_0 = arith.constant 0 : i32
    return %c0_i32, %arg1 : i32, i32
  }
  func.func @transform_3(%arg0: i32, %arg1: i32, %arg2: i32) -> (i32, i32) {
    %c0_i32 = arith.constant 0 : i32
    return %arg0, %arg1 : i32, i32
  }
}

module attributes {stable_mosaic.version = 11 : i64} {
  func.func @_matmul_bias_kernel(%arg0: i32, %arg1: i32, %arg2: i32, %arg3: memref<32x256xbf16, #tpu.memory_space<vmem>>, %arg4: memref<256x128xbf16, #tpu.memory_space<vmem>>, %arg5: memref<1x128xf32, #tpu.memory_space<vmem>>, %arg6: memref<32x128xbf16, #tpu.memory_space<vmem>>, %arg7: memref<32x128xf32, #tpu.memory_space<vmem>>) attributes {dimension_semantics = [#tpu.dimension_semantics<parallel>, #tpu.dimension_semantics<parallel>, #tpu.dimension_semantics<arbitrary>], iteration_bounds = array<i64: 1, 1, 1>, scalar_prefetch = 0 : i64, scratch_operands = 1 : i64, tpu.core_type = #tpu.core_type<tc>, window_params = [{transform_indices = @transform_0, window_bounds = array<i64: 32, 256>}, {transform_indices = @transform_1, window_bounds = array<i64: 256, 128>}, {transform_indices = @transform_2, window_bounds = array<i64: 1, 128>}, {transform_indices = @transform_3, window_bounds = array<i64: 32, 128>}]} {
    %c0_i32 = arith.constant 0 : i32
    %0 = arith.cmpi eq, %arg2, %c0_i32 : i32
    %1 = arith.extui %0 : i1 to i32
    %c0_i32_0 = arith.constant 0 : i32
    %2 = arith.cmpi ne, %1, %c0_i32_0 : i32
    scf.if %2 {
      %cst_10 = arith.constant 0.000000e+00 : f32
      %12 = vector.broadcast %cst_10 : f32 to vector<32x128xf32>
      %c0_11 = arith.constant 0 : index
      %c0_12 = arith.constant 0 : index
      %13 = vector.load %arg7[%c0_11, %c0_12] : memref<32x128xf32, #tpu.memory_space<vmem>>, vector<32x128xf32>
      tpu.vector_store %arg7[%c0_11, %c0_12], %12 {strides = array<i32>} : memref<32x128xf32, #tpu.memory_space<vmem>>, vector<32x128xf32>,
    } else {
    }
    %c0 = arith.constant 0 : index
    %c0_1 = arith.constant 0 : index
    %3 = vector.load %arg7[%c0, %c0_1] : memref<32x128xf32, #tpu.memory_space<vmem>>, vector<32x128xf32>
    %c0_2 = arith.constant 0 : index
    %c0_3 = arith.constant 0 : index
    %4 = vector.load %arg3[%c0_2, %c0_3] : memref<32x256xbf16, #tpu.memory_space<vmem>>, vector<32x256xbf16>
    %c0_4 = arith.constant 0 : index
    %c0_5 = arith.constant 0 : index
    %5 = vector.load %arg4[%c0_4, %c0_5] : memref<256x128xbf16, #tpu.memory_space<vmem>>, vector<256x128xbf16>
    %cst = arith.constant dense<0.000000e+00> : vector<32x128xf32>
    %6 = tpu.matmul %4, %5, %cst {dimension_numbers = #tpu.dot_dimension_numbers<[1], [0], [0], [1], [0, 0, 1, 1], [], []>} : vector<32x256xbf16>, vector<256x128xbf16>, vector<32x128xf32> -> vector<32x128xf32>
    %7 = arith.addf %3, %6 : vector<32x128xf32>
    %c0_6 = arith.constant 0 : index
    %c0_7 = arith.constant 0 : index
    %8 = vector.load %arg7[%c0_6, %c0_7] : memref<32x128xf32, #tpu.memory_space<vmem>>, vector<32x128xf32>
    tpu.vector_store %arg7[%c0_6, %c0_7], %7 {strides = array<i32>} : memref<32x128xf32, #tpu.memory_space<vmem>>, vector<32x128xf32>,
    %c0_i32_8 = arith.constant 0 : i32
    %9 = arith.cmpi eq, %arg2, %c0_i32_8 : i32
    %10 = arith.extui %9 : i1 to i32
    %c0_i32_9 = arith.constant 0 : i32
    %11 = arith.cmpi ne, %10, %c0_i32_9 : i32
    scf.if %11 {
      %c0_10 = arith.constant 0 : index
      %c0_11 = arith.constant 0 : index
      %12 = vector.load %arg7[%c0_10, %c0_11] : memref<32x128xf32, #tpu.memory_space<vmem>>, vector<32x128xf32>
      %c0_12 = arith.constant 0 : index
      %c0_13 = arith.constant 0 : index
      %13 = vector.load %arg5[%c0_12, %c0_13] : memref<1x128xf32, #tpu.memory_space<vmem>>, vector<1x128xf32>
      %14 = vector.broadcast %13 : vector<1x128xf32> to vector<32x128xf32>
      %15 = arith.addf %12, %14 : vector<32x128xf32>
      %cst_14 = arith.constant 0.000000e+00 : f32
      %16 = vector.broadcast %cst_14 : f32 to vector<32x128xf32>
      %17 = arith.maximumf %15, %16 : vector<32x128xf32>
      %18 = arith.truncf %17 : vector<32x128xf32> to vector<32x128xbf16>
      %c0_15 = arith.constant 0 : index
      %c0_16 = arith.constant 0 : index
      %19 = vector.load %arg6[%c0_15, %c0_16] : memref<32x128xbf16, #tpu.memory_space<vmem>>, vector<32x128xbf16>
      tpu.vector_store %arg6[%c0_15, %c0_16], %18 {strides = array<i32>} : memref<32x128xbf16, #tpu.memory_space<vmem>>, vector<32x128xbf16>,
    } else {
    }
    return
  }
  func.func @transform_0(%arg0: i32, %arg1: i32, %arg2: i32) -> (i32, i32) {
    %c0_i32 = arith.constant 0 : i32
    return %arg0, %arg2 : i32, i32
  }
  func.func @transform_1(%arg0: i32, %arg1: i32, %arg2: i32) -> (i32, i32) {
    %c0_i32 = arith.constant 0 : i32
    return %arg2, %arg1 : i32, i32
  }
  func.func @transform_2(%arg0: i32, %arg1: i32, %arg2: i32) -> (i32, i32) {
    %c0_i32 = arith.constant 0 : i32
    %c0_i32_0 = arith.constant 0 : i32
    return %c0_i32, %arg1 : i32, i32
  }
  func.func @transform_3(%arg0: i32, %arg1: i32, %arg2: i32) -> (i32, i32) {
    %c0_i32 = arith.constant 0 : i32
    return %arg0, %arg1 : i32, i32
  }
}

module attributes {stable_mosaic.version = 11 : i64} {
  func.func @_matmul_bias_kernel(%arg0: i32, %arg1: i32, %arg2: i32, %arg3: memref<32x128xbf16, #tpu.memory_space<vmem>>, %arg4: memref<128x128xbf16, #tpu.memory_space<vmem>>, %arg5: memref<1x128xf32, #tpu.memory_space<vmem>>, %arg6: memref<32x128xbf16, #tpu.memory_space<vmem>>, %arg7: memref<32x128xf32, #tpu.memory_space<vmem>>) attributes {dimension_semantics = [#tpu.dimension_semantics<parallel>, #tpu.dimension_semantics<parallel>, #tpu.dimension_semantics<arbitrary>], iteration_bounds = array<i64: 1, 1, 1>, scalar_prefetch = 0 : i64, scratch_operands = 1 : i64, tpu.core_type = #tpu.core_type<tc>, window_params = [{transform_indices = @transform_0, window_bounds = array<i64: 32, 128>}, {transform_indices = @transform_1, window_bounds = array<i64: 128, 128>}, {transform_indices = @transform_2, window_bounds = array<i64: 1, 128>}, {transform_indices = @transform_3, window_bounds = array<i64: 32, 128>}]} {
    %c0_i32 = arith.constant 0 : i32
    %0 = arith.cmpi eq, %arg2, %c0_i32 : i32
    %1 = arith.extui %0 : i1 to i32
    %c0_i32_0 = arith.constant 0 : i32
    %2 = arith.cmpi ne, %1, %c0_i32_0 : i32
    scf.if %2 {
      %cst_10 = arith.constant 0.000000e+00 : f32
      %12 = vector.broadcast %cst_10 : f32 to vector<32x128xf32>
      %c0_11 = arith.constant 0 : index
      %c0_12 = arith.constant 0 : index
      %13 = vector.load %arg7[%c0_11, %c0_12] : memref<32x128xf32, #tpu.memory_space<vmem>>, vector<32x128xf32>
      tpu.vector_store %arg7[%c0_11, %c0_12], %12 {strides = array<i32>} : memref<32x128xf32, #tpu.memory_space<vmem>>, vector<32x128xf32>,
    } else {
    }
    %c0 = arith.constant 0 : index
    %c0_1 = arith.constant 0 : index
    %3 = vector.load %arg7[%c0, %c0_1] : memref<32x128xf32, #tpu.memory_space<vmem>>, vector<32x128xf32>
    %c0_2 = arith.constant 0 : index
    %c0_3 = arith.constant 0 : index
    %4 = vector.load %arg3[%c0_2, %c0_3] : memref<32x128xbf16, #tpu.memory_space<vmem>>, vector<32x128xbf16>
    %c0_4 = arith.constant 0 : index
    %c0_5 = arith.constant 0 : index
    %5 = vector.load %arg4[%c0_4, %c0_5] : memref<128x128xbf16, #tpu.memory_space<vmem>>, vector<128x128xbf16>
    %cst = arith.constant dense<0.000000e+00> : vector<32x128xf32>
    %6 = tpu.matmul %4, %5, %cst {dimension_numbers = #tpu.dot_dimension_numbers<[1], [0], [0], [1], [0, 0, 1, 1], [], []>} : vector<32x128xbf16>, vector<128x128xbf16>, vector<32x128xf32> -> vector<32x128xf32>
    %7 = arith.addf %3, %6 : vector<32x128xf32>
    %c0_6 = arith.constant 0 : index
    %c0_7 = arith.constant 0 : index
    %8 = vector.load %arg7[%c0_6, %c0_7] : memref<32x128xf32, #tpu.memory_space<vmem>>, vector<32x128xf32>
    tpu.vector_store %arg7[%c0_6, %c0_7], %7 {strides = array<i32>} : memref<32x128xf32, #tpu.memory_space<vmem>>, vector<32x128xf32>,
    %c0_i32_8 = arith.constant 0 : i32
    %9 = arith.cmpi eq, %arg2, %c0_i32_8 : i32
    %10 = arith.extui %9 : i1 to i32
    %c0_i32_9 = arith.constant 0 : i32
    %11 = arith.cmpi ne, %10, %c0_i32_9 : i32
    scf.if %11 {
      %c0_10 = arith.constant 0 : index
      %c0_11 = arith.constant 0 : index
      %12 = vector.load %arg7[%c0_10, %c0_11] : memref<32x128xf32, #tpu.memory_space<vmem>>, vector<32x128xf32>
      %c0_12 = arith.constant 0 : index
      %c0_13 = arith.constant 0 : index
      %13 = vector.load %arg5[%c0_12, %c0_13] : memref<1x128xf32, #tpu.memory_space<vmem>>, vector<1x128xf32>
      %14 = vector.broadcast %13 : vector<1x128xf32> to vector<32x128xf32>
      %15 = arith.addf %12, %14 : vector<32x128xf32>
      %16 = arith.truncf %15 : vector<32x128xf32> to vector<32x128xbf16>
      %c0_14 = arith.constant 0 : index
      %c0_15 = arith.constant 0 : index
      %17 = vector.load %arg6[%c0_14, %c0_15] : memref<32x128xbf16, #tpu.memory_space<vmem>>, vector<32x128xbf16>
      tpu.vector_store %arg6[%c0_14, %c0_15], %16 {strides = array<i32>} : memref<32x128xbf16, #tpu.memory_space<vmem>>, vector<32x128xbf16>,
    } else {
    }
    return
  }
  func.func @transform_0(%arg0: i32, %arg1: i32, %arg2: i32) -> (i32, i32) {
    %c0_i32 = arith.constant 0 : i32
    return %arg0, %arg2 : i32, i32
  }
  func.func @transform_1(%arg0: i32, %arg1: i32, %arg2: i32) -> (i32, i32) {
    %c0_i32 = arith.constant 0 : i32
    return %arg2, %arg1 : i32, i32
  }
  func.func @transform_2(%arg0: i32, %arg1: i32, %arg2: i32) -> (i32, i32) {
    %c0_i32 = arith.constant 0 : i32
    %c0_i32_0 = arith.constant 0 : i32
    return %c0_i32, %arg1 : i32, i32
  }
  func.func @transform_3(%arg0: i32, %arg1: i32, %arg2: i32) -> (i32, i32) {
    %c0_i32 = arith.constant 0 : i32
    return %arg0, %arg1 : i32, i32
  }
}

module attributes {stable_mosaic.version = 11 : i64} {
  func.func @_matmul_bias_kernel(%arg0: i32, %arg1: i32, %arg2: i32, %arg3: memref<16x384xbf16, #tpu.memory_space<vmem>>, %arg4: memref<384x128xbf16, #tpu.memory_space<vmem>>, %arg5: memref<1x128xf32, #tpu.memory_space<vmem>>, %arg6: memref<16x128xbf16, #tpu.memory_space<vmem>>, %arg7: memref<16x128xf32, #tpu.memory_space<vmem>>) attributes {dimension_semantics = [#tpu.dimension_semantics<parallel>, #tpu.dimension_semantics<parallel>, #tpu.dimension_semantics<arbitrary>], iteration_bounds = array<i64: 1, 1, 1>, scalar_prefetch = 0 : i64, scratch_operands = 1 : i64, tpu.core_type = #tpu.core_type<tc>, window_params = [{transform_indices = @transform_0, window_bounds = array<i64: 16, 384>}, {transform_indices = @transform_1, window_bounds = array<i64: 384, 128>}, {transform_indices = @transform_2, window_bounds = array<i64: 1, 128>}, {transform_indices = @transform_3, window_bounds = array<i64: 16, 128>}]} {
    %c0_i32 = arith.constant 0 : i32
    %0 = arith.cmpi eq, %arg2, %c0_i32 : i32
    %1 = arith.extui %0 : i1 to i32
    %c0_i32_0 = arith.constant 0 : i32
    %2 = arith.cmpi ne, %1, %c0_i32_0 : i32
    scf.if %2 {
      %cst_10 = arith.constant 0.000000e+00 : f32
      %12 = vector.broadcast %cst_10 : f32 to vector<16x128xf32>
      %c0_11 = arith.constant 0 : index
      %c0_12 = arith.constant 0 : index
      %13 = vector.load %arg7[%c0_11, %c0_12] : memref<16x128xf32, #tpu.memory_space<vmem>>, vector<16x128xf32>
      tpu.vector_store %arg7[%c0_11, %c0_12], %12 {strides = array<i32>} : memref<16x128xf32, #tpu.memory_space<vmem>>, vector<16x128xf32>,
    } else {
    }
    %c0 = arith.constant 0 : index
    %c0_1 = arith.constant 0 : index
    %3 = vector.load %arg7[%c0, %c0_1] : memref<16x128xf32, #tpu.memory_space<vmem>>, vector<16x128xf32>
    %c0_2 = arith.constant 0 : index
    %c0_3 = arith.constant 0 : index
    %4 = vector.load %arg3[%c0_2, %c0_3] : memref<16x384xbf16, #tpu.memory_space<vmem>>, vector<16x384xbf16>
    %c0_4 = arith.constant 0 : index
    %c0_5 = arith.constant 0 : index
    %5 = vector.load %arg4[%c0_4, %c0_5] : memref<384x128xbf16, #tpu.memory_space<vmem>>, vector<384x128xbf16>
    %cst = arith.constant dense<0.000000e+00> : vector<16x128xf32>
    %6 = tpu.matmul %4, %5, %cst {dimension_numbers = #tpu.dot_dimension_numbers<[1], [0], [0], [1], [0, 0, 1, 1], [], []>} : vector<16x384xbf16>, vector<384x128xbf16>, vector<16x128xf32> -> vector<16x128xf32>
    %7 = arith.addf %3, %6 : vector<16x128xf32>
    %c0_6 = arith.constant 0 : index
    %c0_7 = arith.constant 0 : index
    %8 = vector.load %arg7[%c0_6, %c0_7] : memref<16x128xf32, #tpu.memory_space<vmem>>, vector<16x128xf32>
    tpu.vector_store %arg7[%c0_6, %c0_7], %7 {strides = array<i32>} : memref<16x128xf32, #tpu.memory_space<vmem>>, vector<16x128xf32>,
    %c0_i32_8 = arith.constant 0 : i32
    %9 = arith.cmpi eq, %arg2, %c0_i32_8 : i32
    %10 = arith.extui %9 : i1 to i32
    %c0_i32_9 = arith.constant 0 : i32
    %11 = arith.cmpi ne, %10, %c0_i32_9 : i32
    scf.if %11 {
      %c0_10 = arith.constant 0 : index
      %c0_11 = arith.constant 0 : index
      %12 = vector.load %arg7[%c0_10, %c0_11] : memref<16x128xf32, #tpu.memory_space<vmem>>, vector<16x128xf32>
      %c0_12 = arith.constant 0 : index
      %c0_13 = arith.constant 0 : index
      %13 = vector.load %arg5[%c0_12, %c0_13] : memref<1x128xf32, #tpu.memory_space<vmem>>, vector<1x128xf32>
      %14 = vector.broadcast %13 : vector<1x128xf32> to vector<16x128xf32>
      %15 = arith.addf %12, %14 : vector<16x128xf32>
      %cst_14 = arith.constant 0.000000e+00 : f32
      %16 = vector.broadcast %cst_14 : f32 to vector<16x128xf32>
      %17 = arith.maximumf %15, %16 : vector<16x128xf32>
      %18 = arith.truncf %17 : vector<16x128xf32> to vector<16x128xbf16>
      %c0_15 = arith.constant 0 : index
      %c0_16 = arith.constant 0 : index
      %19 = vector.load %arg6[%c0_15, %c0_16] : memref<16x128xbf16, #tpu.memory_space<vmem>>, vector<16x128xbf16>
      tpu.vector_store %arg6[%c0_15, %c0_16], %18 {strides = array<i32>} : memref<16x128xbf16, #tpu.memory_space<vmem>>, vector<16x128xbf16>,
    } else {
    }
    return
  }
  func.func @transform_0(%arg0: i32, %arg1: i32, %arg2: i32) -> (i32, i32) {
    %c0_i32 = arith.constant 0 : i32
    return %arg0, %arg2 : i32, i32
  }
  func.func @transform_1(%arg0: i32, %arg1: i32, %arg2: i32) -> (i32, i32) {
    %c0_i32 = arith.constant 0 : i32
    return %arg2, %arg1 : i32, i32
  }
  func.func @transform_2(%arg0: i32, %arg1: i32, %arg2: i32) -> (i32, i32) {
    %c0_i32 = arith.constant 0 : i32
    %c0_i32_0 = arith.constant 0 : i32
    return %c0_i32, %arg1 : i32, i32
  }
  func.func @transform_3(%arg0: i32, %arg1: i32, %arg2: i32) -> (i32, i32) {
    %c0_i32 = arith.constant 0 : i32
    return %arg0, %arg1 : i32, i32
  }
}

module attributes {stable_mosaic.version = 11 : i64} {
  func.func @_matmul_bias_kernel(%arg0: i32, %arg1: i32, %arg2: i32, %arg3: memref<16x128xbf16, #tpu.memory_space<vmem>>, %arg4: memref<128x128xbf16, #tpu.memory_space<vmem>>, %arg5: memref<1x128xf32, #tpu.memory_space<vmem>>, %arg6: memref<16x128xbf16, #tpu.memory_space<vmem>>, %arg7: memref<16x128xf32, #tpu.memory_space<vmem>>) attributes {dimension_semantics = [#tpu.dimension_semantics<parallel>, #tpu.dimension_semantics<parallel>, #tpu.dimension_semantics<arbitrary>], iteration_bounds = array<i64: 1, 1, 1>, scalar_prefetch = 0 : i64, scratch_operands = 1 : i64, tpu.core_type = #tpu.core_type<tc>, window_params = [{transform_indices = @transform_0, window_bounds = array<i64: 16, 128>}, {transform_indices = @transform_1, window_bounds = array<i64: 128, 128>}, {transform_indices = @transform_2, window_bounds = array<i64: 1, 128>}, {transform_indices = @transform_3, window_bounds = array<i64: 16, 128>}]} {
    %c0_i32 = arith.constant 0 : i32
    %0 = arith.cmpi eq, %arg2, %c0_i32 : i32
    %1 = arith.extui %0 : i1 to i32
    %c0_i32_0 = arith.constant 0 : i32
    %2 = arith.cmpi ne, %1, %c0_i32_0 : i32
    scf.if %2 {
      %cst_10 = arith.constant 0.000000e+00 : f32
      %12 = vector.broadcast %cst_10 : f32 to vector<16x128xf32>
      %c0_11 = arith.constant 0 : index
      %c0_12 = arith.constant 0 : index
      %13 = vector.load %arg7[%c0_11, %c0_12] : memref<16x128xf32, #tpu.memory_space<vmem>>, vector<16x128xf32>
      tpu.vector_store %arg7[%c0_11, %c0_12], %12 {strides = array<i32>} : memref<16x128xf32, #tpu.memory_space<vmem>>, vector<16x128xf32>,
    } else {
    }
    %c0 = arith.constant 0 : index
    %c0_1 = arith.constant 0 : index
    %3 = vector.load %arg7[%c0, %c0_1] : memref<16x128xf32, #tpu.memory_space<vmem>>, vector<16x128xf32>
    %c0_2 = arith.constant 0 : index
    %c0_3 = arith.constant 0 : index
    %4 = vector.load %arg3[%c0_2, %c0_3] : memref<16x128xbf16, #tpu.memory_space<vmem>>, vector<16x128xbf16>
    %c0_4 = arith.constant 0 : index
    %c0_5 = arith.constant 0 : index
    %5 = vector.load %arg4[%c0_4, %c0_5] : memref<128x128xbf16, #tpu.memory_space<vmem>>, vector<128x128xbf16>
    %cst = arith.constant dense<0.000000e+00> : vector<16x128xf32>
    %6 = tpu.matmul %4, %5, %cst {dimension_numbers = #tpu.dot_dimension_numbers<[1], [0], [0], [1], [0, 0, 1, 1], [], []>} : vector<16x128xbf16>, vector<128x128xbf16>, vector<16x128xf32> -> vector<16x128xf32>
    %7 = arith.addf %3, %6 : vector<16x128xf32>
    %c0_6 = arith.constant 0 : index
    %c0_7 = arith.constant 0 : index
    %8 = vector.load %arg7[%c0_6, %c0_7] : memref<16x128xf32, #tpu.memory_space<vmem>>, vector<16x128xf32>
    tpu.vector_store %arg7[%c0_6, %c0_7], %7 {strides = array<i32>} : memref<16x128xf32, #tpu.memory_space<vmem>>, vector<16x128xf32>,
    %c0_i32_8 = arith.constant 0 : i32
    %9 = arith.cmpi eq, %arg2, %c0_i32_8 : i32
    %10 = arith.extui %9 : i1 to i32
    %c0_i32_9 = arith.constant 0 : i32
    %11 = arith.cmpi ne, %10, %c0_i32_9 : i32
    scf.if %11 {
      %c0_10 = arith.constant 0 : index
      %c0_11 = arith.constant 0 : index
      %12 = vector.load %arg7[%c0_10, %c0_11] : memref<16x128xf32, #tpu.memory_space<vmem>>, vector<16x128xf32>
      %c0_12 = arith.constant 0 : index
      %c0_13 = arith.constant 0 : index
      %13 = vector.load %arg5[%c0_12, %c0_13] : memref<1x128xf32, #tpu.memory_space<vmem>>, vector<1x128xf32>
      %14 = vector.broadcast %13 : vector<1x128xf32> to vector<16x128xf32>
      %15 = arith.addf %12, %14 : vector<16x128xf32>
      %16 = arith.truncf %15 : vector<16x128xf32> to vector<16x128xbf16>
      %c0_14 = arith.constant 0 : index
      %c0_15 = arith.constant 0 : index
      %17 = vector.load %arg6[%c0_14, %c0_15] : memref<16x128xbf16, #tpu.memory_space<vmem>>, vector<16x128xbf16>
      tpu.vector_store %arg6[%c0_14, %c0_15], %16 {strides = array<i32>} : memref<16x128xbf16, #tpu.memory_space<vmem>>, vector<16x128xbf16>,
    } else {
    }
    return
  }
  func.func @transform_0(%arg0: i32, %arg1: i32, %arg2: i32) -> (i32, i32) {
    %c0_i32 = arith.constant 0 : i32
    return %arg0, %arg2 : i32, i32
  }
  func.func @transform_1(%arg0: i32, %arg1: i32, %arg2: i32) -> (i32, i32) {
    %c0_i32 = arith.constant 0 : i32
    return %arg2, %arg1 : i32, i32
  }
  func.func @transform_2(%arg0: i32, %arg1: i32, %arg2: i32) -> (i32, i32) {
    %c0_i32 = arith.constant 0 : i32
    %c0_i32_0 = arith.constant 0 : i32
    return %c0_i32, %arg1 : i32, i32
  }
  func.func @transform_3(%arg0: i32, %arg1: i32, %arg2: i32) -> (i32, i32) {
    %c0_i32 = arith.constant 0 : i32
    return %arg0, %arg1 : i32, i32
  }
}

module attributes {stable_mosaic.version = 11 : i64} {
  func.func @_matmul_bias_kernel(%arg0: i32, %arg1: i32, %arg2: i32, %arg3: memref<16x384xbf16, #tpu.memory_space<vmem>>, %arg4: memref<384x128xbf16, #tpu.memory_space<vmem>>, %arg5: memref<1x128xf32, #tpu.memory_space<vmem>>, %arg6: memref<16x128xbf16, #tpu.memory_space<vmem>>, %arg7: memref<16x128xf32, #tpu.memory_space<vmem>>) attributes {dimension_semantics = [#tpu.dimension_semantics<parallel>, #tpu.dimension_semantics<parallel>, #tpu.dimension_semantics<arbitrary>], iteration_bounds = array<i64: 1, 1, 1>, scalar_prefetch = 0 : i64, scratch_operands = 1 : i64, tpu.core_type = #tpu.core_type<tc>, window_params = [{transform_indices = @transform_0, window_bounds = array<i64: 16, 384>}, {transform_indices = @transform_1, window_bounds = array<i64: 384, 128>}, {transform_indices = @transform_2, window_bounds = array<i64: 1, 128>}, {transform_indices = @transform_3, window_bounds = array<i64: 16, 128>}]} {
    %c0_i32 = arith.constant 0 : i32
    %0 = arith.cmpi eq, %arg2, %c0_i32 : i32
    %1 = arith.extui %0 : i1 to i32
    %c0_i32_0 = arith.constant 0 : i32
    %2 = arith.cmpi ne, %1, %c0_i32_0 : i32
    scf.if %2 {
      %cst_10 = arith.constant 0.000000e+00 : f32
      %12 = vector.broadcast %cst_10 : f32 to vector<16x128xf32>
      %c0_11 = arith.constant 0 : index
      %c0_12 = arith.constant 0 : index
      %13 = vector.load %arg7[%c0_11, %c0_12] : memref<16x128xf32, #tpu.memory_space<vmem>>, vector<16x128xf32>
      tpu.vector_store %arg7[%c0_11, %c0_12], %12 {strides = array<i32>} : memref<16x128xf32, #tpu.memory_space<vmem>>, vector<16x128xf32>,
    } else {
    }
    %c0 = arith.constant 0 : index
    %c0_1 = arith.constant 0 : index
    %3 = vector.load %arg7[%c0, %c0_1] : memref<16x128xf32, #tpu.memory_space<vmem>>, vector<16x128xf32>
    %c0_2 = arith.constant 0 : index
    %c0_3 = arith.constant 0 : index
    %4 = vector.load %arg3[%c0_2, %c0_3] : memref<16x384xbf16, #tpu.memory_space<vmem>>, vector<16x384xbf16>
    %c0_4 = arith.constant 0 : index
    %c0_5 = arith.constant 0 : index
    %5 = vector.load %arg4[%c0_4, %c0_5] : memref<384x128xbf16, #tpu.memory_space<vmem>>, vector<384x128xbf16>
    %cst = arith.constant dense<0.000000e+00> : vector<16x128xf32>
    %6 = tpu.matmul %4, %5, %cst {dimension_numbers = #tpu.dot_dimension_numbers<[1], [0], [0], [1], [0, 0, 1, 1], [], []>} : vector<16x384xbf16>, vector<384x128xbf16>, vector<16x128xf32> -> vector<16x128xf32>
    %7 = arith.addf %3, %6 : vector<16x128xf32>
    %c0_6 = arith.constant 0 : index
    %c0_7 = arith.constant 0 : index
    %8 = vector.load %arg7[%c0_6, %c0_7] : memref<16x128xf32, #tpu.memory_space<vmem>>, vector<16x128xf32>
    tpu.vector_store %arg7[%c0_6, %c0_7], %7 {strides = array<i32>} : memref<16x128xf32, #tpu.memory_space<vmem>>, vector<16x128xf32>,
    %c0_i32_8 = arith.constant 0 : i32
    %9 = arith.cmpi eq, %arg2, %c0_i32_8 : i32
    %10 = arith.extui %9 : i1 to i32
    %c0_i32_9 = arith.constant 0 : i32
    %11 = arith.cmpi ne, %10, %c0_i32_9 : i32
    scf.if %11 {
      %c0_10 = arith.constant 0 : index
      %c0_11 = arith.constant 0 : index
      %12 = vector.load %arg7[%c0_10, %c0_11] : memref<16x128xf32, #tpu.memory_space<vmem>>, vector<16x128xf32>
      %c0_12 = arith.constant 0 : index
      %c0_13 = arith.constant 0 : index
      %13 = vector.load %arg5[%c0_12, %c0_13] : memref<1x128xf32, #tpu.memory_space<vmem>>, vector<1x128xf32>
      %14 = vector.broadcast %13 : vector<1x128xf32> to vector<16x128xf32>
      %15 = arith.addf %12, %14 : vector<16x128xf32>
      %16 = arith.truncf %15 : vector<16x128xf32> to vector<16x128xbf16>
      %c0_14 = arith.constant 0 : index
      %c0_15 = arith.constant 0 : index
      %17 = vector.load %arg6[%c0_14, %c0_15] : memref<16x128xbf16, #tpu.memory_space<vmem>>, vector<16x128xbf16>
      tpu.vector_store %arg6[%c0_14, %c0_15], %16 {strides = array<i32>} : memref<16x128xbf16, #tpu.memory_space<vmem>>, vector<16x128xbf16>,
    } else {
    }
    return
  }
  func.func @transform_0(%arg0: i32, %arg1: i32, %arg2: i32) -> (i32, i32) {
    %c0_i32 = arith.constant 0 : i32
    return %arg0, %arg2 : i32, i32
  }
  func.func @transform_1(%arg0: i32, %arg1: i32, %arg2: i32) -> (i32, i32) {
    %c0_i32 = arith.constant 0 : i32
    return %arg2, %arg1 : i32, i32
  }
  func.func @transform_2(%arg0: i32, %arg1: i32, %arg2: i32) -> (i32, i32) {
    %c0_i32 = arith.constant 0 : i32
    %c0_i32_0 = arith.constant 0 : i32
    return %c0_i32, %arg1 : i32, i32
  }
  func.func @transform_3(%arg0: i32, %arg1: i32, %arg2: i32) -> (i32, i32) {
    %c0_i32 = arith.constant 0 : i32
    return %arg0, %arg1 : i32, i32
  }
}

module attributes {stable_mosaic.version = 11 : i64} {
  func.func @_matmul_bias_kernel(%arg0: i32, %arg1: i32, %arg2: i32, %arg3: memref<32x384xbf16, #tpu.memory_space<vmem>>, %arg4: memref<384x128xbf16, #tpu.memory_space<vmem>>, %arg5: memref<1x128xf32, #tpu.memory_space<vmem>>, %arg6: memref<32x128xbf16, #tpu.memory_space<vmem>>, %arg7: memref<32x128xf32, #tpu.memory_space<vmem>>) attributes {dimension_semantics = [#tpu.dimension_semantics<parallel>, #tpu.dimension_semantics<parallel>, #tpu.dimension_semantics<arbitrary>], iteration_bounds = array<i64: 1, 1, 1>, scalar_prefetch = 0 : i64, scratch_operands = 1 : i64, tpu.core_type = #tpu.core_type<tc>, window_params = [{transform_indices = @transform_0, window_bounds = array<i64: 32, 384>}, {transform_indices = @transform_1, window_bounds = array<i64: 384, 128>}, {transform_indices = @transform_2, window_bounds = array<i64: 1, 128>}, {transform_indices = @transform_3, window_bounds = array<i64: 32, 128>}]} {
    %c0_i32 = arith.constant 0 : i32
    %0 = arith.cmpi eq, %arg2, %c0_i32 : i32
    %1 = arith.extui %0 : i1 to i32
    %c0_i32_0 = arith.constant 0 : i32
    %2 = arith.cmpi ne, %1, %c0_i32_0 : i32
    scf.if %2 {
      %cst_10 = arith.constant 0.000000e+00 : f32
      %12 = vector.broadcast %cst_10 : f32 to vector<32x128xf32>
      %c0_11 = arith.constant 0 : index
      %c0_12 = arith.constant 0 : index
      %13 = vector.load %arg7[%c0_11, %c0_12] : memref<32x128xf32, #tpu.memory_space<vmem>>, vector<32x128xf32>
      tpu.vector_store %arg7[%c0_11, %c0_12], %12 {strides = array<i32>} : memref<32x128xf32, #tpu.memory_space<vmem>>, vector<32x128xf32>,
    } else {
    }
    %c0 = arith.constant 0 : index
    %c0_1 = arith.constant 0 : index
    %3 = vector.load %arg7[%c0, %c0_1] : memref<32x128xf32, #tpu.memory_space<vmem>>, vector<32x128xf32>
    %c0_2 = arith.constant 0 : index
    %c0_3 = arith.constant 0 : index
    %4 = vector.load %arg3[%c0_2, %c0_3] : memref<32x384xbf16, #tpu.memory_space<vmem>>, vector<32x384xbf16>
    %c0_4 = arith.constant 0 : index
    %c0_5 = arith.constant 0 : index
    %5 = vector.load %arg4[%c0_4, %c0_5] : memref<384x128xbf16, #tpu.memory_space<vmem>>, vector<384x128xbf16>
    %cst = arith.constant dense<0.000000e+00> : vector<32x128xf32>
    %6 = tpu.matmul %4, %5, %cst {dimension_numbers = #tpu.dot_dimension_numbers<[1], [0], [0], [1], [0, 0, 1, 1], [], []>} : vector<32x384xbf16>, vector<384x128xbf16>, vector<32x128xf32> -> vector<32x128xf32>
    %7 = arith.addf %3, %6 : vector<32x128xf32>
    %c0_6 = arith.constant 0 : index
    %c0_7 = arith.constant 0 : index
    %8 = vector.load %arg7[%c0_6, %c0_7] : memref<32x128xf32, #tpu.memory_space<vmem>>, vector<32x128xf32>
    tpu.vector_store %arg7[%c0_6, %c0_7], %7 {strides = array<i32>} : memref<32x128xf32, #tpu.memory_space<vmem>>, vector<32x128xf32>,
    %c0_i32_8 = arith.constant 0 : i32
    %9 = arith.cmpi eq, %arg2, %c0_i32_8 : i32
    %10 = arith.extui %9 : i1 to i32
    %c0_i32_9 = arith.constant 0 : i32
    %11 = arith.cmpi ne, %10, %c0_i32_9 : i32
    scf.if %11 {
      %c0_10 = arith.constant 0 : index
      %c0_11 = arith.constant 0 : index
      %12 = vector.load %arg7[%c0_10, %c0_11] : memref<32x128xf32, #tpu.memory_space<vmem>>, vector<32x128xf32>
      %c0_12 = arith.constant 0 : index
      %c0_13 = arith.constant 0 : index
      %13 = vector.load %arg5[%c0_12, %c0_13] : memref<1x128xf32, #tpu.memory_space<vmem>>, vector<1x128xf32>
      %14 = vector.broadcast %13 : vector<1x128xf32> to vector<32x128xf32>
      %15 = arith.addf %12, %14 : vector<32x128xf32>
      %16 = arith.truncf %15 : vector<32x128xf32> to vector<32x128xbf16>
      %c0_14 = arith.constant 0 : index
      %c0_15 = arith.constant 0 : index
      %17 = vector.load %arg6[%c0_14, %c0_15] : memref<32x128xbf16, #tpu.memory_space<vmem>>, vector<32x128xbf16>
      tpu.vector_store %arg6[%c0_14, %c0_15], %16 {strides = array<i32>} : memref<32x128xbf16, #tpu.memory_space<vmem>>, vector<32x128xbf16>,
    } else {
    }
    return
  }
  func.func @transform_0(%arg0: i32, %arg1: i32, %arg2: i32) -> (i32, i32) {
    %c0_i32 = arith.constant 0 : i32
    return %arg0, %arg2 : i32, i32
  }
  func.func @transform_1(%arg0: i32, %arg1: i32, %arg2: i32) -> (i32, i32) {
    %c0_i32 = arith.constant 0 : i32
    return %arg2, %arg1 : i32, i32
  }
  func.func @transform_2(%arg0: i32, %arg1: i32, %arg2: i32) -> (i32, i32) {
    %c0_i32 = arith.constant 0 : i32
    %c0_i32_0 = arith.constant 0 : i32
    return %c0_i32, %arg1 : i32, i32
  }
  func.func @transform_3(%arg0: i32, %arg1: i32, %arg2: i32) -> (i32, i32) {
    %c0_i32 = arith.constant 0 : i32
    return %arg0, %arg1 : i32, i32
  }
}

module attributes {stable_mosaic.version = 11 : i64} {
  func.func @_matmul_bias_kernel(%arg0: i32, %arg1: i32, %arg2: i32, %arg3: memref<128x384xbf16, #tpu.memory_space<vmem>>, %arg4: memref<384x128xbf16, #tpu.memory_space<vmem>>, %arg5: memref<1x128xf32, #tpu.memory_space<vmem>>, %arg6: memref<128x128xbf16, #tpu.memory_space<vmem>>, %arg7: memref<128x128xf32, #tpu.memory_space<vmem>>) attributes {dimension_semantics = [#tpu.dimension_semantics<parallel>, #tpu.dimension_semantics<parallel>, #tpu.dimension_semantics<arbitrary>], iteration_bounds = array<i64: 1, 1, 1>, scalar_prefetch = 0 : i64, scratch_operands = 1 : i64, tpu.core_type = #tpu.core_type<tc>, window_params = [{transform_indices = @transform_0, window_bounds = array<i64: 128, 384>}, {transform_indices = @transform_1, window_bounds = array<i64: 384, 128>}, {transform_indices = @transform_2, window_bounds = array<i64: 1, 128>}, {transform_indices = @transform_3, window_bounds = array<i64: 128, 128>}]} {
    %c0_i32 = arith.constant 0 : i32
    %0 = arith.cmpi eq, %arg2, %c0_i32 : i32
    %1 = arith.extui %0 : i1 to i32
    %c0_i32_0 = arith.constant 0 : i32
    %2 = arith.cmpi ne, %1, %c0_i32_0 : i32
    scf.if %2 {
      %cst_10 = arith.constant 0.000000e+00 : f32
      %12 = vector.broadcast %cst_10 : f32 to vector<128x128xf32>
      %c0_11 = arith.constant 0 : index
      %c0_12 = arith.constant 0 : index
      %13 = vector.load %arg7[%c0_11, %c0_12] : memref<128x128xf32, #tpu.memory_space<vmem>>, vector<128x128xf32>
      tpu.vector_store %arg7[%c0_11, %c0_12], %12 {strides = array<i32>} : memref<128x128xf32, #tpu.memory_space<vmem>>, vector<128x128xf32>,
    } else {
    }
    %c0 = arith.constant 0 : index
    %c0_1 = arith.constant 0 : index
    %3 = vector.load %arg7[%c0, %c0_1] : memref<128x128xf32, #tpu.memory_space<vmem>>, vector<128x128xf32>
    %c0_2 = arith.constant 0 : index
    %c0_3 = arith.constant 0 : index
    %4 = vector.load %arg3[%c0_2, %c0_3] : memref<128x384xbf16, #tpu.memory_space<vmem>>, vector<128x384xbf16>
    %c0_4 = arith.constant 0 : index
    %c0_5 = arith.constant 0 : index
    %5 = vector.load %arg4[%c0_4, %c0_5] : memref<384x128xbf16, #tpu.memory_space<vmem>>, vector<384x128xbf16>
    %cst = arith.constant dense<0.000000e+00> : vector<128x128xf32>
    %6 = tpu.matmul %4, %5, %cst {dimension_numbers = #tpu.dot_dimension_numbers<[1], [0], [0], [1], [0, 0, 1, 1], [], []>} : vector<128x384xbf16>, vector<384x128xbf16>, vector<128x128xf32> -> vector<128x128xf32>
    %7 = arith.addf %3, %6 : vector<128x128xf32>
    %c0_6 = arith.constant 0 : index
    %c0_7 = arith.constant 0 : index
    %8 = vector.load %arg7[%c0_6, %c0_7] : memref<128x128xf32, #tpu.memory_space<vmem>>, vector<128x128xf32>
    tpu.vector_store %arg7[%c0_6, %c0_7], %7 {strides = array<i32>} : memref<128x128xf32, #tpu.memory_space<vmem>>, vector<128x128xf32>,
    %c0_i32_8 = arith.constant 0 : i32
    %9 = arith.cmpi eq, %arg2, %c0_i32_8 : i32
    %10 = arith.extui %9 : i1 to i32
    %c0_i32_9 = arith.constant 0 : i32
    %11 = arith.cmpi ne, %10, %c0_i32_9 : i32
    scf.if %11 {
      %c0_10 = arith.constant 0 : index
      %c0_11 = arith.constant 0 : index
      %12 = vector.load %arg7[%c0_10, %c0_11] : memref<128x128xf32, #tpu.memory_space<vmem>>, vector<128x128xf32>
      %c0_12 = arith.constant 0 : index
      %c0_13 = arith.constant 0 : index
      %13 = vector.load %arg5[%c0_12, %c0_13] : memref<1x128xf32, #tpu.memory_space<vmem>>, vector<1x128xf32>
      %14 = vector.broadcast %13 : vector<1x128xf32> to vector<128x128xf32>
      %15 = arith.addf %12, %14 : vector<128x128xf32>
      %16 = arith.truncf %15 : vector<128x128xf32> to vector<128x128xbf16>
      %c0_14 = arith.constant 0 : index
      %c0_15 = arith.constant 0 : index
      %17 = vector.load %arg6[%c0_14, %c0_15] : memref<128x128xbf16, #tpu.memory_space<vmem>>, vector<128x128xbf16>
      tpu.vector_store %arg6[%c0_14, %c0_15], %16 {strides = array<i32>} : memref<128x128xbf16, #tpu.memory_space<vmem>>, vector<128x128xbf16>,
    } else {
    }
    return
  }
  func.func @transform_0(%arg0: i32, %arg1: i32, %arg2: i32) -> (i32, i32) {
    %c0_i32 = arith.constant 0 : i32
    return %arg0, %arg2 : i32, i32
  }
  func.func @transform_1(%arg0: i32, %arg1: i32, %arg2: i32) -> (i32, i32) {
    %c0_i32 = arith.constant 0 : i32
    return %arg2, %arg1 : i32, i32
  }
  func.func @transform_2(%arg0: i32, %arg1: i32, %arg2: i32) -> (i32, i32) {
    %c0_i32 = arith.constant 0 : i32
    %c0_i32_0 = arith.constant 0 : i32
    return %c0_i32, %arg1 : i32, i32
  }
  func.func @transform_3(%arg0: i32, %arg1: i32, %arg2: i32) -> (i32, i32) {
    %c0_i32 = arith.constant 0 : i32
    return %arg0, %arg1 : i32, i32
  }
}

module attributes {stable_mosaic.version = 11 : i64} {
  func.func @_matmul_bias_kernel(%arg0: i32, %arg1: i32, %arg2: i32, %arg3: memref<176x384xbf16, #tpu.memory_space<vmem>>, %arg4: memref<384x128xbf16, #tpu.memory_space<vmem>>, %arg5: memref<1x128xf32, #tpu.memory_space<vmem>>, %arg6: memref<176x128xbf16, #tpu.memory_space<vmem>>, %arg7: memref<176x128xf32, #tpu.memory_space<vmem>>) attributes {dimension_semantics = [#tpu.dimension_semantics<parallel>, #tpu.dimension_semantics<parallel>, #tpu.dimension_semantics<arbitrary>], iteration_bounds = array<i64: 1, 1, 1>, scalar_prefetch = 0 : i64, scratch_operands = 1 : i64, tpu.core_type = #tpu.core_type<tc>, window_params = [{transform_indices = @transform_0, window_bounds = array<i64: 176, 384>}, {transform_indices = @transform_1, window_bounds = array<i64: 384, 128>}, {transform_indices = @transform_2, window_bounds = array<i64: 1, 128>}, {transform_indices = @transform_3, window_bounds = array<i64: 176, 128>}]} {
    %c0_i32 = arith.constant 0 : i32
    %0 = arith.cmpi eq, %arg2, %c0_i32 : i32
    %1 = arith.extui %0 : i1 to i32
    %c0_i32_0 = arith.constant 0 : i32
    %2 = arith.cmpi ne, %1, %c0_i32_0 : i32
    scf.if %2 {
      %cst_10 = arith.constant 0.000000e+00 : f32
      %12 = vector.broadcast %cst_10 : f32 to vector<176x128xf32>
      %c0_11 = arith.constant 0 : index
      %c0_12 = arith.constant 0 : index
      %13 = vector.load %arg7[%c0_11, %c0_12] : memref<176x128xf32, #tpu.memory_space<vmem>>, vector<176x128xf32>
      tpu.vector_store %arg7[%c0_11, %c0_12], %12 {strides = array<i32>} : memref<176x128xf32, #tpu.memory_space<vmem>>, vector<176x128xf32>,
    } else {
    }
    %c0 = arith.constant 0 : index
    %c0_1 = arith.constant 0 : index
    %3 = vector.load %arg7[%c0, %c0_1] : memref<176x128xf32, #tpu.memory_space<vmem>>, vector<176x128xf32>
    %c0_2 = arith.constant 0 : index
    %c0_3 = arith.constant 0 : index
    %4 = vector.load %arg3[%c0_2, %c0_3] : memref<176x384xbf16, #tpu.memory_space<vmem>>, vector<176x384xbf16>
    %c0_4 = arith.constant 0 : index
    %c0_5 = arith.constant 0 : index
    %5 = vector.load %arg4[%c0_4, %c0_5] : memref<384x128xbf16, #tpu.memory_space<vmem>>, vector<384x128xbf16>
    %cst = arith.constant dense<0.000000e+00> : vector<176x128xf32>
    %6 = tpu.matmul %4, %5, %cst {dimension_numbers = #tpu.dot_dimension_numbers<[1], [0], [0], [1], [0, 0, 1, 1], [], []>} : vector<176x384xbf16>, vector<384x128xbf16>, vector<176x128xf32> -> vector<176x128xf32>
    %7 = arith.addf %3, %6 : vector<176x128xf32>
    %c0_6 = arith.constant 0 : index
    %c0_7 = arith.constant 0 : index
    %8 = vector.load %arg7[%c0_6, %c0_7] : memref<176x128xf32, #tpu.memory_space<vmem>>, vector<176x128xf32>
    tpu.vector_store %arg7[%c0_6, %c0_7], %7 {strides = array<i32>} : memref<176x128xf32, #tpu.memory_space<vmem>>, vector<176x128xf32>,
    %c0_i32_8 = arith.constant 0 : i32
    %9 = arith.cmpi eq, %arg2, %c0_i32_8 : i32
    %10 = arith.extui %9 : i1 to i32
    %c0_i32_9 = arith.constant 0 : i32
    %11 = arith.cmpi ne, %10, %c0_i32_9 : i32
    scf.if %11 {
      %c0_10 = arith.constant 0 : index
      %c0_11 = arith.constant 0 : index
      %12 = vector.load %arg7[%c0_10, %c0_11] : memref<176x128xf32, #tpu.memory_space<vmem>>, vector<176x128xf32>
      %c0_12 = arith.constant 0 : index
      %c0_13 = arith.constant 0 : index
      %13 = vector.load %arg5[%c0_12, %c0_13] : memref<1x128xf32, #tpu.memory_space<vmem>>, vector<1x128xf32>
      %14 = vector.broadcast %13 : vector<1x128xf32> to vector<176x128xf32>
      %15 = arith.addf %12, %14 : vector<176x128xf32>
      %cst_14 = arith.constant 0.000000e+00 : f32
      %16 = vector.broadcast %cst_14 : f32 to vector<176x128xf32>
      %17 = arith.maximumf %15, %16 : vector<176x128xf32>
      %18 = arith.truncf %17 : vector<176x128xf32> to vector<176x128xbf16>
      %c0_15 = arith.constant 0 : index
      %c0_16 = arith.constant 0 : index
      %19 = vector.load %arg6[%c0_15, %c0_16] : memref<176x128xbf16, #tpu.memory_space<vmem>>, vector<176x128xbf16>
      tpu.vector_store %arg6[%c0_15, %c0_16], %18 {strides = array<i32>} : memref<176x128xbf16, #tpu.memory_space<vmem>>, vector<176x128xbf16>,
    } else {
    }
    return
  }
  func.func @transform_0(%arg0: i32, %arg1: i32, %arg2: i32) -> (i32, i32) {
    %c0_i32 = arith.constant 0 : i32
    return %arg0, %arg2 : i32, i32
  }
  func.func @transform_1(%arg0: i32, %arg1: i32, %arg2: i32) -> (i32, i32) {
    %c0_i32 = arith.constant 0 : i32
    return %arg2, %arg1 : i32, i32
  }
  func.func @transform_2(%arg0: i32, %arg1: i32, %arg2: i32) -> (i32, i32) {
    %c0_i32 = arith.constant 0 : i32
    %c0_i32_0 = arith.constant 0 : i32
    return %c0_i32, %arg1 : i32, i32
  }
  func.func @transform_3(%arg0: i32, %arg1: i32, %arg2: i32) -> (i32, i32) {
    %c0_i32 = arith.constant 0 : i32
    return %arg0, %arg1 : i32, i32
  }
}

module attributes {stable_mosaic.version = 11 : i64} {
  func.func @_matmul_bias_kernel(%arg0: i32, %arg1: i32, %arg2: i32, %arg3: memref<176x384xbf16, #tpu.memory_space<vmem>>, %arg4: memref<384x128xbf16, #tpu.memory_space<vmem>>, %arg5: memref<1x128xf32, #tpu.memory_space<vmem>>, %arg6: memref<176x128xf32, #tpu.memory_space<vmem>>, %arg7: memref<176x128xf32, #tpu.memory_space<vmem>>) attributes {dimension_semantics = [#tpu.dimension_semantics<parallel>, #tpu.dimension_semantics<parallel>, #tpu.dimension_semantics<arbitrary>], iteration_bounds = array<i64: 1, 1, 1>, scalar_prefetch = 0 : i64, scratch_operands = 1 : i64, tpu.core_type = #tpu.core_type<tc>, window_params = [{transform_indices = @transform_0, window_bounds = array<i64: 176, 384>}, {transform_indices = @transform_1, window_bounds = array<i64: 384, 128>}, {transform_indices = @transform_2, window_bounds = array<i64: 1, 128>}, {transform_indices = @transform_3, window_bounds = array<i64: 176, 128>}]} {
    %c0_i32 = arith.constant 0 : i32
    %0 = arith.cmpi eq, %arg2, %c0_i32 : i32
    %1 = arith.extui %0 : i1 to i32
    %c0_i32_0 = arith.constant 0 : i32
    %2 = arith.cmpi ne, %1, %c0_i32_0 : i32
    scf.if %2 {
      %cst_10 = arith.constant 0.000000e+00 : f32
      %12 = vector.broadcast %cst_10 : f32 to vector<176x128xf32>
      %c0_11 = arith.constant 0 : index
      %c0_12 = arith.constant 0 : index
      %13 = vector.load %arg7[%c0_11, %c0_12] : memref<176x128xf32, #tpu.memory_space<vmem>>, vector<176x128xf32>
      tpu.vector_store %arg7[%c0_11, %c0_12], %12 {strides = array<i32>} : memref<176x128xf32, #tpu.memory_space<vmem>>, vector<176x128xf32>,
    } else {
    }
    %c0 = arith.constant 0 : index
    %c0_1 = arith.constant 0 : index
    %3 = vector.load %arg7[%c0, %c0_1] : memref<176x128xf32, #tpu.memory_space<vmem>>, vector<176x128xf32>
    %c0_2 = arith.constant 0 : index
    %c0_3 = arith.constant 0 : index
    %4 = vector.load %arg3[%c0_2, %c0_3] : memref<176x384xbf16, #tpu.memory_space<vmem>>, vector<176x384xbf16>
    %c0_4 = arith.constant 0 : index
    %c0_5 = arith.constant 0 : index
    %5 = vector.load %arg4[%c0_4, %c0_5] : memref<384x128xbf16, #tpu.memory_space<vmem>>, vector<384x128xbf16>
    %cst = arith.constant dense<0.000000e+00> : vector<176x128xf32>
    %6 = tpu.matmul %4, %5, %cst {dimension_numbers = #tpu.dot_dimension_numbers<[1], [0], [0], [1], [0, 0, 1, 1], [], []>} : vector<176x384xbf16>, vector<384x128xbf16>, vector<176x128xf32> -> vector<176x128xf32>
    %7 = arith.addf %3, %6 : vector<176x128xf32>
    %c0_6 = arith.constant 0 : index
    %c0_7 = arith.constant 0 : index
    %8 = vector.load %arg7[%c0_6, %c0_7] : memref<176x128xf32, #tpu.memory_space<vmem>>, vector<176x128xf32>
    tpu.vector_store %arg7[%c0_6, %c0_7], %7 {strides = array<i32>} : memref<176x128xf32, #tpu.memory_space<vmem>>, vector<176x128xf32>,
    %c0_i32_8 = arith.constant 0 : i32
    %9 = arith.cmpi eq, %arg2, %c0_i32_8 : i32
    %10 = arith.extui %9 : i1 to i32
    %c0_i32_9 = arith.constant 0 : i32
    %11 = arith.cmpi ne, %10, %c0_i32_9 : i32
    scf.if %11 {
      %c0_10 = arith.constant 0 : index
      %c0_11 = arith.constant 0 : index
      %12 = vector.load %arg7[%c0_10, %c0_11] : memref<176x128xf32, #tpu.memory_space<vmem>>, vector<176x128xf32>
      %c0_12 = arith.constant 0 : index
      %c0_13 = arith.constant 0 : index
      %13 = vector.load %arg5[%c0_12, %c0_13] : memref<1x128xf32, #tpu.memory_space<vmem>>, vector<1x128xf32>
      %14 = vector.broadcast %13 : vector<1x128xf32> to vector<176x128xf32>
      %15 = arith.addf %12, %14 : vector<176x128xf32>
      %c0_14 = arith.constant 0 : index
      %c0_15 = arith.constant 0 : index
      %16 = vector.load %arg6[%c0_14, %c0_15] : memref<176x128xf32, #tpu.memory_space<vmem>>, vector<176x128xf32>
      tpu.vector_store %arg6[%c0_14, %c0_15], %15 {strides = array<i32>} : memref<176x128xf32, #tpu.memory_space<vmem>>, vector<176x128xf32>,
    } else {
    }
    return
  }
  func.func @transform_0(%arg0: i32, %arg1: i32, %arg2: i32) -> (i32, i32) {
    %c0_i32 = arith.constant 0 : i32
    return %arg0, %arg2 : i32, i32
  }
  func.func @transform_1(%arg0: i32, %arg1: i32, %arg2: i32) -> (i32, i32) {
    %c0_i32 = arith.constant 0 : i32
    return %arg2, %arg1 : i32, i32
  }
  func.func @transform_2(%arg0: i32, %arg1: i32, %arg2: i32) -> (i32, i32) {
    %c0_i32 = arith.constant 0 : i32
    %c0_i32_0 = arith.constant 0 : i32
    return %c0_i32, %arg1 : i32, i32
  }
  func.func @transform_3(%arg0: i32, %arg1: i32, %arg2: i32) -> (i32, i32) {
    %c0_i32 = arith.constant 0 : i32
    return %arg0, %arg1 : i32, i32
  }
}

module attributes {stable_mosaic.version = 11 : i64} {
  func.func @_log_softmax_c_kernel(%arg0: i32, %arg1: memref<1x4x756xf32, #tpu.memory_space<vmem>>, %arg2: memref<1x4x756xf32, #tpu.memory_space<vmem>>) attributes {dimension_semantics = [#tpu.dimension_semantics<parallel>], iteration_bounds = array<i64: 2>, scalar_prefetch = 0 : i64, scratch_operands = 0 : i64, tpu.core_type = #tpu.core_type<tc>, window_params = [{transform_indices = @transform_0, window_bounds = array<i64: 1, 4, 756>}, {transform_indices = @transform_1, window_bounds = array<i64: 1, 4, 756>}]} {
    %c0 = arith.constant 0 : index
    %c0_0 = arith.constant 0 : index
    %c0_1 = arith.constant 0 : index
    %0 = vector.load %arg1[%c0, %c0_0, %c0_1] : memref<1x4x756xf32, #tpu.memory_space<vmem>>, vector<1x4x756xf32>
    %cst = arith.constant dense<0xFF800000> : vector<1x756xf32>
    %1 = vector.multi_reduction <maximumf>, %0, %cst [1] : vector<1x4x756xf32> to vector<1x756xf32>
    %2 = vector.shape_cast %1 : vector<1x756xf32> to vector<1x1x756xf32>
    %3 = vector.broadcast %2 : vector<1x1x756xf32> to vector<1x4x756xf32>
    %4 = arith.subf %0, %3 : vector<1x4x756xf32>
    %5 = math.exp %4 : vector<1x4x756xf32>
    %cst_2 = arith.constant dense<0.000000e+00> : vector<1x756xf32>
    %6 = vector.multi_reduction <add>, %5, %cst_2 [1] : vector<1x4x756xf32> to vector<1x756xf32>
    %7 = vector.shape_cast %6 : vector<1x756xf32> to vector<1x1x756xf32>
    %8 = math.log %7 : vector<1x1x756xf32>
    %9 = vector.broadcast %8 : vector<1x1x756xf32> to vector<1x4x756xf32>
    %10 = arith.subf %4, %9 : vector<1x4x756xf32>
    %c0_3 = arith.constant 0 : index
    %c0_4 = arith.constant 0 : index
    %c0_5 = arith.constant 0 : index
    %11 = vector.load %arg2[%c0_3, %c0_4, %c0_5] : memref<1x4x756xf32, #tpu.memory_space<vmem>>, vector<1x4x756xf32>
    tpu.vector_store %arg2[%c0_3, %c0_4, %c0_5], %10 {strides = array<i32>} : memref<1x4x756xf32, #tpu.memory_space<vmem>>, vector<1x4x756xf32>,
    return
  }
  func.func @transform_0(%arg0: i32) -> (i32, i32, i32) {
    %c0_i32 = arith.constant 0 : i32
    %c0_i32_0 = arith.constant 0 : i32
    %c0_i32_1 = arith.constant 0 : i32
    return %arg0, %c0_i32, %c0_i32_0 : i32, i32, i32
  }
  func.func @transform_1(%arg0: i32) -> (i32, i32, i32) {
    %c0_i32 = arith.constant 0 : i32
    %c0_i32_0 = arith.constant 0 : i32
    %c0_i32_1 = arith.constant 0 : i32
    return %arg0, %c0_i32, %c0_i32_0 : i32, i32, i32
  }
}

</mosaic_0001>

<llo_original>
// kernel: forward.21
$region0: #{forward.21}
  #allocation0 [shape = 'u32[]', space=smem, size = 0x4, offset = 0x4, fixed_abs, tag = 'smem constant byte address 0x4 - core index']
  #allocation1 [shape = 'u32[144,128]{1,0:T(1,128)}', space=vmem, size = 0x12000, scoped, tag = 'internal scratch']
  #allocation2 [shape = 'f32[128,128]{1,0:T(8,128)}', space=vmem, size = 0x10000, scoped, tag = 'scratch operand']
  %s0 = inlined_call_operand.vmem [shape: bf16[128,128], index: 0, kind: input, shape index: {}]
  %s1 = inlined_call_operand.vmem [shape: bf16[128,128], index: 1, kind: input, shape index: {}]
  %s2 = inlined_call_operand.vmem [shape: f32[1,128], index: 2, kind: input, shape index: {}]
  %s3 = inlined_call_operand.vmem [shape: bf16[128,128], index: 3, kind: output, shape index: {}]
  %s4 = sld [smem:[#allocation0]]
  $region30: #{forward.21} parent=0
    _
  %s6 = ssub.s32 1, %s4
  %s7 = scalar_select 0, %s6, %s4
  // Predicated region
  $region2: #{forward.21} parent=0 // pred_check
    _
  $region3: #{forward.21} parent=0 // pred_check_branch
    %9 = sbr.rel (0) target = $region5
  $region4: #{forward.21} parent=0 // pred_region
    _
  $region5: #{forward.21} parent=0 // pred_fallthru
    _
  // Predicated region
  $region6: #{forward.21} parent=0 // pred_check
    _
  $region7: #{forward.21} parent=0 // pred_check_branch
    %11 = sbr.rel (0) target = $region9
  $region8: #{forward.21} parent=0 // pred_region
    _
  $region9: #{forward.21} parent=0 // pred_fallthru
    _
  // Predicated region
  $region10: #{forward.21} parent=0 // pred_check
    _
  $region11: #{forward.21} parent=0 // pred_check_branch
    %13 = sbr.rel (0) target = $region13
  $region12: #{forward.21} parent=0 // pred_region
    _
  $region13: #{forward.21} parent=0 // pred_fallthru
    _
  %p15 = scmp.eq.s32.totalorder 0, 0
  // Predicated region
  $region14: #{forward.21} parent=0 // pred_check
    %p16 = pneg %p15
  $region15: #{forward.21} parent=0 // pred_check_branch
    %18 = sbr.rel (%p16) target = $region17
  $region16: #{forward.21} parent=0 // pred_region
    %19 = vst [vmem:[#allocation2] sm:$0xff] 0.0
    %20 = vst [vmem:[#allocation2 + $0x8] sm:$0xff] 0.0
    %21 = vst [vmem:[#allocation2 + $0x10] sm:$0xff] 0.0
    %22 = vst [vmem:[#allocation2 + $0x18] sm:$0xff] 0.0
    %23 = vst [vmem:[#allocation2 + $0x20] sm:$0xff] 0.0
    %24 = vst [vmem:[#allocation2 + $0x28] sm:$0xff] 0.0
    %25 = vst [vmem:[#allocation2 + $0x30] sm:$0xff] 0.0
    %26 = vst [vmem:[#allocation2 + $0x38] sm:$0xff] 0.0
    %27 = vst [vmem:[#allocation2 + $0x40] sm:$0xff] 0.0
    %28 = vst [vmem:[#allocation2 + $0x48] sm:$0xff] 0.0
    %29 = vst [vmem:[#allocation2 + $0x50] sm:$0xff] 0.0
    %30 = vst [vmem:[#allocation2 + $0x58] sm:$0xff] 0.0
    %31 = vst [vmem:[#allocation2 + $0x60] sm:$0xff] 0.0
    %32 = vst [vmem:[#allocation2 + $0x68] sm:$0xff] 0.0
    %33 = vst [vmem:[#allocation2 + $0x70] sm:$0xff] 0.0
    %34 = vst [vmem:[#allocation2 + $0x78] sm:$0xff] 0.0
  $region17: #{forward.21} parent=0 // pred_fallthru
    _
  %v35 = vld [vmem:[#allocation2] sm:$0xff]
  %v36 = vld [vmem:[#allocation2 + $0x8] sm:$0xff]
  %v37 = vld [vmem:[#allocation2 + $0x10] sm:$0xff]
  %v38 = vld [vmem:[#allocation2 + $0x18] sm:$0xff]
  %v39 = vld [vmem:[#allocation2 + $0x20] sm:$0xff]
  %v40 = vld [vmem:[#allocation2 + $0x28] sm:$0xff]
  %v41 = vld [vmem:[#allocation2 + $0x30] sm:$0xff]
  %v42 = vld [vmem:[#allocation2 + $0x38] sm:$0xff]
  %v43 = vld [vmem:[#allocation2 + $0x40] sm:$0xff]
  %v44 = vld [vmem:[#allocation2 + $0x48] sm:$0xff]
  %v45 = vld [vmem:[#allocation2 + $0x50] sm:$0xff]
  %v46 = vld [vmem:[#allocation2 + $0x58] sm:$0xff]
  %v47 = vld [vmem:[#allocation2 + $0x60] sm:$0xff]
  %v48 = vld [vmem:[#allocation2 + $0x68] sm:$0xff]
  %v49 = vld [vmem:[#allocation2 + $0x70] sm:$0xff]
  %v50 = vld [vmem:[#allocation2 + $0x78] sm:$0xff]
  %v51 = vld [vmem:[%s0] sm:$0xf]
  %v52 = vld [vmem:[%s0 + $0x4] sm:$0xf]
  %v53 = vld [vmem:[%s0 + $0x8] sm:$0xf]
  %v54 = vld [vmem:[%s0 + $0xc] sm:$0xf]
  %v55 = vld [vmem:[%s0 + $0x10] sm:$0xf]
  %v56 = vld [vmem:[%s0 + $0x14] sm:$0xf]
  %v57 = vld [vmem:[%s0 + $0x18] sm:$0xf]
  %v58 = vld [vmem:[%s0 + $0x1c] sm:$0xf]
  %v59 = vld [vmem:[%s0 + $0x20] sm:$0xf]
  %v60 = vld [vmem:[%s0 + $0x24] sm:$0xf]
  %v61 = vld [vmem:[%s0 + $0x28] sm:$0xf]
  %v62 = vld [vmem:[%s0 + $0x2c] sm:$0xf]
  %v63 = vld [vmem:[%s0 + $0x30] sm:$0xf]
  %v64 = vld [vmem:[%s0 + $0x34] sm:$0xf]
  %v65 = vld [vmem:[%s0 + $0x38] sm:$0xf]
  %v66 = vld [vmem:[%s0 + $0x3c] sm:$0xf]
  %v67 = vld [vmem:[%s1] sm:$0xf]
  %v68 = vld [vmem:[%s1 + $0x4] sm:$0xf]
  %v69 = vld [vmem:[%s1 + $0x8] sm:$0xf]
  %v70 = vld [vmem:[%s1 + $0xc] sm:$0xf]
  %v71 = vld [vmem:[%s1 + $0x10] sm:$0xf]
  %v72 = vld [vmem:[%s1 + $0x14] sm:$0xf]
  %v73 = vld [vmem:[%s1 + $0x18] sm:$0xf]
  %v74 = vld [vmem:[%s1 + $0x1c] sm:$0xf]
  %v75 = vld [vmem:[%s1 + $0x20] sm:$0xf]
  %v76 = vld [vmem:[%s1 + $0x24] sm:$0xf]
  %v77 = vld [vmem:[%s1 + $0x28] sm:$0xf]
  %v78 = vld [vmem:[%s1 + $0x2c] sm:$0xf]
  %v79 = vld [vmem:[%s1 + $0x30] sm:$0xf]
  %v80 = vld [vmem:[%s1 + $0x34] sm:$0xf]
  %v81 = vld [vmem:[%s1 + $0x38] sm:$0xf]
  %v82 = vld [vmem:[%s1 + $0x3c] sm:$0xf]
  %v99 = vunpack.c.l.b16 %v51
  %v100 = vunpack.c.l.b16 %v52
  %v101 = vunpack.c.l.b16 %v53
  %v102 = vunpack.c.l.b16 %v54
  %v103 = vunpack.c.l.b16 %v55
  %v104 = vunpack.c.l.b16 %v56
  %v105 = vunpack.c.l.b16 %v57
  %v106 = vunpack.c.l.b16 %v58
  %v107 = vunpack.c.l.b16 %v59
  %v108 = vunpack.c.l.b16 %v60
  %v109 = vunpack.c.l.b16 %v61
  %v110 = vunpack.c.l.b16 %v62
  %v111 = vunpack.c.l.b16 %v63
  %v112 = vunpack.c.l.b16 %v64
  %v113 = vunpack.c.l.b16 %v65
  %v114 = vunpack.c.l.b16 %v66
  %v115 = vpack.c.b16 %v100, %v99
  %v116 = vpack.c.b16 %v102, %v101
  %v117 = vpack.c.b16 %v104, %v103
  %v118 = vpack.c.b16 %v106, %v105
  %v119 = vpack.c.b16 %v108, %v107
  %v120 = vpack.c.b16 %v110, %v109
  %v121 = vpack.c.b16 %v112, %v111
  %v122 = vpack.c.b16 %v114, %v113
  %v147 = vunpack.c.l.b16 %v67
  %v148 = vunpack.c.l.b16 %v68
  %v149 = vunpack.c.l.b16 %v69
  %v150 = vunpack.c.l.b16 %v70
  %v151 = vunpack.c.l.b16 %v71
  %v152 = vunpack.c.l.b16 %v72
  %v153 = vunpack.c.l.b16 %v73
  %v154 = vunpack.c.l.b16 %v74
  %v155 = vunpack.c.l.b16 %v75
  %v156 = vunpack.c.l.b16 %v76
  %v157 = vunpack.c.l.b16 %v77
  %v158 = vunpack.c.l.b16 %v78
  %v159 = vunpack.c.l.b16 %v79
  %v160 = vunpack.c.l.b16 %v80
  %v161 = vunpack.c.l.b16 %v81
  %v162 = vunpack.c.l.b16 %v82
  %v163 = vpack.c.b16 %v148, %v147
  %v164 = vpack.c.b16 %v150, %v149
  %v165 = vpack.c.b16 %v152, %v151
  %v166 = vpack.c.b16 %v154, %v153
  %v167 = vpack.c.b16 %v156, %v155
  %v168 = vpack.c.b16 %v158, %v157
  %v169 = vpack.c.b16 %v160, %v159
  %v170 = vpack.c.b16 %v162, %v161
  %179 = vmatprep.subr.bf16.mxu0 0
  %180 = vmatpush1.bf16.msra.mxu0 %v163
  %181 = vmatprep.subr.bf16.mxu0 0
  %182 = vmatpush1.bf16.msra.mxu0 %v164
  %183 = vmatprep.subr.bf16.mxu0 0
  %184 = vmatpush1.bf16.msra.mxu0 %v165
  %185 = vmatprep.subr.bf16.mxu0 0
  %186 = vmatpush1.bf16.msra.mxu0 %v166
  %187 = vmatprep.subr.bf16.mxu0 0
  %188 = vmatpush1.bf16.msra.mxu0 %v167
  %189 = vmatprep.subr.bf16.mxu0 0
  %190 = vmatpush1.bf16.msra.mxu0 %v168
  %191 = vmatprep.subr.bf16.mxu0 0
  %192 = vmatpush1.bf16.msra.mxu0 %v169
  %193 = vmatprep.subr.bf16.mxu0 0
  %194 = vmatpush1.bf16.msra.mxu0 %v170
  %195 = vmatprep.subr.bf16.mxu0 0
  %196 = vmatpush1.bf16.msra.mxu0 0
  %197 = vmatprep.subr.bf16.mxu0 0
  %198 = vmatpush1.bf16.msra.mxu0 0
  %199 = vmatprep.subr.bf16.mxu0 0
  %200 = vmatpush1.bf16.msra.mxu0 0
  %201 = vmatprep.subr.bf16.mxu0 0
  %202 = vmatpush1.bf16.msra.mxu0 0
  %203 = vmatprep.subr.bf16.mxu0 0
  %204 = vmatpush1.bf16.msra.mxu0 0
  %205 = vmatprep.subr.bf16.mxu0 0
  %206 = vmatpush1.bf16.msra.mxu0 0
  %207 = vmatprep.subr.bf16.mxu0 0
  %208 = vmatpush1.bf16.msra.mxu0 0
  %209 = vmatprep.subr.bf16.mxu0 0
  %210 = vmatpush1.bf16.msra.mxu0 0
  %211 = vmatprep.mubr.bf16.mxu0 0
  %212 = vmatmul.mubr.bf16.gmra.mrb[0].mxu0 %v115
  %v213 = vpop.f32.mrb[0].mxu0
  %v214 = vadd.f32 0.0, %v213
  %v215 = vpop.f32.mrb[0].mxu0
  %v216 = vpop.f32.mrb[0].mxu0
  %v217 = vadd.f32 0.0, %v216
  %v218 = vpop.f32.mrb[0].mxu0
  %219 = vmatprep.mubr.bf16.mxu0 0
  %220 = vmatmul.mubr.bf16.gmra.mrb[0].mxu0 %v116
  %v221 = vpop.f32.mrb[0].mxu0
  %v222 = vadd.f32 0.0, %v221
  %v223 = vpop.f32.mrb[0].mxu0
  %v224 = vpop.f32.mrb[0].mxu0
  %v225 = vadd.f32 0.0, %v224
  %v226 = vpop.f32.mrb[0].mxu0
  %227 = vmatprep.mubr.bf16.mxu0 0
  %228 = vmatmul.mubr.bf16.gmra.mrb[0].mxu0 %v117
  %v229 = vpop.f32.mrb[0].mxu0
  %v230 = vadd.f32 0.0, %v229
  %v231 = vpop.f32.mrb[0].mxu0
  %v232 = vpop.f32.mrb[0].mxu0
  %v233 = vadd.f32 0.0, %v232
  %v234 = vpop.f32.mrb[0].mxu0
  %235 = vmatprep.mubr.bf16.mxu0 0
  %236 = vmatmul.mubr.bf16.gmra.mrb[0].mxu0 %v118
  %v237 = vpop.f32.mrb[0].mxu0
  %v238 = vadd.f32 0.0, %v237
  %v239 = vpop.f32.mrb[0].mxu0
  %v240 = vpop.f32.mrb[0].mxu0
  %v241 = vadd.f32 0.0, %v240
  %v242 = vpop.f32.mrb[0].mxu0
  %243 = vmatprep.mubr.bf16.mxu0 0
  %244 = vmatmul.mubr.bf16.gmra.mrb[0].mxu0 %v119
  %v245 = vpop.f32.mrb[0].mxu0
  %v246 = vadd.f32 0.0, %v245
  %v247 = vpop.f32.mrb[0].mxu0
  %v248 = vpop.f32.mrb[0].mxu0
  %v249 = vadd.f32 0.0, %v248
  %v250 = vpop.f32.mrb[0].mxu0
  %251 = vmatprep.mubr.bf16.mxu0 0
  %252 = vmatmul.mubr.bf16.gmra.mrb[0].mxu0 %v120
  %v253 = vpop.f32.mrb[0].mxu0
  %v254 = vadd.f32 0.0, %v253
  %v255 = vpop.f32.mrb[0].mxu0
  %v256 = vpop.f32.mrb[0].mxu0
  %v257 = vadd.f32 0.0, %v256
  %v258 = vpop.f32.mrb[0].mxu0
  %259 = vmatprep.mubr.bf16.mxu0 0
  %260 = vmatmul.mubr.bf16.gmra.mrb[0].mxu0 %v121
  %v261 = vpop.f32.mrb[0].mxu0
  %v262 = vadd.f32 0.0, %v261
  %v263 = vpop.f32.mrb[0].mxu0
  %v264 = vpop.f32.mrb[0].mxu0
  %v265 = vadd.f32 0.0, %v264
  %v266 = vpop.f32.mrb[0].mxu0
  %267 = vmatprep.mubr.bf16.mxu0 0
  %268 = vmatmul.mubr.bf16.gmra.mrb[0].mxu0 %v122
  %v269 = vpop.f32.mrb[0].mxu0
  %v270 = vadd.f32 0.0, %v269
  %v271 = vpop.f32.mrb[0].mxu0
  %v272 = vpop.f32.mrb[0].mxu0
  %v273 = vadd.f32 0.0, %v272
  %v274 = vpop.f32.mrb[0].mxu0
  %275 = vdwg.mxu0
  %v276 = vadd.f32 %v35, %v214
  %v277 = vadd.f32 %v36, %v217
  %v278 = vadd.f32 %v37, %v222
  %v279 = vadd.f32 %v38, %v225
  %v280 = vadd.f32 %v39, %v230
  %v281 = vadd.f32 %v40, %v233
  %v282 = vadd.f32 %v41, %v238
  %v283 = vadd.f32 %v42, %v241
  %v284 = vadd.f32 %v43, %v246
  %v285 = vadd.f32 %v44, %v249
  %v286 = vadd.f32 %v45, %v254
  %v287 = vadd.f32 %v46, %v257
  %v288 = vadd.f32 %v47, %v262
  %v289 = vadd.f32 %v48, %v265
  %v290 = vadd.f32 %v49, %v270
  %v291 = vadd.f32 %v50, %v273
  %292 = vst [vmem:[#allocation2] sm:$0xff] %v276
  %293 = vst [vmem:[#allocation2 + $0x8] sm:$0xff] %v277
  %294 = vst [vmem:[#allocation2 + $0x10] sm:$0xff] %v278
  %295 = vst [vmem:[#allocation2 + $0x18] sm:$0xff] %v279
  %296 = vst [vmem:[#allocation2 + $0x20] sm:$0xff] %v280
  %297 = vst [vmem:[#allocation2 + $0x28] sm:$0xff] %v281
  %298 = vst [vmem:[#allocation2 + $0x30] sm:$0xff] %v282
  %299 = vst [vmem:[#allocation2 + $0x38] sm:$0xff] %v283
  %300 = vst [vmem:[#allocation2 + $0x40] sm:$0xff] %v284
  %301 = vst [vmem:[#allocation2 + $0x48] sm:$0xff] %v285
  %302 = vst [vmem:[#allocation2 + $0x50] sm:$0xff] %v286
  %303 = vst [vmem:[#allocation2 + $0x58] sm:$0xff] %v287
  %304 = vst [vmem:[#allocation2 + $0x60] sm:$0xff] %v288
  %305 = vst [vmem:[#allocation2 + $0x68] sm:$0xff] %v289
  %306 = vst [vmem:[#allocation2 + $0x70] sm:$0xff] %v290
  %307 = vst [vmem:[#allocation2 + $0x78] sm:$0xff] %v291
  // Predicated region
  $region18: #{forward.21} parent=0 // pred_check
    %p308 = pneg %p15
  $region19: #{forward.21} parent=0 // pred_check_branch
    %310 = sbr.rel (%p308) target = $region21
  $region20: #{forward.21} parent=0 // pred_region
    %v311 = vld [vmem:[#allocation2] sm:$0xff]
    %v312 = vld [vmem:[#allocation2 + $0x8] sm:$0xff]
    %v313 = vld [vmem:[#allocation2 + $0x10] sm:$0xff]
    %v314 = vld [vmem:[#allocation2 + $0x18] sm:$0xff]
    %v315 = vld [vmem:[#allocation2 + $0x20] sm:$0xff]
    %v316 = vld [vmem:[#allocation2 + $0x28] sm:$0xff]
    %v317 = vld [vmem:[#allocation2 + $0x30] sm:$0xff]
    %v318 = vld [vmem:[#allocation2 + $0x38] sm:$0xff]
    %v319 = vld [vmem:[#allocation2 + $0x40] sm:$0xff]
    %v320 = vld [vmem:[#allocation2 + $0x48] sm:$0xff]
    %v321 = vld [vmem:[#allocation2 + $0x50] sm:$0xff]
    %v322 = vld [vmem:[#allocation2 + $0x58] sm:$0xff]
    %v323 = vld [vmem:[#allocation2 + $0x60] sm:$0xff]
    %v324 = vld [vmem:[#allocation2 + $0x68] sm:$0xff]
    %v325 = vld [vmem:[#allocation2 + $0x70] sm:$0xff]
    %v326 = vld [vmem:[#allocation2 + $0x78] sm:$0xff]
    %v327 = vld [vmem:[%s2] sm:$0x1]
    %v329 = vlaneseq
    %v330 = vshrl.u32 %v329, 7
    %v331 = vsub.s32 0, %v330
    %v332 = vrot.slane %v327, %v331
    %v334 = vadd.f32 %v311, %v332
    %v335 = vadd.f32 %v312, %v332
    %v336 = vadd.f32 %v313, %v332
    %v337 = vadd.f32 %v314, %v332
    %v338 = vadd.f32 %v315, %v332
    %v339 = vadd.f32 %v316, %v332
    %v340 = vadd.f32 %v317, %v332
    %v341 = vadd.f32 %v318, %v332
    %v342 = vadd.f32 %v319, %v332
    %v343 = vadd.f32 %v320, %v332
    %v344 = vadd.f32 %v321, %v332
    %v345 = vadd.f32 %v322, %v332
    %v346 = vadd.f32 %v323, %v332
    %v347 = vadd.f32 %v324, %v332
    %v348 = vadd.f32 %v325, %v332
    %v349 = vadd.f32 %v326, %v332
    %v350 = vpack.c.bf16 %v335, %v334
    %v351 = vpack.c.bf16 %v337, %v336
    %v352 = vpack.c.bf16 %v339, %v338
    %v353 = vpack.c.bf16 %v341, %v340
    %v354 = vpack.c.bf16 %v343, %v342
    %v355 = vpack.c.bf16 %v345, %v344
    %v356 = vpack.c.bf16 %v347, %v346
    %v357 = vpack.c.bf16 %v349, %v348
    %v366 = vunpack.c.l.b16 %v350
    %v367 = vunpack.c.h.b16 %v350
    %v368 = vunpack.c.l.b16 %v351
    %v369 = vunpack.c.h.b16 %v351
    %v370 = vunpack.c.l.b16 %v352
    %v371 = vunpack.c.h.b16 %v352
    %v372 = vunpack.c.l.b16 %v353
    %v373 = vunpack.c.h.b16 %v353
    %v374 = vunpack.c.l.b16 %v354
    %v375 = vunpack.c.h.b16 %v354
    %v376 = vunpack.c.l.b16 %v355
    %v377 = vunpack.c.h.b16 %v355
    %v378 = vunpack.c.l.b16 %v356
    %v379 = vunpack.c.h.b16 %v356
    %v380 = vunpack.c.l.b16 %v357
    %v381 = vunpack.c.h.b16 %v357
    %v382 = vpack.c.b16 %v366, %v366
    %v383 = vpack.c.b16 %v367, %v367
    %v384 = vpack.c.b16 %v368, %v368
    %v385 = vpack.c.b16 %v369, %v369
    %v386 = vpack.c.b16 %v370, %v370
    %v387 = vpack.c.b16 %v371, %v371
    %v388 = vpack.c.b16 %v372, %v372
    %v389 = vpack.c.b16 %v373, %v373
    %v390 = vpack.c.b16 %v374, %v374
    %v391 = vpack.c.b16 %v375, %v375
    %v392 = vpack.c.b16 %v376, %v376
    %v393 = vpack.c.b16 %v377, %v377
    %v394 = vpack.c.b16 %v378, %v378
    %v395 = vpack.c.b16 %v379, %v379
    %v396 = vpack.c.b16 %v380, %v380
    %v397 = vpack.c.b16 %v381, %v381
    %414 = vst [vmem:[%s3] sm:$0xf] %v382
    %415 = vst [vmem:[%s3 + $0x4] sm:$0xf] %v383
    %416 = vst [vmem:[%s3 + $0x8] sm:$0xf] %v384
    %417 = vst [vmem:[%s3 + $0xc] sm:$0xf] %v385
    %418 = vst [vmem:[%s3 + $0x10] sm:$0xf] %v386
    %419 = vst [vmem:[%s3 + $0x14] sm:$0xf] %v387
    %420 = vst [vmem:[%s3 + $0x18] sm:$0xf] %v388
    %421 = vst [vmem:[%s3 + $0x1c] sm:$0xf] %v389
    %422 = vst [vmem:[%s3 + $0x20] sm:$0xf] %v390
    %423 = vst [vmem:[%s3 + $0x24] sm:$0xf] %v391
    %424 = vst [vmem:[%s3 + $0x28] sm:$0xf] %v392
    %425 = vst [vmem:[%s3 + $0x2c] sm:$0xf] %v393
    %426 = vst [vmem:[%s3 + $0x30] sm:$0xf] %v394
    %427 = vst [vmem:[%s3 + $0x34] sm:$0xf] %v395
    %428 = vst [vmem:[%s3 + $0x38] sm:$0xf] %v396
    %429 = vst [vmem:[%s3 + $0x3c] sm:$0xf] %v397
  $region21: #{forward.21} parent=0 // pred_fallthru
    _
  // Predicated region
  $region22: #{forward.21} parent=0 // pred_check
    _
  $region23: #{forward.21} parent=0 // pred_check_branch
    %431 = sbr.rel (0) target = $region25
  $region24: #{forward.21} parent=0 // pred_region
    _
  $region25: #{forward.21} parent=0 // pred_fallthru
    _
  // Predicated region
  $region26: #{forward.21} parent=0 // pred_check
    _
  $region27: #{forward.21} parent=0 // pred_check_branch
    %433 = sbr.rel (0) target = $region29
  $region28: #{forward.21} parent=0 // pred_region
    _
  $region29: #{forward.21} parent=0 // pred_fallthru
    _

// kernel: forward.16
$region0: #{forward.16}
  #allocation0 [shape = 'u32[]', space=smem, size = 0x4, offset = 0x4, fixed_abs, tag = 'smem constant byte address 0x4 - core index']
  #allocation1 [shape = 'u32[144,128]{1,0:T(1,128)}', space=vmem, size = 0x12000, scoped, tag = 'internal scratch']
  #allocation2 [shape = 'f32[128,128]{1,0:T(8,128)}', space=vmem, size = 0x10000, scoped, tag = 'scratch operand']
  %s0 = inlined_call_operand.vmem [shape: bf16[128,128], index: 0, kind: input, shape index: {}]
  %s1 = inlined_call_operand.vmem [shape: bf16[128,128], index: 1, kind: input, shape index: {}]
  %s2 = inlined_call_operand.vmem [shape: f32[1,128], index: 2, kind: input, shape index: {}]
  %s3 = inlined_call_operand.vmem [shape: bf16[128,128], index: 3, kind: output, shape index: {}]
  %s4 = sld [smem:[#allocation0]]
  $region30: #{forward.16} parent=0
    _
  %s6 = ssub.s32 1, %s4
  %s7 = scalar_select 0, %s6, %s4
  // Predicated region
  $region2: #{forward.16} parent=0 // pred_check
    _
  $region3: #{forward.16} parent=0 // pred_check_branch
    %9 = sbr.rel (0) target = $region5
  $region4: #{forward.16} parent=0 // pred_region
    _
  $region5: #{forward.16} parent=0 // pred_fallthru
    _
  // Predicated region
  $region6: #{forward.16} parent=0 // pred_check
    _
  $region7: #{forward.16} parent=0 // pred_check_branch
    %11 = sbr.rel (0) target = $region9
  $region8: #{forward.16} parent=0 // pred_region
    _
  $region9: #{forward.16} parent=0 // pred_fallthru
    _
  // Predicated region
  $region10: #{forward.16} parent=0 // pred_check
    _
  $region11: #{forward.16} parent=0 // pred_check_branch
    %13 = sbr.rel (0) target = $region13
  $region12: #{forward.16} parent=0 // pred_region
    _
  $region13: #{forward.16} parent=0 // pred_fallthru
    _
  %p15 = scmp.eq.s32.totalorder 0, 0
  // Predicated region
  $region14: #{forward.16} parent=0 // pred_check
    %p16 = pneg %p15
  $region15: #{forward.16} parent=0 // pred_check_branch
    %18 = sbr.rel (%p16) target = $region17
  $region16: #{forward.16} parent=0 // pred_region
    %19 = vst [vmem:[#allocation2] sm:$0xff] 0.0
    %20 = vst [vmem:[#allocation2 + $0x8] sm:$0xff] 0.0
    %21 = vst [vmem:[#allocation2 + $0x10] sm:$0xff] 0.0
    %22 = vst [vmem:[#allocation2 + $0x18] sm:$0xff] 0.0
    %23 = vst [vmem:[#allocation2 + $0x20] sm:$0xff] 0.0
    %24 = vst [vmem:[#allocation2 + $0x28] sm:$0xff] 0.0
    %25 = vst [vmem:[#allocation2 + $0x30] sm:$0xff] 0.0
    %26 = vst [vmem:[#allocation2 + $0x38] sm:$0xff] 0.0
    %27 = vst [vmem:[#allocation2 + $0x40] sm:$0xff] 0.0
    %28 = vst [vmem:[#allocation2 + $0x48] sm:$0xff] 0.0
    %29 = vst [vmem:[#allocation2 + $0x50] sm:$0xff] 0.0
    %30 = vst [vmem:[#allocation2 + $0x58] sm:$0xff] 0.0
    %31 = vst [vmem:[#allocation2 + $0x60] sm:$0xff] 0.0
    %32 = vst [vmem:[#allocation2 + $0x68] sm:$0xff] 0.0
    %33 = vst [vmem:[#allocation2 + $0x70] sm:$0xff] 0.0
    %34 = vst [vmem:[#allocation2 + $0x78] sm:$0xff] 0.0
  $region17: #{forward.16} parent=0 // pred_fallthru
    _
  %v35 = vld [vmem:[#allocation2] sm:$0xff]
  %v36 = vld [vmem:[#allocation2 + $0x8] sm:$0xff]
  %v37 = vld [vmem:[#allocation2 + $0x10] sm:$0xff]
  %v38 = vld [vmem:[#allocation2 + $0x18] sm:$0xff]
  %v39 = vld [vmem:[#allocation2 + $0x20] sm:$0xff]
  %v40 = vld [vmem:[#allocation2 + $0x28] sm:$0xff]
  %v41 = vld [vmem:[#allocation2 + $0x30] sm:$0xff]
  %v42 = vld [vmem:[#allocation2 + $0x38] sm:$0xff]
  %v43 = vld [vmem:[#allocation2 + $0x40] sm:$0xff]
  %v44 = vld [vmem:[#allocation2 + $0x48] sm:$0xff]
  %v45 = vld [vmem:[#allocation2 + $0x50] sm:$0xff]
  %v46 = vld [vmem:[#allocation2 + $0x58] sm:$0xff]
  %v47 = vld [vmem:[#allocation2 + $0x60] sm:$0xff]
  %v48 = vld [vmem:[#allocation2 + $0x68] sm:$0xff]
  %v49 = vld [vmem:[#allocation2 + $0x70] sm:$0xff]
  %v50 = vld [vmem:[#allocation2 + $0x78] sm:$0xff]
  %v51 = vld [vmem:[%s0] sm:$0xf]
  %v52 = vld [vmem:[%s0 + $0x4] sm:$0xf]
  %v53 = vld [vmem:[%s0 + $0x8] sm:$0xf]
  %v54 = vld [vmem:[%s0 + $0xc] sm:$0xf]
  %v55 = vld [vmem:[%s0 + $0x10] sm:$0xf]
  %v56 = vld [vmem:[%s0 + $0x14] sm:$0xf]
  %v57 = vld [vmem:[%s0 + $0x18] sm:$0xf]
  %v58 = vld [vmem:[%s0 + $0x1c] sm:$0xf]
  %v59 = vld [vmem:[%s0 + $0x20] sm:$0xf]
  %v60 = vld [vmem:[%s0 + $0x24] sm:$0xf]
  %v61 = vld [vmem:[%s0 + $0x28] sm:$0xf]
  %v62 = vld [vmem:[%s0 + $0x2c] sm:$0xf]
  %v63 = vld [vmem:[%s0 + $0x30] sm:$0xf]
  %v64 = vld [vmem:[%s0 + $0x34] sm:$0xf]
  %v65 = vld [vmem:[%s0 + $0x38] sm:$0xf]
  %v66 = vld [vmem:[%s0 + $0x3c] sm:$0xf]
  %v67 = vld [vmem:[%s1] sm:$0xf]
  %v68 = vld [vmem:[%s1 + $0x4] sm:$0xf]
  %v69 = vld [vmem:[%s1 + $0x8] sm:$0xf]
  %v70 = vld [vmem:[%s1 + $0xc] sm:$0xf]
  %v71 = vld [vmem:[%s1 + $0x10] sm:$0xf]
  %v72 = vld [vmem:[%s1 + $0x14] sm:$0xf]
  %v73 = vld [vmem:[%s1 + $0x18] sm:$0xf]
  %v74 = vld [vmem:[%s1 + $0x1c] sm:$0xf]
  %v75 = vld [vmem:[%s1 + $0x20] sm:$0xf]
  %v76 = vld [vmem:[%s1 + $0x24] sm:$0xf]
  %v77 = vld [vmem:[%s1 + $0x28] sm:$0xf]
  %v78 = vld [vmem:[%s1 + $0x2c] sm:$0xf]
  %v79 = vld [vmem:[%s1 + $0x30] sm:$0xf]
  %v80 = vld [vmem:[%s1 + $0x34] sm:$0xf]
  %v81 = vld [vmem:[%s1 + $0x38] sm:$0xf]
  %v82 = vld [vmem:[%s1 + $0x3c] sm:$0xf]
  %v99 = vunpack.c.l.b16 %v51
  %v100 = vunpack.c.l.b16 %v52
  %v101 = vunpack.c.l.b16 %v53
  %v102 = vunpack.c.l.b16 %v54
  %v103 = vunpack.c.l.b16 %v55
  %v104 = vunpack.c.l.b16 %v56
  %v105 = vunpack.c.l.b16 %v57
  %v106 = vunpack.c.l.b16 %v58
  %v107 = vunpack.c.l.b16 %v59
  %v108 = vunpack.c.l.b16 %v60
  %v109 = vunpack.c.l.b16 %v61
  %v110 = vunpack.c.l.b16 %v62
  %v111 = vunpack.c.l.b16 %v63
  %v112 = vunpack.c.l.b16 %v64
  %v113 = vunpack.c.l.b16 %v65
  %v114 = vunpack.c.l.b16 %v66
  %v115 = vpack.c.b16 %v100, %v99
  %v116 = vpack.c.b16 %v102, %v101
  %v117 = vpack.c.b16 %v104, %v103
  %v118 = vpack.c.b16 %v106, %v105
  %v119 = vpack.c.b16 %v108, %v107
  %v120 = vpack.c.b16 %v110, %v109
  %v121 = vpack.c.b16 %v112, %v111
  %v122 = vpack.c.b16 %v114, %v113
  %v147 = vunpack.c.l.b16 %v67
  %v148 = vunpack.c.l.b16 %v68
  %v149 = vunpack.c.l.b16 %v69
  %v150 = vunpack.c.l.b16 %v70
  %v151 = vunpack.c.l.b16 %v71
  %v152 = vunpack.c.l.b16 %v72
  %v153 = vunpack.c.l.b16 %v73
  %v154 = vunpack.c.l.b16 %v74
  %v155 = vunpack.c.l.b16 %v75
  %v156 = vunpack.c.l.b16 %v76
  %v157 = vunpack.c.l.b16 %v77
  %v158 = vunpack.c.l.b16 %v78
  %v159 = vunpack.c.l.b16 %v79
  %v160 = vunpack.c.l.b16 %v80
  %v161 = vunpack.c.l.b16 %v81
  %v162 = vunpack.c.l.b16 %v82
  %v163 = vpack.c.b16 %v148, %v147
  %v164 = vpack.c.b16 %v150, %v149
  %v165 = vpack.c.b16 %v152, %v151
  %v166 = vpack.c.b16 %v154, %v153
  %v167 = vpack.c.b16 %v156, %v155
  %v168 = vpack.c.b16 %v158, %v157
  %v169 = vpack.c.b16 %v160, %v159
  %v170 = vpack.c.b16 %v162, %v161
  %179 = vmatprep.subr.bf16.mxu0 0
  %180 = vmatpush1.bf16.msra.mxu0 %v163
  %181 = vmatprep.subr.bf16.mxu0 0
  %182 = vmatpush1.bf16.msra.mxu0 %v164
  %183 = vmatprep.subr.bf16.mxu0 0
  %184 = vmatpush1.bf16.msra.mxu0 %v165
  %185 = vmatprep.subr.bf16.mxu0 0
  %186 = vmatpush1.bf16.msra.mxu0 %v166
  %187 = vmatprep.subr.bf16.mxu0 0
  %188 = vmatpush1.bf16.msra.mxu0 %v167
  %189 = vmatprep.subr.bf16.mxu0 0
  %190 = vmatpush1.bf16.msra.mxu0 %v168
  %191 = vmatprep.subr.bf16.mxu0 0
  %192 = vmatpush1.bf16.msra.mxu0 %v169
  %193 = vmatprep.subr.bf16.mxu0 0
  %194 = vmatpush1.bf16.msra.mxu0 %v170
  %195 = vmatprep.subr.bf16.mxu0 0
  %196 = vmatpush1.bf16.msra.mxu0 0
  %197 = vmatprep.subr.bf16.mxu0 0
  %198 = vmatpush1.bf16.msra.mxu0 0
  %199 = vmatprep.subr.bf16.mxu0 0
  %200 = vmatpush1.bf16.msra.mxu0 0
  %201 = vmatprep.subr.bf16.mxu0 0
  %202 = vmatpush1.bf16.msra.mxu0 0
  %203 = vmatprep.subr.bf16.mxu0 0
  %204 = vmatpush1.bf16.msra.mxu0 0
  %205 = vmatprep.subr.bf16.mxu0 0
  %206 = vmatpush1.bf16.msra.mxu0 0
  %207 = vmatprep.subr.bf16.mxu0 0
  %208 = vmatpush1.bf16.msra.mxu0 0
  %209 = vmatprep.subr.bf16.mxu0 0
  %210 = vmatpush1.bf16.msra.mxu0 0
  %211 = vmatprep.mubr.bf16.mxu0 0
  %212 = vmatmul.mubr.bf16.gmra.mrb[0].mxu0 %v115
  %v213 = vpop.f32.mrb[0].mxu0
  %v214 = vadd.f32 0.0, %v213
  %v215 = vpop.f32.mrb[0].mxu0
  %v216 = vpop.f32.mrb[0].mxu0
  %v217 = vadd.f32 0.0, %v216
  %v218 = vpop.f32.mrb[0].mxu0
  %219 = vmatprep.mubr.bf16.mxu0 0
  %220 = vmatmul.mubr.bf16.gmra.mrb[0].mxu0 %v116
  %v221 = vpop.f32.mrb[0].mxu0
  %v222 = vadd.f32 0.0, %v221
  %v223 = vpop.f32.mrb[0].mxu0
  %v224 = vpop.f32.mrb[0].mxu0
  %v225 = vadd.f32 0.0, %v224
  %v226 = vpop.f32.mrb[0].mxu0
  %227 = vmatprep.mubr.bf16.mxu0 0
  %228 = vmatmul.mubr.bf16.gmra.mrb[0].mxu0 %v117
  %v229 = vpop.f32.mrb[0].mxu0
  %v230 = vadd.f32 0.0, %v229
  %v231 = vpop.f32.mrb[0].mxu0
  %v232 = vpop.f32.mrb[0].mxu0
  %v233 = vadd.f32 0.0, %v232
  %v234 = vpop.f32.mrb[0].mxu0
  %235 = vmatprep.mubr.bf16.mxu0 0
  %236 = vmatmul.mubr.bf16.gmra.mrb[0].mxu0 %v118
  %v237 = vpop.f32.mrb[0].mxu0
  %v238 = vadd.f32 0.0, %v237
  %v239 = vpop.f32.mrb[0].mxu0
  %v240 = vpop.f32.mrb[0].mxu0
  %v241 = vadd.f32 0.0, %v240
  %v242 = vpop.f32.mrb[0].mxu0
  %243 = vmatprep.mubr.bf16.mxu0 0
  %244 = vmatmul.mubr.bf16.gmra.mrb[0].mxu0 %v119
  %v245 = vpop.f32.mrb[0].mxu0
  %v246 = vadd.f32 0.0, %v245
  %v247 = vpop.f32.mrb[0].mxu0
  %v248 = vpop.f32.mrb[0].mxu0
  %v249 = vadd.f32 0.0, %v248
  %v250 = vpop.f32.mrb[0].mxu0
  %251 = vmatprep.mubr.bf16.mxu0 0
  %252 = vmatmul.mubr.bf16.gmra.mrb[0].mxu0 %v120
  %v253 = vpop.f32.mrb[0].mxu0
  %v254 = vadd.f32 0.0, %v253
  %v255 = vpop.f32.mrb[0].mxu0
  %v256 = vpop.f32.mrb[0].mxu0
  %v257 = vadd.f32 0.0, %v256
  %v258 = vpop.f32.mrb[0].mxu0
  %259 = vmatprep.mubr.bf16.mxu0 0
  %260 = vmatmul.mubr.bf16.gmra.mrb[0].mxu0 %v121
  %v261 = vpop.f32.mrb[0].mxu0
  %v262 = vadd.f32 0.0, %v261
  %v263 = vpop.f32.mrb[0].mxu0
  %v264 = vpop.f32.mrb[0].mxu0
  %v265 = vadd.f32 0.0, %v264
  %v266 = vpop.f32.mrb[0].mxu0
  %267 = vmatprep.mubr.bf16.mxu0 0
  %268 = vmatmul.mubr.bf16.gmra.mrb[0].mxu0 %v122
  %v269 = vpop.f32.mrb[0].mxu0
  %v270 = vadd.f32 0.0, %v269
  %v271 = vpop.f32.mrb[0].mxu0
  %v272 = vpop.f32.mrb[0].mxu0
  %v273 = vadd.f32 0.0, %v272
  %v274 = vpop.f32.mrb[0].mxu0
  %275 = vdwg.mxu0
  %v276 = vadd.f32 %v35, %v214
  %v277 = vadd.f32 %v36, %v217
  %v278 = vadd.f32 %v37, %v222
  %v279 = vadd.f32 %v38, %v225
  %v280 = vadd.f32 %v39, %v230
  %v281 = vadd.f32 %v40, %v233
  %v282 = vadd.f32 %v41, %v238
  %v283 = vadd.f32 %v42, %v241
  %v284 = vadd.f32 %v43, %v246
  %v285 = vadd.f32 %v44, %v249
  %v286 = vadd.f32 %v45, %v254
  %v287 = vadd.f32 %v46, %v257
  %v288 = vadd.f32 %v47, %v262
  %v289 = vadd.f32 %v48, %v265
  %v290 = vadd.f32 %v49, %v270
  %v291 = vadd.f32 %v50, %v273
  %292 = vst [vmem:[#allocation2] sm:$0xff] %v276
  %293 = vst [vmem:[#allocation2 + $0x8] sm:$0xff] %v277
  %294 = vst [vmem:[#allocation2 + $0x10] sm:$0xff] %v278
  %295 = vst [vmem:[#allocation2 + $0x18] sm:$0xff] %v279
  %296 = vst [vmem:[#allocation2 + $0x20] sm:$0xff] %v280
  %297 = vst [vmem:[#allocation2 + $0x28] sm:$0xff] %v281
  %298 = vst [vmem:[#allocation2 + $0x30] sm:$0xff] %v282
  %299 = vst [vmem:[#allocation2 + $0x38] sm:$0xff] %v283
  %300 = vst [vmem:[#allocation2 + $0x40] sm:$0xff] %v284
  %301 = vst [vmem:[#allocation2 + $0x48] sm:$0xff] %v285
  %302 = vst [vmem:[#allocation2 + $0x50] sm:$0xff] %v286
  %303 = vst [vmem:[#allocation2 + $0x58] sm:$0xff] %v287
  %304 = vst [vmem:[#allocation2 + $0x60] sm:$0xff] %v288
  %305 = vst [vmem:[#allocation2 + $0x68] sm:$0xff] %v289
  %306 = vst [vmem:[#allocation2 + $0x70] sm:$0xff] %v290
  %307 = vst [vmem:[#allocation2 + $0x78] sm:$0xff] %v291
  // Predicated region
  $region18: #{forward.16} parent=0 // pred_check
    %p308 = pneg %p15
  $region19: #{forward.16} parent=0 // pred_check_branch
    %310 = sbr.rel (%p308) target = $region21
  $region20: #{forward.16} parent=0 // pred_region
    %v311 = vld [vmem:[#allocation2] sm:$0xff]
    %v312 = vld [vmem:[#allocation2 + $0x8] sm:$0xff]
    %v313 = vld [vmem:[#allocation2 + $0x10] sm:$0xff]
    %v314 = vld [vmem:[#allocation2 + $0x18] sm:$0xff]
    %v315 = vld [vmem:[#allocation2 + $0x20] sm:$0xff]
    %v316 = vld [vmem:[#allocation2 + $0x28] sm:$0xff]
    %v317 = vld [vmem:[#allocation2 + $0x30] sm:$0xff]
    %v318 = vld [vmem:[#allocation2 + $0x38] sm:$0xff]
    %v319 = vld [vmem:[#allocation2 + $0x40] sm:$0xff]
    %v320 = vld [vmem:[#allocation2 + $0x48] sm:$0xff]
    %v321 = vld [vmem:[#allocation2 + $0x50] sm:$0xff]
    %v322 = vld [vmem:[#allocation2 + $0x58] sm:$0xff]
    %v323 = vld [vmem:[#allocation2 + $0x60] sm:$0xff]
    %v324 = vld [vmem:[#allocation2 + $0x68] sm:$0xff]
    %v325 = vld [vmem:[#allocation2 + $0x70] sm:$0xff]
    %v326 = vld [vmem:[#allocation2 + $0x78] sm:$0xff]
    %v327 = vld [vmem:[%s2] sm:$0x1]
    %v329 = vlaneseq
    %v330 = vshrl.u32 %v329, 7
    %v331 = vsub.s32 0, %v330
    %v332 = vrot.slane %v327, %v331
    %v334 = vadd.f32 %v311, %v332
    %v335 = vadd.f32 %v312, %v332
    %v336 = vadd.f32 %v313, %v332
    %v337 = vadd.f32 %v314, %v332
    %v338 = vadd.f32 %v315, %v332
    %v339 = vadd.f32 %v316, %v332
    %v340 = vadd.f32 %v317, %v332
    %v341 = vadd.f32 %v318, %v332
    %v342 = vadd.f32 %v319, %v332
    %v343 = vadd.f32 %v320, %v332
    %v344 = vadd.f32 %v321, %v332
    %v345 = vadd.f32 %v322, %v332
    %v346 = vadd.f32 %v323, %v332
    %v347 = vadd.f32 %v324, %v332
    %v348 = vadd.f32 %v325, %v332
    %v349 = vadd.f32 %v326, %v332
    %v350 = vmax.f32 %v334, 0.0
    %v351 = vmax.f32 %v335, 0.0
    %v352 = vmax.f32 %v336, 0.0
    %v353 = vmax.f32 %v337, 0.0
    %v354 = vmax.f32 %v338, 0.0
    %v355 = vmax.f32 %v339, 0.0
    %v356 = vmax.f32 %v340, 0.0
    %v357 = vmax.f32 %v341, 0.0
    %v358 = vmax.f32 %v342, 0.0
    %v359 = vmax.f32 %v343, 0.0
    %v360 = vmax.f32 %v344, 0.0
    %v361 = vmax.f32 %v345, 0.0
    %v362 = vmax.f32 %v346, 0.0
    %v363 = vmax.f32 %v347, 0.0
    %v364 = vmax.f32 %v348, 0.0
    %v365 = vmax.f32 %v349, 0.0
    %v366 = vpack.c.bf16 %v351, %v350
    %v367 = vpack.c.bf16 %v353, %v352
    %v368 = vpack.c.bf16 %v355, %v354
    %v369 = vpack.c.bf16 %v357, %v356
    %v370 = vpack.c.bf16 %v359, %v358
    %v371 = vpack.c.bf16 %v361, %v360
    %v372 = vpack.c.bf16 %v363, %v362
    %v373 = vpack.c.bf16 %v365, %v364
    %v382 = vunpack.c.l.b16 %v366
    %v383 = vunpack.c.h.b16 %v366
    %v384 = vunpack.c.l.b16 %v367
    %v385 = vunpack.c.h.b16 %v367
    %v386 = vunpack.c.l.b16 %v368
    %v387 = vunpack.c.h.b16 %v368
    %v388 = vunpack.c.l.b16 %v369
    %v389 = vunpack.c.h.b16 %v369
    %v390 = vunpack.c.l.b16 %v370
    %v391 = vunpack.c.h.b16 %v370
    %v392 = vunpack.c.l.b16 %v371
    %v393 = vunpack.c.h.b16 %v371
    %v394 = vunpack.c.l.b16 %v372
    %v395 = vunpack.c.h.b16 %v372
    %v396 = vunpack.c.l.b16 %v373
    %v397 = vunpack.c.h.b16 %v373
    %v398 = vpack.c.b16 %v382, %v382
    %v399 = vpack.c.b16 %v383, %v383
    %v400 = vpack.c.b16 %v384, %v384
    %v401 = vpack.c.b16 %v385, %v385
    %v402 = vpack.c.b16 %v386, %v386
    %v403 = vpack.c.b16 %v387, %v387
    %v404 = vpack.c.b16 %v388, %v388
    %v405 = vpack.c.b16 %v389, %v389
    %v406 = vpack.c.b16 %v390, %v390
    %v407 = vpack.c.b16 %v391, %v391
    %v408 = vpack.c.b16 %v392, %v392
    %v409 = vpack.c.b16 %v393, %v393
    %v410 = vpack.c.b16 %v394, %v394
    %v411 = vpack.c.b16 %v395, %v395
    %v412 = vpack.c.b16 %v396, %v396
    %v413 = vpack.c.b16 %v397, %v397
    %430 = vst [vmem:[%s3] sm:$0xf] %v398
    %431 = vst [vmem:[%s3 + $0x4] sm:$0xf] %v399
    %432 = vst [vmem:[%s3 + $0x8] sm:$0xf] %v400
    %433 = vst [vmem:[%s3 + $0xc] sm:$0xf] %v401
    %434 = vst [vmem:[%s3 + $0x10] sm:$0xf] %v402
    %435 = vst [vmem:[%s3 + $0x14] sm:$0xf] %v403
    %436 = vst [vmem:[%s3 + $0x18] sm:$0xf] %v404
    %437 = vst [vmem:[%s3 + $0x1c] sm:$0xf] %v405
    %438 = vst [vmem:[%s3 + $0x20] sm:$0xf] %v406
    %439 = vst [vmem:[%s3 + $0x24] sm:$0xf] %v407
    %440 = vst [vmem:[%s3 + $0x28] sm:$0xf] %v408
    %441 = vst [vmem:[%s3 + $0x2c] sm:$0xf] %v409
    %442 = vst [vmem:[%s3 + $0x30] sm:$0xf] %v410
    %443 = vst [vmem:[%s3 + $0x34] sm:$0xf] %v411
    %444 = vst [vmem:[%s3 + $0x38] sm:$0xf] %v412
    %445 = vst [vmem:[%s3 + $0x3c] sm:$0xf] %v413
  $region21: #{forward.16} parent=0 // pred_fallthru
    _
  // Predicated region
  $region22: #{forward.16} parent=0 // pred_check
    _
  $region23: #{forward.16} parent=0 // pred_check_branch
    %447 = sbr.rel (0) target = $region25
  $region24: #{forward.16} parent=0 // pred_region
    _
  $region25: #{forward.16} parent=0 // pred_fallthru
    _
  // Predicated region
  $region26: #{forward.16} parent=0 // pred_check
    _
  $region27: #{forward.16} parent=0 // pred_check_branch
    %449 = sbr.rel (0) target = $region29
  $region28: #{forward.16} parent=0 // pred_region
    _
  $region29: #{forward.16} parent=0 // pred_fallthru
    _

// kernel: forward.17
$region0: #{forward.17}
  #allocation0 [shape = 'u32[]', space=smem, size = 0x4, offset = 0x4, fixed_abs, tag = 'smem constant byte address 0x4 - core index']
  #allocation1 [shape = 'u32[144,128]{1,0:T(1,128)}', space=vmem, size = 0x12000, scoped, tag = 'internal scratch']
  #allocation2 [shape = 'f32[32,128]{1,0:T(8,128)}', space=vmem, size = 0x4000, scoped, tag = 'scratch operand']
  %s0 = inlined_call_operand.vmem [shape: bf16[32,256], index: 0, kind: input, shape index: {}]
  %s1 = inlined_call_operand.vmem [shape: bf16[256,128], index: 1, kind: input, shape index: {}]
  %s2 = inlined_call_operand.vmem [shape: f32[1,128], index: 2, kind: input, shape index: {}]
  %s3 = inlined_call_operand.vmem [shape: bf16[32,128], index: 3, kind: output, shape index: {}]
  %s4 = sld [smem:[#allocation0]]
  $region30: #{forward.17} parent=0
    _
  %s6 = ssub.s32 1, %s4
  %s7 = scalar_select 0, %s6, %s4
  // Predicated region
  $region2: #{forward.17} parent=0 // pred_check
    _
  $region3: #{forward.17} parent=0 // pred_check_branch
    %9 = sbr.rel (0) target = $region5
  $region4: #{forward.17} parent=0 // pred_region
    _
  $region5: #{forward.17} parent=0 // pred_fallthru
    _
  // Predicated region
  $region6: #{forward.17} parent=0 // pred_check
    _
  $region7: #{forward.17} parent=0 // pred_check_branch
    %11 = sbr.rel (0) target = $region9
  $region8: #{forward.17} parent=0 // pred_region
    _
  $region9: #{forward.17} parent=0 // pred_fallthru
    _
  // Predicated region
  $region10: #{forward.17} parent=0 // pred_check
    _
  $region11: #{forward.17} parent=0 // pred_check_branch
    %13 = sbr.rel (0) target = $region13
  $region12: #{forward.17} parent=0 // pred_region
    _
  $region13: #{forward.17} parent=0 // pred_fallthru
    _
  %p15 = scmp.eq.s32.totalorder 0, 0
  // Predicated region
  $region14: #{forward.17} parent=0 // pred_check
    %p16 = pneg %p15
  $region15: #{forward.17} parent=0 // pred_check_branch
    %18 = sbr.rel (%p16) target = $region17
  $region16: #{forward.17} parent=0 // pred_region
    %19 = vst [vmem:[#allocation2] sm:$0xff] 0.0
    %20 = vst [vmem:[#allocation2 + $0x8] sm:$0xff] 0.0
    %21 = vst [vmem:[#allocation2 + $0x10] sm:$0xff] 0.0
    %22 = vst [vmem:[#allocation2 + $0x18] sm:$0xff] 0.0
  $region17: #{forward.17} parent=0 // pred_fallthru
    _
  %v23 = vld [vmem:[#allocation2] sm:$0xff]
  %v24 = vld [vmem:[#allocation2 + $0x8] sm:$0xff]
  %v25 = vld [vmem:[#allocation2 + $0x10] sm:$0xff]
  %v26 = vld [vmem:[#allocation2 + $0x18] sm:$0xff]
  %v27 = vld [vmem:[%s0] sm:$0xff]
  %v28 = vld [vmem:[%s0 + $0x8] sm:$0xff]
  %v29 = vld [vmem:[%s0 + $0x10] sm:$0xff]
  %v30 = vld [vmem:[%s0 + $0x18] sm:$0xff]
  %v31 = vld [vmem:[%s1] sm:$0xf]
  %v32 = vld [vmem:[%s1 + $0x4] sm:$0xf]
  %v33 = vld [vmem:[%s1 + $0x8] sm:$0xf]
  %v34 = vld [vmem:[%s1 + $0xc] sm:$0xf]
  %v35 = vld [vmem:[%s1 + $0x10] sm:$0xf]
  %v36 = vld [vmem:[%s1 + $0x14] sm:$0xf]
  %v37 = vld [vmem:[%s1 + $0x18] sm:$0xf]
  %v38 = vld [vmem:[%s1 + $0x1c] sm:$0xf]
  %v39 = vld [vmem:[%s1 + $0x20] sm:$0xf]
  %v40 = vld [vmem:[%s1 + $0x24] sm:$0xf]
  %v41 = vld [vmem:[%s1 + $0x28] sm:$0xf]
  %v42 = vld [vmem:[%s1 + $0x2c] sm:$0xf]
  %v43 = vld [vmem:[%s1 + $0x30] sm:$0xf]
  %v44 = vld [vmem:[%s1 + $0x34] sm:$0xf]
  %v45 = vld [vmem:[%s1 + $0x38] sm:$0xf]
  %v46 = vld [vmem:[%s1 + $0x3c] sm:$0xf]
  %v47 = vld [vmem:[%s1 + $0x40] sm:$0xf]
  %v48 = vld [vmem:[%s1 + $0x44] sm:$0xf]
  %v49 = vld [vmem:[%s1 + $0x48] sm:$0xf]
  %v50 = vld [vmem:[%s1 + $0x4c] sm:$0xf]
  %v51 = vld [vmem:[%s1 + $0x50] sm:$0xf]
  %v52 = vld [vmem:[%s1 + $0x54] sm:$0xf]
  %v53 = vld [vmem:[%s1 + $0x58] sm:$0xf]
  %v54 = vld [vmem:[%s1 + $0x5c] sm:$0xf]
  %v55 = vld [vmem:[%s1 + $0x60] sm:$0xf]
  %v56 = vld [vmem:[%s1 + $0x64] sm:$0xf]
  %v57 = vld [vmem:[%s1 + $0x68] sm:$0xf]
  %v58 = vld [vmem:[%s1 + $0x6c] sm:$0xf]
  %v59 = vld [vmem:[%s1 + $0x70] sm:$0xf]
  %v60 = vld [vmem:[%s1 + $0x74] sm:$0xf]
  %v61 = vld [vmem:[%s1 + $0x78] sm:$0xf]
  %v62 = vld [vmem:[%s1 + $0x7c] sm:$0xf]
  %v67 = vunpack.c.l.b16 %v27
  %v68 = vunpack.c.h.b16 %v27
  %v69 = vunpack.c.l.b16 %v28
  %v70 = vunpack.c.h.b16 %v28
  %v71 = vunpack.c.l.b16 %v29
  %v72 = vunpack.c.h.b16 %v29
  %v73 = vunpack.c.l.b16 %v30
  %v74 = vunpack.c.h.b16 %v30
  %v75 = vpack.c.b16 %v69, %v67
  %v76 = vpack.c.b16 %v70, %v68
  %v77 = vpack.c.b16 %v73, %v71
  %v78 = vpack.c.b16 %v74, %v72
  %v115 = vunpack.c.l.b16 %v31
  %v116 = vunpack.c.l.b16 %v32
  %v117 = vunpack.c.l.b16 %v33
  %v118 = vunpack.c.l.b16 %v34
  %v119 = vunpack.c.l.b16 %v35
  %v120 = vunpack.c.l.b16 %v36
  %v121 = vunpack.c.l.b16 %v37
  %v122 = vunpack.c.l.b16 %v38
  %v123 = vunpack.c.l.b16 %v39
  %v124 = vunpack.c.l.b16 %v40
  %v125 = vunpack.c.l.b16 %v41
  %v126 = vunpack.c.l.b16 %v42
  %v127 = vunpack.c.l.b16 %v43
  %v128 = vunpack.c.l.b16 %v44
  %v129 = vunpack.c.l.b16 %v45
  %v130 = vunpack.c.l.b16 %v46
  %v131 = vunpack.c.l.b16 %v47
  %v132 = vunpack.c.l.b16 %v48
  %v133 = vunpack.c.l.b16 %v49
  %v134 = vunpack.c.l.b16 %v50
  %v135 = vunpack.c.l.b16 %v51
  %v136 = vunpack.c.l.b16 %v52
  %v137 = vunpack.c.l.b16 %v53
  %v138 = vunpack.c.l.b16 %v54
  %v139 = vunpack.c.l.b16 %v55
  %v140 = vunpack.c.l.b16 %v56
  %v141 = vunpack.c.l.b16 %v57
  %v142 = vunpack.c.l.b16 %v58
  %v143 = vunpack.c.l.b16 %v59
  %v144 = vunpack.c.l.b16 %v60
  %v145 = vunpack.c.l.b16 %v61
  %v146 = vunpack.c.l.b16 %v62
  %v147 = vpack.c.b16 %v116, %v115
  %v148 = vpack.c.b16 %v118, %v117
  %v149 = vpack.c.b16 %v120, %v119
  %v150 = vpack.c.b16 %v122, %v121
  %v151 = vpack.c.b16 %v124, %v123
  %v152 = vpack.c.b16 %v126, %v125
  %v153 = vpack.c.b16 %v128, %v127
  %v154 = vpack.c.b16 %v130, %v129
  %v155 = vpack.c.b16 %v132, %v131
  %v156 = vpack.c.b16 %v134, %v133
  %v157 = vpack.c.b16 %v136, %v135
  %v158 = vpack.c.b16 %v138, %v137
  %v159 = vpack.c.b16 %v140, %v139
  %v160 = vpack.c.b16 %v142, %v141
  %v161 = vpack.c.b16 %v144, %v143
  %v162 = vpack.c.b16 %v146, %v145
  %179 = vmatprep.subr.bf16.mxu0 0
  %180 = vmatpush1.bf16.msra.mxu0 %v147
  %181 = vmatprep.subr.bf16.mxu0 0
  %182 = vmatpush1.bf16.msra.mxu0 %v148
  %183 = vmatprep.subr.bf16.mxu0 0
  %184 = vmatpush1.bf16.msra.mxu0 %v149
  %185 = vmatprep.subr.bf16.mxu0 0
  %186 = vmatpush1.bf16.msra.mxu0 %v150
  %187 = vmatprep.subr.bf16.mxu0 0
  %188 = vmatpush1.bf16.msra.mxu0 %v151
  %189 = vmatprep.subr.bf16.mxu0 0
  %190 = vmatpush1.bf16.msra.mxu0 %v152
  %191 = vmatprep.subr.bf16.mxu0 0
  %192 = vmatpush1.bf16.msra.mxu0 %v153
  %193 = vmatprep.subr.bf16.mxu0 0
  %194 = vmatpush1.bf16.msra.mxu0 %v154
  %195 = vmatprep.subr.bf16.mxu0 0
  %196 = vmatpush1.bf16.msra.mxu0 %v155
  %197 = vmatprep.subr.bf16.mxu0 0
  %198 = vmatpush1.bf16.msra.mxu0 %v156
  %199 = vmatprep.subr.bf16.mxu0 0
  %200 = vmatpush1.bf16.msra.mxu0 %v157
  %201 = vmatprep.subr.bf16.mxu0 0
  %202 = vmatpush1.bf16.msra.mxu0 %v158
  %203 = vmatprep.subr.bf16.mxu0 0
  %204 = vmatpush1.bf16.msra.mxu0 %v159
  %205 = vmatprep.subr.bf16.mxu0 0
  %206 = vmatpush1.bf16.msra.mxu0 %v160
  %207 = vmatprep.subr.bf16.mxu0 0
  %208 = vmatpush1.bf16.msra.mxu0 %v161
  %209 = vmatprep.subr.bf16.mxu0 0
  %210 = vmatpush1.bf16.msra.mxu0 %v162
  %211 = vmatprep.mubr.bf16.mxu0 %v76
  %212 = vmatmul.mubr.bf16.gmra.mrb[0].mxu0 %v75
  %v213 = vpop.f32.mrb[0].mxu0
  %v214 = vadd.f32 0.0, %v213
  %v215 = vpop.f32.mrb[0].mxu0
  %v216 = vpop.f32.mrb[0].mxu0
  %v217 = vadd.f32 0.0, %v216
  %v218 = vpop.f32.mrb[0].mxu0
  %219 = vmatprep.mubr.bf16.mxu0 %v78
  %220 = vmatmul.mubr.bf16.gmra.mrb[0].mxu0 %v77
  %v221 = vpop.f32.mrb[0].mxu0
  %v222 = vadd.f32 0.0, %v221
  %v223 = vpop.f32.mrb[0].mxu0
  %v224 = vpop.f32.mrb[0].mxu0
  %v225 = vadd.f32 0.0, %v224
  %v226 = vpop.f32.mrb[0].mxu0
  %227 = vdwg.mxu0
  %v228 = vadd.f32 %v23, %v214
  %v229 = vadd.f32 %v24, %v217
  %v230 = vadd.f32 %v25, %v222
  %v231 = vadd.f32 %v26, %v225
  %232 = vst [vmem:[#allocation2] sm:$0xff] %v228
  %233 = vst [vmem:[#allocation2 + $0x8] sm:$0xff] %v229
  %234 = vst [vmem:[#allocation2 + $0x10] sm:$0xff] %v230
  %235 = vst [vmem:[#allocation2 + $0x18] sm:$0xff] %v231
  // Predicated region
  $region18: #{forward.17} parent=0 // pred_check
    %p236 = pneg %p15
  $region19: #{forward.17} parent=0 // pred_check_branch
    %238 = sbr.rel (%p236) target = $region21
  $region20: #{forward.17} parent=0 // pred_region
    %v239 = vld [vmem:[#allocation2] sm:$0xff]
    %v240 = vld [vmem:[#allocation2 + $0x8] sm:$0xff]
    %v241 = vld [vmem:[#allocation2 + $0x10] sm:$0xff]
    %v242 = vld [vmem:[#allocation2 + $0x18] sm:$0xff]
    %v243 = vld [vmem:[%s2] sm:$0x1]
    %v245 = vlaneseq
    %v246 = vshrl.u32 %v245, 7
    %v247 = vsub.s32 0, %v246
    %v248 = vrot.slane %v243, %v247
    %v250 = vadd.f32 %v239, %v248
    %v251 = vadd.f32 %v240, %v248
    %v252 = vadd.f32 %v241, %v248
    %v253 = vadd.f32 %v242, %v248
    %v254 = vmax.f32 %v250, 0.0
    %v255 = vmax.f32 %v251, 0.0
    %v256 = vmax.f32 %v252, 0.0
    %v257 = vmax.f32 %v253, 0.0
    %v258 = vpack.c.bf16 %v255, %v254
    %v259 = vpack.c.bf16 %v257, %v256
    %v262 = vunpack.c.l.b16 %v258
    %v263 = vunpack.c.h.b16 %v258
    %v264 = vunpack.c.l.b16 %v259
    %v265 = vunpack.c.h.b16 %v259
    %v266 = vpack.c.b16 %v262, %v262
    %v267 = vpack.c.b16 %v263, %v263
    %v268 = vpack.c.b16 %v264, %v264
    %v269 = vpack.c.b16 %v265, %v265
    %274 = vst [vmem:[%s3] sm:$0xf] %v266
    %275 = vst [vmem:[%s3 + $0x4] sm:$0xf] %v267
    %276 = vst [vmem:[%s3 + $0x8] sm:$0xf] %v268
    %277 = vst [vmem:[%s3 + $0xc] sm:$0xf] %v269
  $region21: #{forward.17} parent=0 // pred_fallthru
    _
  // Predicated region
  $region22: #{forward.17} parent=0 // pred_check
    _
  $region23: #{forward.17} parent=0 // pred_check_branch
    %279 = sbr.rel (0) target = $region25
  $region24: #{forward.17} parent=0 // pred_region
    _
  $region25: #{forward.17} parent=0 // pred_fallthru
    _
  // Predicated region
  $region26: #{forward.17} parent=0 // pred_check
    _
  $region27: #{forward.17} parent=0 // pred_check_branch
    %281 = sbr.rel (0) target = $region29
  $region28: #{forward.17} parent=0 // pred_region
    _
  $region29: #{forward.17} parent=0 // pred_fallthru
    _

// kernel: forward.20
$region0: #{forward.20}
  #allocation0 [shape = 'u32[]', space=smem, size = 0x4, offset = 0x4, fixed_abs, tag = 'smem constant byte address 0x4 - core index']
  #allocation1 [shape = 'u32[144,128]{1,0:T(1,128)}', space=vmem, size = 0x12000, scoped, tag = 'internal scratch']
  #allocation2 [shape = 'f32[32,128]{1,0:T(8,128)}', space=vmem, size = 0x4000, scoped, tag = 'scratch operand']
  %s0 = inlined_call_operand.vmem [shape: bf16[32,128], index: 0, kind: input, shape index: {}]
  %s1 = inlined_call_operand.vmem [shape: bf16[128,128], index: 1, kind: input, shape index: {}]
  %s2 = inlined_call_operand.vmem [shape: f32[1,128], index: 2, kind: input, shape index: {}]
  %s3 = inlined_call_operand.vmem [shape: bf16[32,128], index: 3, kind: output, shape index: {}]
  %s4 = sld [smem:[#allocation0]]
  $region30: #{forward.20} parent=0
    _
  %s6 = ssub.s32 1, %s4
  %s7 = scalar_select 0, %s6, %s4
  // Predicated region
  $region2: #{forward.20} parent=0 // pred_check
    _
  $region3: #{forward.20} parent=0 // pred_check_branch
    %9 = sbr.rel (0) target = $region5
  $region4: #{forward.20} parent=0 // pred_region
    _
  $region5: #{forward.20} parent=0 // pred_fallthru
    _
  // Predicated region
  $region6: #{forward.20} parent=0 // pred_check
    _
  $region7: #{forward.20} parent=0 // pred_check_branch
    %11 = sbr.rel (0) target = $region9
  $region8: #{forward.20} parent=0 // pred_region
    _
  $region9: #{forward.20} parent=0 // pred_fallthru
    _
  // Predicated region
  $region10: #{forward.20} parent=0 // pred_check
    _
  $region11: #{forward.20} parent=0 // pred_check_branch
    %13 = sbr.rel (0) target = $region13
  $region12: #{forward.20} parent=0 // pred_region
    _
  $region13: #{forward.20} parent=0 // pred_fallthru
    _
  %p15 = scmp.eq.s32.totalorder 0, 0
  // Predicated region
  $region14: #{forward.20} parent=0 // pred_check
    %p16 = pneg %p15
  $region15: #{forward.20} parent=0 // pred_check_branch
    %18 = sbr.rel (%p16) target = $region17
  $region16: #{forward.20} parent=0 // pred_region
    %19 = vst [vmem:[#allocation2] sm:$0xff] 0.0
    %20 = vst [vmem:[#allocation2 + $0x8] sm:$0xff] 0.0
    %21 = vst [vmem:[#allocation2 + $0x10] sm:$0xff] 0.0
    %22 = vst [vmem:[#allocation2 + $0x18] sm:$0xff] 0.0
  $region17: #{forward.20} parent=0 // pred_fallthru
    _
  %v23 = vld [vmem:[#allocation2] sm:$0xff]
  %v24 = vld [vmem:[#allocation2 + $0x8] sm:$0xff]
  %v25 = vld [vmem:[#allocation2 + $0x10] sm:$0xff]
  %v26 = vld [vmem:[#allocation2 + $0x18] sm:$0xff]
  %v27 = vld [vmem:[%s0] sm:$0xf]
  %v28 = vld [vmem:[%s0 + $0x4] sm:$0xf]
  %v29 = vld [vmem:[%s0 + $0x8] sm:$0xf]
  %v30 = vld [vmem:[%s0 + $0xc] sm:$0xf]
  %v31 = vld [vmem:[%s1] sm:$0xf]
  %v32 = vld [vmem:[%s1 + $0x4] sm:$0xf]
  %v33 = vld [vmem:[%s1 + $0x8] sm:$0xf]
  %v34 = vld [vmem:[%s1 + $0xc] sm:$0xf]
  %v35 = vld [vmem:[%s1 + $0x10] sm:$0xf]
  %v36 = vld [vmem:[%s1 + $0x14] sm:$0xf]
  %v37 = vld [vmem:[%s1 + $0x18] sm:$0xf]
  %v38 = vld [vmem:[%s1 + $0x1c] sm:$0xf]
  %v39 = vld [vmem:[%s1 + $0x20] sm:$0xf]
  %v40 = vld [vmem:[%s1 + $0x24] sm:$0xf]
  %v41 = vld [vmem:[%s1 + $0x28] sm:$0xf]
  %v42 = vld [vmem:[%s1 + $0x2c] sm:$0xf]
  %v43 = vld [vmem:[%s1 + $0x30] sm:$0xf]
  %v44 = vld [vmem:[%s1 + $0x34] sm:$0xf]
  %v45 = vld [vmem:[%s1 + $0x38] sm:$0xf]
  %v46 = vld [vmem:[%s1 + $0x3c] sm:$0xf]
  %v51 = vunpack.c.l.b16 %v27
  %v52 = vunpack.c.l.b16 %v28
  %v53 = vunpack.c.l.b16 %v29
  %v54 = vunpack.c.l.b16 %v30
  %v55 = vpack.c.b16 %v52, %v51
  %v56 = vpack.c.b16 %v54, %v53
  %v75 = vunpack.c.l.b16 %v31
  %v76 = vunpack.c.l.b16 %v32
  %v77 = vunpack.c.l.b16 %v33
  %v78 = vunpack.c.l.b16 %v34
  %v79 = vunpack.c.l.b16 %v35
  %v80 = vunpack.c.l.b16 %v36
  %v81 = vunpack.c.l.b16 %v37
  %v82 = vunpack.c.l.b16 %v38
  %v83 = vunpack.c.l.b16 %v39
  %v84 = vunpack.c.l.b16 %v40
  %v85 = vunpack.c.l.b16 %v41
  %v86 = vunpack.c.l.b16 %v42
  %v87 = vunpack.c.l.b16 %v43
  %v88 = vunpack.c.l.b16 %v44
  %v89 = vunpack.c.l.b16 %v45
  %v90 = vunpack.c.l.b16 %v46
  %v91 = vpack.c.b16 %v76, %v75
  %v92 = vpack.c.b16 %v78, %v77
  %v93 = vpack.c.b16 %v80, %v79
  %v94 = vpack.c.b16 %v82, %v81
  %v95 = vpack.c.b16 %v84, %v83
  %v96 = vpack.c.b16 %v86, %v85
  %v97 = vpack.c.b16 %v88, %v87
  %v98 = vpack.c.b16 %v90, %v89
  %107 = vmatprep.subr.bf16.mxu0 0
  %108 = vmatpush1.bf16.msra.mxu0 %v91
  %109 = vmatprep.subr.bf16.mxu0 0
  %110 = vmatpush1.bf16.msra.mxu0 %v92
  %111 = vmatprep.subr.bf16.mxu0 0
  %112 = vmatpush1.bf16.msra.mxu0 %v93
  %113 = vmatprep.subr.bf16.mxu0 0
  %114 = vmatpush1.bf16.msra.mxu0 %v94
  %115 = vmatprep.subr.bf16.mxu0 0
  %116 = vmatpush1.bf16.msra.mxu0 %v95
  %117 = vmatprep.subr.bf16.mxu0 0
  %118 = vmatpush1.bf16.msra.mxu0 %v96
  %119 = vmatprep.subr.bf16.mxu0 0
  %120 = vmatpush1.bf16.msra.mxu0 %v97
  %121 = vmatprep.subr.bf16.mxu0 0
  %122 = vmatpush1.bf16.msra.mxu0 %v98
  %123 = vmatprep.subr.bf16.mxu0 0
  %124 = vmatpush1.bf16.msra.mxu0 0
  %125 = vmatprep.subr.bf16.mxu0 0
  %126 = vmatpush1.bf16.msra.mxu0 0
  %127 = vmatprep.subr.bf16.mxu0 0
  %128 = vmatpush1.bf16.msra.mxu0 0
  %129 = vmatprep.subr.bf16.mxu0 0
  %130 = vmatpush1.bf16.msra.mxu0 0
  %131 = vmatprep.subr.bf16.mxu0 0
  %132 = vmatpush1.bf16.msra.mxu0 0
  %133 = vmatprep.subr.bf16.mxu0 0
  %134 = vmatpush1.bf16.msra.mxu0 0
  %135 = vmatprep.subr.bf16.mxu0 0
  %136 = vmatpush1.bf16.msra.mxu0 0
  %137 = vmatprep.subr.bf16.mxu0 0
  %138 = vmatpush1.bf16.msra.mxu0 0
  %139 = vmatprep.mubr.bf16.mxu0 0
  %140 = vmatmul.mubr.bf16.gmra.mrb[0].mxu0 %v55
  %v141 = vpop.f32.mrb[0].mxu0
  %v142 = vadd.f32 0.0, %v141
  %v143 = vpop.f32.mrb[0].mxu0
  %v144 = vpop.f32.mrb[0].mxu0
  %v145 = vadd.f32 0.0, %v144
  %v146 = vpop.f32.mrb[0].mxu0
  %147 = vmatprep.mubr.bf16.mxu0 0
  %148 = vmatmul.mubr.bf16.gmra.mrb[0].mxu0 %v56
  %v149 = vpop.f32.mrb[0].mxu0
  %v150 = vadd.f32 0.0, %v149
  %v151 = vpop.f32.mrb[0].mxu0
  %v152 = vpop.f32.mrb[0].mxu0
  %v153 = vadd.f32 0.0, %v152
  %v154 = vpop.f32.mrb[0].mxu0
  %155 = vdwg.mxu0
  %v156 = vadd.f32 %v23, %v142
  %v157 = vadd.f32 %v24, %v145
  %v158 = vadd.f32 %v25, %v150
  %v159 = vadd.f32 %v26, %v153
  %160 = vst [vmem:[#allocation2] sm:$0xff] %v156
  %161 = vst [vmem:[#allocation2 + $0x8] sm:$0xff] %v157
  %162 = vst [vmem:[#allocation2 + $0x10] sm:$0xff] %v158
  %163 = vst [vmem:[#allocation2 + $0x18] sm:$0xff] %v159
  // Predicated region
  $region18: #{forward.20} parent=0 // pred_check
    %p164 = pneg %p15
  $region19: #{forward.20} parent=0 // pred_check_branch
    %166 = sbr.rel (%p164) target = $region21
  $region20: #{forward.20} parent=0 // pred_region
    %v167 = vld [vmem:[#allocation2] sm:$0xff]
    %v168 = vld [vmem:[#allocation2 + $0x8] sm:$0xff]
    %v169 = vld [vmem:[#allocation2 + $0x10] sm:$0xff]
    %v170 = vld [vmem:[#allocation2 + $0x18] sm:$0xff]
    %v171 = vld [vmem:[%s2] sm:$0x1]
    %v173 = vlaneseq
    %v174 = vshrl.u32 %v173, 7
    %v175 = vsub.s32 0, %v174
    %v176 = vrot.slane %v171, %v175
    %v178 = vadd.f32 %v167, %v176
    %v179 = vadd.f32 %v168, %v176
    %v180 = vadd.f32 %v169, %v176
    %v181 = vadd.f32 %v170, %v176
    %v182 = vpack.c.bf16 %v179, %v178
    %v183 = vpack.c.bf16 %v181, %v180
    %v186 = vunpack.c.l.b16 %v182
    %v187 = vunpack.c.h.b16 %v182
    %v188 = vunpack.c.l.b16 %v183
    %v189 = vunpack.c.h.b16 %v183
    %v190 = vpack.c.b16 %v186, %v186
    %v191 = vpack.c.b16 %v187, %v187
    %v192 = vpack.c.b16 %v188, %v188
    %v193 = vpack.c.b16 %v189, %v189
    %198 = vst [vmem:[%s3] sm:$0xf] %v190
    %199 = vst [vmem:[%s3 + $0x4] sm:$0xf] %v191
    %200 = vst [vmem:[%s3 + $0x8] sm:$0xf] %v192
    %201 = vst [vmem:[%s3 + $0xc] sm:$0xf] %v193
  $region21: #{forward.20} parent=0 // pred_fallthru
    _
  // Predicated region
  $region22: #{forward.20} parent=0 // pred_check
    _
  $region23: #{forward.20} parent=0 // pred_check_branch
    %203 = sbr.rel (0) target = $region25
  $region24: #{forward.20} parent=0 // pred_region
    _
  $region25: #{forward.20} parent=0 // pred_fallthru
    _
  // Predicated region
  $region26: #{forward.20} parent=0 // pred_check
    _
  $region27: #{forward.20} parent=0 // pred_check_branch
    %205 = sbr.rel (0) target = $region29
  $region28: #{forward.20} parent=0 // pred_region
    _
  $region29: #{forward.20} parent=0 // pred_fallthru
    _

// kernel: forward.18
$region0: #{forward.18}
  #allocation0 [shape = 'u32[]', space=smem, size = 0x4, offset = 0x4, fixed_abs, tag = 'smem constant byte address 0x4 - core index']
  #allocation1 [shape = 'u32[144,128]{1,0:T(1,128)}', space=vmem, size = 0x12000, scoped, tag = 'internal scratch']
  #allocation2 [shape = 'f32[16,128]{1,0:T(8,128)}', space=vmem, size = 0x2000, scoped, tag = 'scratch operand']
  %s0 = inlined_call_operand.vmem [shape: bf16[16,384], index: 0, kind: input, shape index: {}]
  %s1 = inlined_call_operand.vmem [shape: bf16[384,128], index: 1, kind: input, shape index: {}]
  %s2 = inlined_call_operand.vmem [shape: f32[1,128], index: 2, kind: input, shape index: {}]
  %s3 = inlined_call_operand.vmem [shape: bf16[16,128], index: 3, kind: output, shape index: {}]
  %s4 = sld [smem:[#allocation0]]
  $region30: #{forward.18} parent=0
    _
  %s6 = ssub.s32 1, %s4
  %s7 = scalar_select 0, %s6, %s4
  // Predicated region
  $region2: #{forward.18} parent=0 // pred_check
    _
  $region3: #{forward.18} parent=0 // pred_check_branch
    %9 = sbr.rel (0) target = $region5
  $region4: #{forward.18} parent=0 // pred_region
    _
  $region5: #{forward.18} parent=0 // pred_fallthru
    _
  // Predicated region
  $region6: #{forward.18} parent=0 // pred_check
    _
  $region7: #{forward.18} parent=0 // pred_check_branch
    %11 = sbr.rel (0) target = $region9
  $region8: #{forward.18} parent=0 // pred_region
    _
  $region9: #{forward.18} parent=0 // pred_fallthru
    _
  // Predicated region
  $region10: #{forward.18} parent=0 // pred_check
    _
  $region11: #{forward.18} parent=0 // pred_check_branch
    %13 = sbr.rel (0) target = $region13
  $region12: #{forward.18} parent=0 // pred_region
    _
  $region13: #{forward.18} parent=0 // pred_fallthru
    _
  %p15 = scmp.eq.s32.totalorder 0, 0
  // Predicated region
  $region14: #{forward.18} parent=0 // pred_check
    %p16 = pneg %p15
  $region15: #{forward.18} parent=0 // pred_check_branch
    %18 = sbr.rel (%p16) target = $region17
  $region16: #{forward.18} parent=0 // pred_region
    %19 = vst [vmem:[#allocation2] sm:$0xff] 0.0
    %20 = vst [vmem:[#allocation2 + $0x8] sm:$0xff] 0.0
  $region17: #{forward.18} parent=0 // pred_fallthru
    _
  %v21 = vld [vmem:[#allocation2] sm:$0xff]
  %v22 = vld [vmem:[#allocation2 + $0x8] sm:$0xff]
  %v23 = vld [vmem:[%s0] sm:$0xff]
  %v24 = vld [vmem:[%s0 + $0x8] sm:$0xf]
  %v25 = vld [vmem:[%s0 + $0xc] sm:$0xff]
  %v26 = vld [vmem:[%s0 + $0x14] sm:$0xf]
  %v27 = vld [vmem:[%s1] sm:$0xf]
  %v28 = vld [vmem:[%s1 + $0x4] sm:$0xf]
  %v29 = vld [vmem:[%s1 + $0x8] sm:$0xf]
  %v30 = vld [vmem:[%s1 + $0xc] sm:$0xf]
  %v31 = vld [vmem:[%s1 + $0x10] sm:$0xf]
  %v32 = vld [vmem:[%s1 + $0x14] sm:$0xf]
  %v33 = vld [vmem:[%s1 + $0x18] sm:$0xf]
  %v34 = vld [vmem:[%s1 + $0x1c] sm:$0xf]
  %v35 = vld [vmem:[%s1 + $0x20] sm:$0xf]
  %v36 = vld [vmem:[%s1 + $0x24] sm:$0xf]
  %v37 = vld [vmem:[%s1 + $0x28] sm:$0xf]
  %v38 = vld [vmem:[%s1 + $0x2c] sm:$0xf]
  %v39 = vld [vmem:[%s1 + $0x30] sm:$0xf]
  %v40 = vld [vmem:[%s1 + $0x34] sm:$0xf]
  %v41 = vld [vmem:[%s1 + $0x38] sm:$0xf]
  %v42 = vld [vmem:[%s1 + $0x3c] sm:$0xf]
  %v43 = vld [vmem:[%s1 + $0x40] sm:$0xf]
  %v44 = vld [vmem:[%s1 + $0x44] sm:$0xf]
  %v45 = vld [vmem:[%s1 + $0x48] sm:$0xf]
  %v46 = vld [vmem:[%s1 + $0x4c] sm:$0xf]
  %v47 = vld [vmem:[%s1 + $0x50] sm:$0xf]
  %v48 = vld [vmem:[%s1 + $0x54] sm:$0xf]
  %v49 = vld [vmem:[%s1 + $0x58] sm:$0xf]
  %v50 = vld [vmem:[%s1 + $0x5c] sm:$0xf]
  %v51 = vld [vmem:[%s1 + $0x60] sm:$0xf]
  %v52 = vld [vmem:[%s1 + $0x64] sm:$0xf]
  %v53 = vld [vmem:[%s1 + $0x68] sm:$0xf]
  %v54 = vld [vmem:[%s1 + $0x6c] sm:$0xf]
  %v55 = vld [vmem:[%s1 + $0x70] sm:$0xf]
  %v56 = vld [vmem:[%s1 + $0x74] sm:$0xf]
  %v57 = vld [vmem:[%s1 + $0x78] sm:$0xf]
  %v58 = vld [vmem:[%s1 + $0x7c] sm:$0xf]
  %v59 = vld [vmem:[%s1 + $0x80] sm:$0xf]
  %v60 = vld [vmem:[%s1 + $0x84] sm:$0xf]
  %v61 = vld [vmem:[%s1 + $0x88] sm:$0xf]
  %v62 = vld [vmem:[%s1 + $0x8c] sm:$0xf]
  %v63 = vld [vmem:[%s1 + $0x90] sm:$0xf]
  %v64 = vld [vmem:[%s1 + $0x94] sm:$0xf]
  %v65 = vld [vmem:[%s1 + $0x98] sm:$0xf]
  %v66 = vld [vmem:[%s1 + $0x9c] sm:$0xf]
  %v67 = vld [vmem:[%s1 + $0xa0] sm:$0xf]
  %v68 = vld [vmem:[%s1 + $0xa4] sm:$0xf]
  %v69 = vld [vmem:[%s1 + $0xa8] sm:$0xf]
  %v70 = vld [vmem:[%s1 + $0xac] sm:$0xf]
  %v71 = vld [vmem:[%s1 + $0xb0] sm:$0xf]
  %v72 = vld [vmem:[%s1 + $0xb4] sm:$0xf]
  %v73 = vld [vmem:[%s1 + $0xb8] sm:$0xf]
  %v74 = vld [vmem:[%s1 + $0xbc] sm:$0xf]
  %v79 = vunpack.c.l.b16 %v23
  %v80 = vunpack.c.h.b16 %v23
  %v81 = vunpack.c.l.b16 %v24
  %v82 = vunpack.c.l.b16 %v25
  %v83 = vunpack.c.h.b16 %v25
  %v84 = vunpack.c.l.b16 %v26
  %v85 = vpack.c.b16 %v82, %v79
  %v86 = vpack.c.b16 %v83, %v80
  %v87 = vpack.c.b16 %v84, %v81
  %v139 = vunpack.c.l.b16 %v27
  %v140 = vunpack.c.l.b16 %v28
  %v141 = vunpack.c.l.b16 %v29
  %v142 = vunpack.c.l.b16 %v30
  %v143 = vunpack.c.l.b16 %v31
  %v144 = vunpack.c.l.b16 %v32
  %v145 = vunpack.c.l.b16 %v33
  %v146 = vunpack.c.l.b16 %v34
  %v147 = vunpack.c.l.b16 %v35
  %v148 = vunpack.c.l.b16 %v36
  %v149 = vunpack.c.l.b16 %v37
  %v150 = vunpack.c.l.b16 %v38
  %v151 = vunpack.c.l.b16 %v39
  %v152 = vunpack.c.l.b16 %v40
  %v153 = vunpack.c.l.b16 %v41
  %v154 = vunpack.c.l.b16 %v42
  %v155 = vunpack.c.l.b16 %v43
  %v156 = vunpack.c.l.b16 %v44
  %v157 = vunpack.c.l.b16 %v45
  %v158 = vunpack.c.l.b16 %v46
  %v159 = vunpack.c.l.b16 %v47
  %v160 = vunpack.c.l.b16 %v48
  %v161 = vunpack.c.l.b16 %v49
  %v162 = vunpack.c.l.b16 %v50
  %v163 = vunpack.c.l.b16 %v51
  %v164 = vunpack.c.l.b16 %v52
  %v165 = vunpack.c.l.b16 %v53
  %v166 = vunpack.c.l.b16 %v54
  %v167 = vunpack.c.l.b16 %v55
  %v168 = vunpack.c.l.b16 %v56
  %v169 = vunpack.c.l.b16 %v57
  %v170 = vunpack.c.l.b16 %v58
  %v171 = vunpack.c.l.b16 %v59
  %v172 = vunpack.c.l.b16 %v60
  %v173 = vunpack.c.l.b16 %v61
  %v174 = vunpack.c.l.b16 %v62
  %v175 = vunpack.c.l.b16 %v63
  %v176 = vunpack.c.l.b16 %v64
  %v177 = vunpack.c.l.b16 %v65
  %v178 = vunpack.c.l.b16 %v66
  %v179 = vunpack.c.l.b16 %v67
  %v180 = vunpack.c.l.b16 %v68
  %v181 = vunpack.c.l.b16 %v69
  %v182 = vunpack.c.l.b16 %v70
  %v183 = vunpack.c.l.b16 %v71
  %v184 = vunpack.c.l.b16 %v72
  %v185 = vunpack.c.l.b16 %v73
  %v186 = vunpack.c.l.b16 %v74
  %v187 = vpack.c.b16 %v140, %v139
  %v188 = vpack.c.b16 %v142, %v141
  %v189 = vpack.c.b16 %v144, %v143
  %v190 = vpack.c.b16 %v146, %v145
  %v191 = vpack.c.b16 %v148, %v147
  %v192 = vpack.c.b16 %v150, %v149
  %v193 = vpack.c.b16 %v152, %v151
  %v194 = vpack.c.b16 %v154, %v153
  %v195 = vpack.c.b16 %v156, %v155
  %v196 = vpack.c.b16 %v158, %v157
  %v197 = vpack.c.b16 %v160, %v159
  %v198 = vpack.c.b16 %v162, %v161
  %v199 = vpack.c.b16 %v164, %v163
  %v200 = vpack.c.b16 %v166, %v165
  %v201 = vpack.c.b16 %v168, %v167
  %v202 = vpack.c.b16 %v170, %v169
  %v203 = vpack.c.b16 %v172, %v171
  %v204 = vpack.c.b16 %v174, %v173
  %v205 = vpack.c.b16 %v176, %v175
  %v206 = vpack.c.b16 %v178, %v177
  %v207 = vpack.c.b16 %v180, %v179
  %v208 = vpack.c.b16 %v182, %v181
  %v209 = vpack.c.b16 %v184, %v183
  %v210 = vpack.c.b16 %v186, %v185
  %235 = vmatprep.subr.bf16.mxu0 0
  %236 = vmatpush1.bf16.msra.mxu0 %v187
  %237 = vmatprep.subr.bf16.mxu0 0
  %238 = vmatpush1.bf16.msra.mxu0 %v188
  %239 = vmatprep.subr.bf16.mxu0 0
  %240 = vmatpush1.bf16.msra.mxu0 %v189
  %241 = vmatprep.subr.bf16.mxu0 0
  %242 = vmatpush1.bf16.msra.mxu0 %v190
  %243 = vmatprep.subr.bf16.mxu0 0
  %244 = vmatpush1.bf16.msra.mxu0 %v191
  %245 = vmatprep.subr.bf16.mxu0 0
  %246 = vmatpush1.bf16.msra.mxu0 %v192
  %247 = vmatprep.subr.bf16.mxu0 0
  %248 = vmatpush1.bf16.msra.mxu0 %v193
  %249 = vmatprep.subr.bf16.mxu0 0
  %250 = vmatpush1.bf16.msra.mxu0 %v194
  %251 = vmatprep.subr.bf16.mxu0 0
  %252 = vmatpush1.bf16.msra.mxu0 %v195
  %253 = vmatprep.subr.bf16.mxu0 0
  %254 = vmatpush1.bf16.msra.mxu0 %v196
  %255 = vmatprep.subr.bf16.mxu0 0
  %256 = vmatpush1.bf16.msra.mxu0 %v197
  %257 = vmatprep.subr.bf16.mxu0 0
  %258 = vmatpush1.bf16.msra.mxu0 %v198
  %259 = vmatprep.subr.bf16.mxu0 0
  %260 = vmatpush1.bf16.msra.mxu0 %v199
  %261 = vmatprep.subr.bf16.mxu0 0
  %262 = vmatpush1.bf16.msra.mxu0 %v200
  %263 = vmatprep.subr.bf16.mxu0 0
  %264 = vmatpush1.bf16.msra.mxu0 %v201
  %265 = vmatprep.subr.bf16.mxu0 0
  %266 = vmatpush1.bf16.msra.mxu0 %v202
  %267 = vmatprep.mubr.bf16.mxu0 %v86
  %268 = vmatmul.mubr.bf16.gmra.mrb[0].mxu0 %v85
  %v269 = vpop.f32.mrb[0].mxu0
  %v270 = vadd.f32 0.0, %v269
  %v271 = vpop.f32.mrb[0].mxu0
  %v272 = vpop.f32.mrb[0].mxu0
  %v273 = vadd.f32 0.0, %v272
  %v274 = vpop.f32.mrb[0].mxu0
  %275 = vdwg.mxu0
  %276 = vmatprep.subr.bf16.mxu0 0
  %277 = vmatpush1.bf16.msra.mxu0 %v203
  %278 = vmatprep.subr.bf16.mxu0 0
  %279 = vmatpush1.bf16.msra.mxu0 %v204
  %280 = vmatprep.subr.bf16.mxu0 0
  %281 = vmatpush1.bf16.msra.mxu0 %v205
  %282 = vmatprep.subr.bf16.mxu0 0
  %283 = vmatpush1.bf16.msra.mxu0 %v206
  %284 = vmatprep.subr.bf16.mxu0 0
  %285 = vmatpush1.bf16.msra.mxu0 %v207
  %286 = vmatprep.subr.bf16.mxu0 0
  %287 = vmatpush1.bf16.msra.mxu0 %v208
  %288 = vmatprep.subr.bf16.mxu0 0
  %289 = vmatpush1.bf16.msra.mxu0 %v209
  %290 = vmatprep.subr.bf16.mxu0 0
  %291 = vmatpush1.bf16.msra.mxu0 %v210
  %292 = vmatprep.subr.bf16.mxu0 0
  %293 = vmatpush1.bf16.msra.mxu0 0
  %294 = vmatprep.subr.bf16.mxu0 0
  %295 = vmatpush1.bf16.msra.mxu0 0
  %296 = vmatprep.subr.bf16.mxu0 0
  %297 = vmatpush1.bf16.msra.mxu0 0
  %298 = vmatprep.subr.bf16.mxu0 0
  %299 = vmatpush1.bf16.msra.mxu0 0
  %300 = vmatprep.subr.bf16.mxu0 0
  %301 = vmatpush1.bf16.msra.mxu0 0
  %302 = vmatprep.subr.bf16.mxu0 0
  %303 = vmatpush1.bf16.msra.mxu0 0
  %304 = vmatprep.subr.bf16.mxu0 0
  %305 = vmatpush1.bf16.msra.mxu0 0
  %306 = vmatprep.subr.bf16.mxu0 0
  %307 = vmatpush1.bf16.msra.mxu0 0
  %308 = vmatprep.mubr.bf16.mxu0 0
  %309 = vmatmul.mubr.bf16.gmra.mrb[0].mxu0 %v87
  %v310 = vpop.f32.mrb[0].mxu0
  %v311 = vadd.f32 %v270, %v310
  %v312 = vpop.f32.mrb[0].mxu0
  %v313 = vpop.f32.mrb[0].mxu0
  %v314 = vadd.f32 %v273, %v313
  %v315 = vpop.f32.mrb[0].mxu0
  %316 = vdwg.mxu0
  %v317 = vadd.f32 %v21, %v311
  %v318 = vadd.f32 %v22, %v314
  %319 = vst [vmem:[#allocation2] sm:$0xff] %v317
  %320 = vst [vmem:[#allocation2 + $0x8] sm:$0xff] %v318
  // Predicated region
  $region18: #{forward.18} parent=0 // pred_check
    %p321 = pneg %p15
  $region19: #{forward.18} parent=0 // pred_check_branch
    %323 = sbr.rel (%p321) target = $region21
  $region20: #{forward.18} parent=0 // pred_region
    %v324 = vld [vmem:[#allocation2] sm:$0xff]
    %v325 = vld [vmem:[#allocation2 + $0x8] sm:$0xff]
    %v326 = vld [vmem:[%s2] sm:$0x1]
    %v328 = vlaneseq
    %v329 = vshrl.u32 %v328, 7
    %v330 = vsub.s32 0, %v329
    %v331 = vrot.slane %v326, %v330
    %v333 = vadd.f32 %v324, %v331
    %v334 = vadd.f32 %v325, %v331
    %v335 = vmax.f32 %v333, 0.0
    %v336 = vmax.f32 %v334, 0.0
    %v337 = vpack.c.bf16 %v336, %v335
    %v339 = vunpack.c.l.b16 %v337
    %v340 = vunpack.c.h.b16 %v337
    %v341 = vpack.c.b16 %v339, %v339
    %v342 = vpack.c.b16 %v340, %v340
    %345 = vst [vmem:[%s3] sm:$0xf] %v341
    %346 = vst [vmem:[%s3 + $0x4] sm:$0xf] %v342
  $region21: #{forward.18} parent=0 // pred_fallthru
    _
  // Predicated region
  $region22: #{forward.18} parent=0 // pred_check
    _
  $region23: #{forward.18} parent=0 // pred_check_branch
    %348 = sbr.rel (0) target = $region25
  $region24: #{forward.18} parent=0 // pred_region
    _
  $region25: #{forward.18} parent=0 // pred_fallthru
    _
  // Predicated region
  $region26: #{forward.18} parent=0 // pred_check
    _
  $region27: #{forward.18} parent=0 // pred_check_branch
    %350 = sbr.rel (0) target = $region29
  $region28: #{forward.18} parent=0 // pred_region
    _
  $region29: #{forward.18} parent=0 // pred_fallthru
    _

// kernel: forward.19
$region0: #{forward.19}
  #allocation0 [shape = 'u32[]', space=smem, size = 0x4, offset = 0x4, fixed_abs, tag = 'smem constant byte address 0x4 - core index']
  #allocation1 [shape = 'u32[144,128]{1,0:T(1,128)}', space=vmem, size = 0x12000, scoped, tag = 'internal scratch']
  #allocation2 [shape = 'f32[16,128]{1,0:T(8,128)}', space=vmem, size = 0x2000, scoped, tag = 'scratch operand']
  %s0 = inlined_call_operand.vmem [shape: bf16[16,128], index: 0, kind: input, shape index: {}]
  %s1 = inlined_call_operand.vmem [shape: bf16[128,128], index: 1, kind: input, shape index: {}]
  %s2 = inlined_call_operand.vmem [shape: f32[1,128], index: 2, kind: input, shape index: {}]
  %s3 = inlined_call_operand.vmem [shape: bf16[16,128], index: 3, kind: output, shape index: {}]
  %s4 = sld [smem:[#allocation0]]
  $region30: #{forward.19} parent=0
    _
  %s6 = ssub.s32 1, %s4
  %s7 = scalar_select 0, %s6, %s4
  // Predicated region
  $region2: #{forward.19} parent=0 // pred_check
    _
  $region3: #{forward.19} parent=0 // pred_check_branch
    %9 = sbr.rel (0) target = $region5
  $region4: #{forward.19} parent=0 // pred_region
    _
  $region5: #{forward.19} parent=0 // pred_fallthru
    _
  // Predicated region
  $region6: #{forward.19} parent=0 // pred_check
    _
  $region7: #{forward.19} parent=0 // pred_check_branch
    %11 = sbr.rel (0) target = $region9
  $region8: #{forward.19} parent=0 // pred_region
    _
  $region9: #{forward.19} parent=0 // pred_fallthru
    _
  // Predicated region
  $region10: #{forward.19} parent=0 // pred_check
    _
  $region11: #{forward.19} parent=0 // pred_check_branch
    %13 = sbr.rel (0) target = $region13
  $region12: #{forward.19} parent=0 // pred_region
    _
  $region13: #{forward.19} parent=0 // pred_fallthru
    _
  %p15 = scmp.eq.s32.totalorder 0, 0
  // Predicated region
  $region14: #{forward.19} parent=0 // pred_check
    %p16 = pneg %p15
  $region15: #{forward.19} parent=0 // pred_check_branch
    %18 = sbr.rel (%p16) target = $region17
  $region16: #{forward.19} parent=0 // pred_region
    %19 = vst [vmem:[#allocation2] sm:$0xff] 0.0
    %20 = vst [vmem:[#allocation2 + $0x8] sm:$0xff] 0.0
  $region17: #{forward.19} parent=0 // pred_fallthru
    _
  %v21 = vld [vmem:[#allocation2] sm:$0xff]
  %v22 = vld [vmem:[#allocation2 + $0x8] sm:$0xff]
  %v23 = vld [vmem:[%s0] sm:$0xf]
  %v24 = vld [vmem:[%s0 + $0x4] sm:$0xf]
  %v25 = vld [vmem:[%s1] sm:$0xf]
  %v26 = vld [vmem:[%s1 + $0x4] sm:$0xf]
  %v27 = vld [vmem:[%s1 + $0x8] sm:$0xf]
  %v28 = vld [vmem:[%s1 + $0xc] sm:$0xf]
  %v29 = vld [vmem:[%s1 + $0x10] sm:$0xf]
  %v30 = vld [vmem:[%s1 + $0x14] sm:$0xf]
  %v31 = vld [vmem:[%s1 + $0x18] sm:$0xf]
  %v32 = vld [vmem:[%s1 + $0x1c] sm:$0xf]
  %v33 = vld [vmem:[%s1 + $0x20] sm:$0xf]
  %v34 = vld [vmem:[%s1 + $0x24] sm:$0xf]
  %v35 = vld [vmem:[%s1 + $0x28] sm:$0xf]
  %v36 = vld [vmem:[%s1 + $0x2c] sm:$0xf]
  %v37 = vld [vmem:[%s1 + $0x30] sm:$0xf]
  %v38 = vld [vmem:[%s1 + $0x34] sm:$0xf]
  %v39 = vld [vmem:[%s1 + $0x38] sm:$0xf]
  %v40 = vld [vmem:[%s1 + $0x3c] sm:$0xf]
  %v43 = vunpack.c.l.b16 %v23
  %v44 = vunpack.c.l.b16 %v24
  %v45 = vpack.c.b16 %v44, %v43
  %v63 = vunpack.c.l.b16 %v25
  %v64 = vunpack.c.l.b16 %v26
  %v65 = vunpack.c.l.b16 %v27
  %v66 = vunpack.c.l.b16 %v28
  %v67 = vunpack.c.l.b16 %v29
  %v68 = vunpack.c.l.b16 %v30
  %v69 = vunpack.c.l.b16 %v31
  %v70 = vunpack.c.l.b16 %v32
  %v71 = vunpack.c.l.b16 %v33
  %v72 = vunpack.c.l.b16 %v34
  %v73 = vunpack.c.l.b16 %v35
  %v74 = vunpack.c.l.b16 %v36
  %v75 = vunpack.c.l.b16 %v37
  %v76 = vunpack.c.l.b16 %v38
  %v77 = vunpack.c.l.b16 %v39
  %v78 = vunpack.c.l.b16 %v40
  %v79 = vpack.c.b16 %v64, %v63
  %v80 = vpack.c.b16 %v66, %v65
  %v81 = vpack.c.b16 %v68, %v67
  %v82 = vpack.c.b16 %v70, %v69
  %v83 = vpack.c.b16 %v72, %v71
  %v84 = vpack.c.b16 %v74, %v73
  %v85 = vpack.c.b16 %v76, %v75
  %v86 = vpack.c.b16 %v78, %v77
  %95 = vmatprep.subr.bf16.mxu0 0
  %96 = vmatpush1.bf16.msra.mxu0 %v79
  %97 = vmatprep.subr.bf16.mxu0 0
  %98 = vmatpush1.bf16.msra.mxu0 %v80
  %99 = vmatprep.subr.bf16.mxu0 0
  %100 = vmatpush1.bf16.msra.mxu0 %v81
  %101 = vmatprep.subr.bf16.mxu0 0
  %102 = vmatpush1.bf16.msra.mxu0 %v82
  %103 = vmatprep.subr.bf16.mxu0 0
  %104 = vmatpush1.bf16.msra.mxu0 %v83
  %105 = vmatprep.subr.bf16.mxu0 0
  %106 = vmatpush1.bf16.msra.mxu0 %v84
  %107 = vmatprep.subr.bf16.mxu0 0
  %108 = vmatpush1.bf16.msra.mxu0 %v85
  %109 = vmatprep.subr.bf16.mxu0 0
  %110 = vmatpush1.bf16.msra.mxu0 %v86
  %111 = vmatprep.subr.bf16.mxu0 0
  %112 = vmatpush1.bf16.msra.mxu0 0
  %113 = vmatprep.subr.bf16.mxu0 0
  %114 = vmatpush1.bf16.msra.mxu0 0
  %115 = vmatprep.subr.bf16.mxu0 0
  %116 = vmatpush1.bf16.msra.mxu0 0
  %117 = vmatprep.subr.bf16.mxu0 0
  %118 = vmatpush1.bf16.msra.mxu0 0
  %119 = vmatprep.subr.bf16.mxu0 0
  %120 = vmatpush1.bf16.msra.mxu0 0
  %121 = vmatprep.subr.bf16.mxu0 0
  %122 = vmatpush1.bf16.msra.mxu0 0
  %123 = vmatprep.subr.bf16.mxu0 0
  %124 = vmatpush1.bf16.msra.mxu0 0
  %125 = vmatprep.subr.bf16.mxu0 0
  %126 = vmatpush1.bf16.msra.mxu0 0
  %127 = vmatprep.mubr.bf16.mxu0 0
  %128 = vmatmul.mubr.bf16.gmra.mrb[0].mxu0 %v45
  %v129 = vpop.f32.mrb[0].mxu0
  %v130 = vadd.f32 0.0, %v129
  %v131 = vpop.f32.mrb[0].mxu0
  %v132 = vpop.f32.mrb[0].mxu0
  %v133 = vadd.f32 0.0, %v132
  %v134 = vpop.f32.mrb[0].mxu0
  %135 = vdwg.mxu0
  %v136 = vadd.f32 %v21, %v130
  %v137 = vadd.f32 %v22, %v133
  %138 = vst [vmem:[#allocation2] sm:$0xff] %v136
  %139 = vst [vmem:[#allocation2 + $0x8] sm:$0xff] %v137
  // Predicated region
  $region18: #{forward.19} parent=0 // pred_check
    %p140 = pneg %p15
  $region19: #{forward.19} parent=0 // pred_check_branch
    %142 = sbr.rel (%p140) target = $region21
  $region20: #{forward.19} parent=0 // pred_region
    %v143 = vld [vmem:[#allocation2] sm:$0xff]
    %v144 = vld [vmem:[#allocation2 + $0x8] sm:$0xff]
    %v145 = vld [vmem:[%s2] sm:$0x1]
    %v147 = vlaneseq
    %v148 = vshrl.u32 %v147, 7
    %v149 = vsub.s32 0, %v148
    %v150 = vrot.slane %v145, %v149
    %v152 = vadd.f32 %v143, %v150
    %v153 = vadd.f32 %v144, %v150
    %v154 = vpack.c.bf16 %v153, %v152
    %v156 = vunpack.c.l.b16 %v154
    %v157 = vunpack.c.h.b16 %v154
    %v158 = vpack.c.b16 %v156, %v156
    %v159 = vpack.c.b16 %v157, %v157
    %162 = vst [vmem:[%s3] sm:$0xf] %v158
    %163 = vst [vmem:[%s3 + $0x4] sm:$0xf] %v159
  $region21: #{forward.19} parent=0 // pred_fallthru
    _
  // Predicated region
  $region22: #{forward.19} parent=0 // pred_check
    _
  $region23: #{forward.19} parent=0 // pred_check_branch
    %165 = sbr.rel (0) target = $region25
  $region24: #{forward.19} parent=0 // pred_region
    _
  $region25: #{forward.19} parent=0 // pred_fallthru
    _
  // Predicated region
  $region26: #{forward.19} parent=0 // pred_check
    _
  $region27: #{forward.19} parent=0 // pred_check_branch
    %167 = sbr.rel (0) target = $region29
  $region28: #{forward.19} parent=0 // pred_region
    _
  $region29: #{forward.19} parent=0 // pred_fallthru
    _

// kernel: forward.24
$region0: #{forward.24}
  #allocation0 [shape = 'u32[]', space=smem, size = 0x4, offset = 0x4, fixed_abs, tag = 'smem constant byte address 0x4 - core index']
  #allocation1 [shape = 'u32[144,128]{1,0:T(1,128)}', space=vmem, size = 0x12000, scoped, tag = 'internal scratch']
  #allocation2 [shape = 'f32[16,128]{1,0:T(8,128)}', space=vmem, size = 0x2000, scoped, tag = 'scratch operand']
  %s0 = inlined_call_operand.vmem [shape: bf16[16,384], index: 0, kind: input, shape index: {}]
  %s1 = inlined_call_operand.vmem [shape: bf16[384,128], index: 1, kind: input, shape index: {}]
  %s2 = inlined_call_operand.vmem [shape: f32[1,128], index: 2, kind: input, shape index: {}]
  %s3 = inlined_call_operand.vmem [shape: bf16[16,128], index: 3, kind: output, shape index: {}]
  %s4 = sld [smem:[#allocation0]]
  $region30: #{forward.24} parent=0
    _
  %s6 = ssub.s32 1, %s4
  %s7 = scalar_select 0, %s6, %s4
  // Predicated region
  $region2: #{forward.24} parent=0 // pred_check
    _
  $region3: #{forward.24} parent=0 // pred_check_branch
    %9 = sbr.rel (0) target = $region5
  $region4: #{forward.24} parent=0 // pred_region
    _
  $region5: #{forward.24} parent=0 // pred_fallthru
    _
  // Predicated region
  $region6: #{forward.24} parent=0 // pred_check
    _
  $region7: #{forward.24} parent=0 // pred_check_branch
    %11 = sbr.rel (0) target = $region9
  $region8: #{forward.24} parent=0 // pred_region
    _
  $region9: #{forward.24} parent=0 // pred_fallthru
    _
  // Predicated region
  $region10: #{forward.24} parent=0 // pred_check
    _
  $region11: #{forward.24} parent=0 // pred_check_branch
    %13 = sbr.rel (0) target = $region13
  $region12: #{forward.24} parent=0 // pred_region
    _
  $region13: #{forward.24} parent=0 // pred_fallthru
    _
  %p15 = scmp.eq.s32.totalorder 0, 0
  // Predicated region
  $region14: #{forward.24} parent=0 // pred_check
    %p16 = pneg %p15
  $region15: #{forward.24} parent=0 // pred_check_branch
    %18 = sbr.rel (%p16) target = $region17
  $region16: #{forward.24} parent=0 // pred_region
    %19 = vst [vmem:[#allocation2] sm:$0xff] 0.0
    %20 = vst [vmem:[#allocation2 + $0x8] sm:$0xff] 0.0
  $region17: #{forward.24} parent=0 // pred_fallthru
    _
  %v21 = vld [vmem:[#allocation2] sm:$0xff]
  %v22 = vld [vmem:[#allocation2 + $0x8] sm:$0xff]
  %v23 = vld [vmem:[%s0] sm:$0xff]
  %v24 = vld [vmem:[%s0 + $0x8] sm:$0xf]
  %v25 = vld [vmem:[%s0 + $0xc] sm:$0xff]
  %v26 = vld [vmem:[%s0 + $0x14] sm:$0xf]
  %v27 = vld [vmem:[%s1] sm:$0xf]
  %v28 = vld [vmem:[%s1 + $0x4] sm:$0xf]
  %v29 = vld [vmem:[%s1 + $0x8] sm:$0xf]
  %v30 = vld [vmem:[%s1 + $0xc] sm:$0xf]
  %v31 = vld [vmem:[%s1 + $0x10] sm:$0xf]
  %v32 = vld [vmem:[%s1 + $0x14] sm:$0xf]
  %v33 = vld [vmem:[%s1 + $0x18] sm:$0xf]
  %v34 = vld [vmem:[%s1 + $0x1c] sm:$0xf]
  %v35 = vld [vmem:[%s1 + $0x20] sm:$0xf]
  %v36 = vld [vmem:[%s1 + $0x24] sm:$0xf]
  %v37 = vld [vmem:[%s1 + $0x28] sm:$0xf]
  %v38 = vld [vmem:[%s1 + $0x2c] sm:$0xf]
  %v39 = vld [vmem:[%s1 + $0x30] sm:$0xf]
  %v40 = vld [vmem:[%s1 + $0x34] sm:$0xf]
  %v41 = vld [vmem:[%s1 + $0x38] sm:$0xf]
  %v42 = vld [vmem:[%s1 + $0x3c] sm:$0xf]
  %v43 = vld [vmem:[%s1 + $0x40] sm:$0xf]
  %v44 = vld [vmem:[%s1 + $0x44] sm:$0xf]
  %v45 = vld [vmem:[%s1 + $0x48] sm:$0xf]
  %v46 = vld [vmem:[%s1 + $0x4c] sm:$0xf]
  %v47 = vld [vmem:[%s1 + $0x50] sm:$0xf]
  %v48 = vld [vmem:[%s1 + $0x54] sm:$0xf]
  %v49 = vld [vmem:[%s1 + $0x58] sm:$0xf]
  %v50 = vld [vmem:[%s1 + $0x5c] sm:$0xf]
  %v51 = vld [vmem:[%s1 + $0x60] sm:$0xf]
  %v52 = vld [vmem:[%s1 + $0x64] sm:$0xf]
  %v53 = vld [vmem:[%s1 + $0x68] sm:$0xf]
  %v54 = vld [vmem:[%s1 + $0x6c] sm:$0xf]
  %v55 = vld [vmem:[%s1 + $0x70] sm:$0xf]
  %v56 = vld [vmem:[%s1 + $0x74] sm:$0xf]
  %v57 = vld [vmem:[%s1 + $0x78] sm:$0xf]
  %v58 = vld [vmem:[%s1 + $0x7c] sm:$0xf]
  %v59 = vld [vmem:[%s1 + $0x80] sm:$0xf]
  %v60 = vld [vmem:[%s1 + $0x84] sm:$0xf]
  %v61 = vld [vmem:[%s1 + $0x88] sm:$0xf]
  %v62 = vld [vmem:[%s1 + $0x8c] sm:$0xf]
  %v63 = vld [vmem:[%s1 + $0x90] sm:$0xf]
  %v64 = vld [vmem:[%s1 + $0x94] sm:$0xf]
  %v65 = vld [vmem:[%s1 + $0x98] sm:$0xf]
  %v66 = vld [vmem:[%s1 + $0x9c] sm:$0xf]
  %v67 = vld [vmem:[%s1 + $0xa0] sm:$0xf]
  %v68 = vld [vmem:[%s1 + $0xa4] sm:$0xf]
  %v69 = vld [vmem:[%s1 + $0xa8] sm:$0xf]
  %v70 = vld [vmem:[%s1 + $0xac] sm:$0xf]
  %v71 = vld [vmem:[%s1 + $0xb0] sm:$0xf]
  %v72 = vld [vmem:[%s1 + $0xb4] sm:$0xf]
  %v73 = vld [vmem:[%s1 + $0xb8] sm:$0xf]
  %v74 = vld [vmem:[%s1 + $0xbc] sm:$0xf]
  %v79 = vunpack.c.l.b16 %v23
  %v80 = vunpack.c.h.b16 %v23
  %v81 = vunpack.c.l.b16 %v24
  %v82 = vunpack.c.l.b16 %v25
  %v83 = vunpack.c.h.b16 %v25
  %v84 = vunpack.c.l.b16 %v26
  %v85 = vpack.c.b16 %v82, %v79
  %v86 = vpack.c.b16 %v83, %v80
  %v87 = vpack.c.b16 %v84, %v81
  %v139 = vunpack.c.l.b16 %v27
  %v140 = vunpack.c.l.b16 %v28
  %v141 = vunpack.c.l.b16 %v29
  %v142 = vunpack.c.l.b16 %v30
  %v143 = vunpack.c.l.b16 %v31
  %v144 = vunpack.c.l.b16 %v32
  %v145 = vunpack.c.l.b16 %v33
  %v146 = vunpack.c.l.b16 %v34
  %v147 = vunpack.c.l.b16 %v35
  %v148 = vunpack.c.l.b16 %v36
  %v149 = vunpack.c.l.b16 %v37
  %v150 = vunpack.c.l.b16 %v38
  %v151 = vunpack.c.l.b16 %v39
  %v152 = vunpack.c.l.b16 %v40
  %v153 = vunpack.c.l.b16 %v41
  %v154 = vunpack.c.l.b16 %v42
  %v155 = vunpack.c.l.b16 %v43
  %v156 = vunpack.c.l.b16 %v44
  %v157 = vunpack.c.l.b16 %v45
  %v158 = vunpack.c.l.b16 %v46
  %v159 = vunpack.c.l.b16 %v47
  %v160 = vunpack.c.l.b16 %v48
  %v161 = vunpack.c.l.b16 %v49
  %v162 = vunpack.c.l.b16 %v50
  %v163 = vunpack.c.l.b16 %v51
  %v164 = vunpack.c.l.b16 %v52
  %v165 = vunpack.c.l.b16 %v53
  %v166 = vunpack.c.l.b16 %v54
  %v167 = vunpack.c.l.b16 %v55
  %v168 = vunpack.c.l.b16 %v56
  %v169 = vunpack.c.l.b16 %v57
  %v170 = vunpack.c.l.b16 %v58
  %v171 = vunpack.c.l.b16 %v59
  %v172 = vunpack.c.l.b16 %v60
  %v173 = vunpack.c.l.b16 %v61
  %v174 = vunpack.c.l.b16 %v62
  %v175 = vunpack.c.l.b16 %v63
  %v176 = vunpack.c.l.b16 %v64
  %v177 = vunpack.c.l.b16 %v65
  %v178 = vunpack.c.l.b16 %v66
  %v179 = vunpack.c.l.b16 %v67
  %v180 = vunpack.c.l.b16 %v68
  %v181 = vunpack.c.l.b16 %v69
  %v182 = vunpack.c.l.b16 %v70
  %v183 = vunpack.c.l.b16 %v71
  %v184 = vunpack.c.l.b16 %v72
  %v185 = vunpack.c.l.b16 %v73
  %v186 = vunpack.c.l.b16 %v74
  %v187 = vpack.c.b16 %v140, %v139
  %v188 = vpack.c.b16 %v142, %v141
  %v189 = vpack.c.b16 %v144, %v143
  %v190 = vpack.c.b16 %v146, %v145
  %v191 = vpack.c.b16 %v148, %v147
  %v192 = vpack.c.b16 %v150, %v149
  %v193 = vpack.c.b16 %v152, %v151
  %v194 = vpack.c.b16 %v154, %v153
  %v195 = vpack.c.b16 %v156, %v155
  %v196 = vpack.c.b16 %v158, %v157
  %v197 = vpack.c.b16 %v160, %v159
  %v198 = vpack.c.b16 %v162, %v161
  %v199 = vpack.c.b16 %v164, %v163
  %v200 = vpack.c.b16 %v166, %v165
  %v201 = vpack.c.b16 %v168, %v167
  %v202 = vpack.c.b16 %v170, %v169
  %v203 = vpack.c.b16 %v172, %v171
  %v204 = vpack.c.b16 %v174, %v173
  %v205 = vpack.c.b16 %v176, %v175
  %v206 = vpack.c.b16 %v178, %v177
  %v207 = vpack.c.b16 %v180, %v179
  %v208 = vpack.c.b16 %v182, %v181
  %v209 = vpack.c.b16 %v184, %v183
  %v210 = vpack.c.b16 %v186, %v185
  %235 = vmatprep.subr.bf16.mxu0 0
  %236 = vmatpush1.bf16.msra.mxu0 %v187
  %237 = vmatprep.subr.bf16.mxu0 0
  %238 = vmatpush1.bf16.msra.mxu0 %v188
  %239 = vmatprep.subr.bf16.mxu0 0
  %240 = vmatpush1.bf16.msra.mxu0 %v189
  %241 = vmatprep.subr.bf16.mxu0 0
  %242 = vmatpush1.bf16.msra.mxu0 %v190
  %243 = vmatprep.subr.bf16.mxu0 0
  %244 = vmatpush1.bf16.msra.mxu0 %v191
  %245 = vmatprep.subr.bf16.mxu0 0
  %246 = vmatpush1.bf16.msra.mxu0 %v192
  %247 = vmatprep.subr.bf16.mxu0 0
  %248 = vmatpush1.bf16.msra.mxu0 %v193
  %249 = vmatprep.subr.bf16.mxu0 0
  %250 = vmatpush1.bf16.msra.mxu0 %v194
  %251 = vmatprep.subr.bf16.mxu0 0
  %252 = vmatpush1.bf16.msra.mxu0 %v195
  %253 = vmatprep.subr.bf16.mxu0 0
  %254 = vmatpush1.bf16.msra.mxu0 %v196
  %255 = vmatprep.subr.bf16.mxu0 0
  %256 = vmatpush1.bf16.msra.mxu0 %v197
  %257 = vmatprep.subr.bf16.mxu0 0
  %258 = vmatpush1.bf16.msra.mxu0 %v198
  %259 = vmatprep.subr.bf16.mxu0 0
  %260 = vmatpush1.bf16.msra.mxu0 %v199
  %261 = vmatprep.subr.bf16.mxu0 0
  %262 = vmatpush1.bf16.msra.mxu0 %v200
  %263 = vmatprep.subr.bf16.mxu0 0
  %264 = vmatpush1.bf16.msra.mxu0 %v201
  %265 = vmatprep.subr.bf16.mxu0 0
  %266 = vmatpush1.bf16.msra.mxu0 %v202
  %267 = vmatprep.mubr.bf16.mxu0 %v86
  %268 = vmatmul.mubr.bf16.gmra.mrb[0].mxu0 %v85
  %v269 = vpop.f32.mrb[0].mxu0
  %v270 = vadd.f32 0.0, %v269
  %v271 = vpop.f32.mrb[0].mxu0
  %v272 = vpop.f32.mrb[0].mxu0
  %v273 = vadd.f32 0.0, %v272
  %v274 = vpop.f32.mrb[0].mxu0
  %275 = vdwg.mxu0
  %276 = vmatprep.subr.bf16.mxu0 0
  %277 = vmatpush1.bf16.msra.mxu0 %v203
  %278 = vmatprep.subr.bf16.mxu0 0
  %279 = vmatpush1.bf16.msra.mxu0 %v204
  %280 = vmatprep.subr.bf16.mxu0 0
  %281 = vmatpush1.bf16.msra.mxu0 %v205
  %282 = vmatprep.subr.bf16.mxu0 0
  %283 = vmatpush1.bf16.msra.mxu0 %v206
  %284 = vmatprep.subr.bf16.mxu0 0
  %285 = vmatpush1.bf16.msra.mxu0 %v207
  %286 = vmatprep.subr.bf16.mxu0 0
  %287 = vmatpush1.bf16.msra.mxu0 %v208
  %288 = vmatprep.subr.bf16.mxu0 0
  %289 = vmatpush1.bf16.msra.mxu0 %v209
  %290 = vmatprep.subr.bf16.mxu0 0
  %291 = vmatpush1.bf16.msra.mxu0 %v210
  %292 = vmatprep.subr.bf16.mxu0 0
  %293 = vmatpush1.bf16.msra.mxu0 0
  %294 = vmatprep.subr.bf16.mxu0 0
  %295 = vmatpush1.bf16.msra.mxu0 0
  %296 = vmatprep.subr.bf16.mxu0 0
  %297 = vmatpush1.bf16.msra.mxu0 0
  %298 = vmatprep.subr.bf16.mxu0 0
  %299 = vmatpush1.bf16.msra.mxu0 0
  %300 = vmatprep.subr.bf16.mxu0 0
  %301 = vmatpush1.bf16.msra.mxu0 0
  %302 = vmatprep.subr.bf16.mxu0 0
  %303 = vmatpush1.bf16.msra.mxu0 0
  %304 = vmatprep.subr.bf16.mxu0 0
  %305 = vmatpush1.bf16.msra.mxu0 0
  %306 = vmatprep.subr.bf16.mxu0 0
  %307 = vmatpush1.bf16.msra.mxu0 0
  %308 = vmatprep.mubr.bf16.mxu0 0
  %309 = vmatmul.mubr.bf16.gmra.mrb[0].mxu0 %v87
  %v310 = vpop.f32.mrb[0].mxu0
  %v311 = vadd.f32 %v270, %v310
  %v312 = vpop.f32.mrb[0].mxu0
  %v313 = vpop.f32.mrb[0].mxu0
  %v314 = vadd.f32 %v273, %v313
  %v315 = vpop.f32.mrb[0].mxu0
  %316 = vdwg.mxu0
  %v317 = vadd.f32 %v21, %v311
  %v318 = vadd.f32 %v22, %v314
  %319 = vst [vmem:[#allocation2] sm:$0xff] %v317
  %320 = vst [vmem:[#allocation2 + $0x8] sm:$0xff] %v318
  // Predicated region
  $region18: #{forward.24} parent=0 // pred_check
    %p321 = pneg %p15
  $region19: #{forward.24} parent=0 // pred_check_branch
    %323 = sbr.rel (%p321) target = $region21
  $region20: #{forward.24} parent=0 // pred_region
    %v324 = vld [vmem:[#allocation2] sm:$0xff]
    %v325 = vld [vmem:[#allocation2 + $0x8] sm:$0xff]
    %v326 = vld [vmem:[%s2] sm:$0x1]
    %v328 = vlaneseq
    %v329 = vshrl.u32 %v328, 7
    %v330 = vsub.s32 0, %v329
    %v331 = vrot.slane %v326, %v330
    %v333 = vadd.f32 %v324, %v331
    %v334 = vadd.f32 %v325, %v331
    %v335 = vpack.c.bf16 %v334, %v333
    %v337 = vunpack.c.l.b16 %v335
    %v338 = vunpack.c.h.b16 %v335
    %v339 = vpack.c.b16 %v337, %v337
    %v340 = vpack.c.b16 %v338, %v338
    %343 = vst [vmem:[%s3] sm:$0xf] %v339
    %344 = vst [vmem:[%s3 + $0x4] sm:$0xf] %v340
  $region21: #{forward.24} parent=0 // pred_fallthru
    _
  // Predicated region
  $region22: #{forward.24} parent=0 // pred_check
    _
  $region23: #{forward.24} parent=0 // pred_check_branch
    %346 = sbr.rel (0) target = $region25
  $region24: #{forward.24} parent=0 // pred_region
    _
  $region25: #{forward.24} parent=0 // pred_fallthru
    _
  // Predicated region
  $region26: #{forward.24} parent=0 // pred_check
    _
  $region27: #{forward.24} parent=0 // pred_check_branch
    %348 = sbr.rel (0) target = $region29
  $region28: #{forward.24} parent=0 // pred_region
    _
  $region29: #{forward.24} parent=0 // pred_fallthru
    _

// kernel: forward.23
$region0: #{forward.23}
  #allocation0 [shape = 'u32[]', space=smem, size = 0x4, offset = 0x4, fixed_abs, tag = 'smem constant byte address 0x4 - core index']
  #allocation1 [shape = 'u32[144,128]{1,0:T(1,128)}', space=vmem, size = 0x12000, scoped, tag = 'internal scratch']
  #allocation2 [shape = 'f32[32,128]{1,0:T(8,128)}', space=vmem, size = 0x4000, scoped, tag = 'scratch operand']
  %s0 = inlined_call_operand.vmem [shape: bf16[32,384], index: 0, kind: input, shape index: {}]
  %s1 = inlined_call_operand.vmem [shape: bf16[384,128], index: 1, kind: input, shape index: {}]
  %s2 = inlined_call_operand.vmem [shape: f32[1,128], index: 2, kind: input, shape index: {}]
  %s3 = inlined_call_operand.vmem [shape: bf16[32,128], index: 3, kind: output, shape index: {}]
  %s4 = sld [smem:[#allocation0]]
  $region30: #{forward.23} parent=0
    _
  %s6 = ssub.s32 1, %s4
  %s7 = scalar_select 0, %s6, %s4
  // Predicated region
  $region2: #{forward.23} parent=0 // pred_check
    _
  $region3: #{forward.23} parent=0 // pred_check_branch
    %9 = sbr.rel (0) target = $region5
  $region4: #{forward.23} parent=0 // pred_region
    _
  $region5: #{forward.23} parent=0 // pred_fallthru
    _
  // Predicated region
  $region6: #{forward.23} parent=0 // pred_check
    _
  $region7: #{forward.23} parent=0 // pred_check_branch
    %11 = sbr.rel (0) target = $region9
  $region8: #{forward.23} parent=0 // pred_region
    _
  $region9: #{forward.23} parent=0 // pred_fallthru
    _
  // Predicated region
  $region10: #{forward.23} parent=0 // pred_check
    _
  $region11: #{forward.23} parent=0 // pred_check_branch
    %13 = sbr.rel (0) target = $region13
  $region12: #{forward.23} parent=0 // pred_region
    _
  $region13: #{forward.23} parent=0 // pred_fallthru
    _
  %p15 = scmp.eq.s32.totalorder 0, 0
  // Predicated region
  $region14: #{forward.23} parent=0 // pred_check
    %p16 = pneg %p15
  $region15: #{forward.23} parent=0 // pred_check_branch
    %18 = sbr.rel (%p16) target = $region17
  $region16: #{forward.23} parent=0 // pred_region
    %19 = vst [vmem:[#allocation2] sm:$0xff] 0.0
    %20 = vst [vmem:[#allocation2 + $0x8] sm:$0xff] 0.0
    %21 = vst [vmem:[#allocation2 + $0x10] sm:$0xff] 0.0
    %22 = vst [vmem:[#allocation2 + $0x18] sm:$0xff] 0.0
  $region17: #{forward.23} parent=0 // pred_fallthru
    _
  %v23 = vld [vmem:[#allocation2] sm:$0xff]
  %v24 = vld [vmem:[#allocation2 + $0x8] sm:$0xff]
  %v25 = vld [vmem:[#allocation2 + $0x10] sm:$0xff]
  %v26 = vld [vmem:[#allocation2 + $0x18] sm:$0xff]
  %v27 = vld [vmem:[%s0] sm:$0xff]
  %v28 = vld [vmem:[%s0 + $0x8] sm:$0xf]
  %v29 = vld [vmem:[%s0 + $0xc] sm:$0xff]
  %v30 = vld [vmem:[%s0 + $0x14] sm:$0xf]
  %v31 = vld [vmem:[%s0 + $0x18] sm:$0xff]
  %v32 = vld [vmem:[%s0 + $0x20] sm:$0xf]
  %v33 = vld [vmem:[%s0 + $0x24] sm:$0xff]
  %v34 = vld [vmem:[%s0 + $0x2c] sm:$0xf]
  %v35 = vld [vmem:[%s1] sm:$0xf]
  %v36 = vld [vmem:[%s1 + $0x4] sm:$0xf]
  %v37 = vld [vmem:[%s1 + $0x8] sm:$0xf]
  %v38 = vld [vmem:[%s1 + $0xc] sm:$0xf]
  %v39 = vld [vmem:[%s1 + $0x10] sm:$0xf]
  %v40 = vld [vmem:[%s1 + $0x14] sm:$0xf]
  %v41 = vld [vmem:[%s1 + $0x18] sm:$0xf]
  %v42 = vld [vmem:[%s1 + $0x1c] sm:$0xf]
  %v43 = vld [vmem:[%s1 + $0x20] sm:$0xf]
  %v44 = vld [vmem:[%s1 + $0x24] sm:$0xf]
  %v45 = vld [vmem:[%s1 + $0x28] sm:$0xf]
  %v46 = vld [vmem:[%s1 + $0x2c] sm:$0xf]
  %v47 = vld [vmem:[%s1 + $0x30] sm:$0xf]
  %v48 = vld [vmem:[%s1 + $0x34] sm:$0xf]
  %v49 = vld [vmem:[%s1 + $0x38] sm:$0xf]
  %v50 = vld [vmem:[%s1 + $0x3c] sm:$0xf]
  %v51 = vld [vmem:[%s1 + $0x40] sm:$0xf]
  %v52 = vld [vmem:[%s1 + $0x44] sm:$0xf]
  %v53 = vld [vmem:[%s1 + $0x48] sm:$0xf]
  %v54 = vld [vmem:[%s1 + $0x4c] sm:$0xf]
  %v55 = vld [vmem:[%s1 + $0x50] sm:$0xf]
  %v56 = vld [vmem:[%s1 + $0x54] sm:$0xf]
  %v57 = vld [vmem:[%s1 + $0x58] sm:$0xf]
  %v58 = vld [vmem:[%s1 + $0x5c] sm:$0xf]
  %v59 = vld [vmem:[%s1 + $0x60] sm:$0xf]
  %v60 = vld [vmem:[%s1 + $0x64] sm:$0xf]
  %v61 = vld [vmem:[%s1 + $0x68] sm:$0xf]
  %v62 = vld [vmem:[%s1 + $0x6c] sm:$0xf]
  %v63 = vld [vmem:[%s1 + $0x70] sm:$0xf]
  %v64 = vld [vmem:[%s1 + $0x74] sm:$0xf]
  %v65 = vld [vmem:[%s1 + $0x78] sm:$0xf]
  %v66 = vld [vmem:[%s1 + $0x7c] sm:$0xf]
  %v67 = vld [vmem:[%s1 + $0x80] sm:$0xf]
  %v68 = vld [vmem:[%s1 + $0x84] sm:$0xf]
  %v69 = vld [vmem:[%s1 + $0x88] sm:$0xf]
  %v70 = vld [vmem:[%s1 + $0x8c] sm:$0xf]
  %v71 = vld [vmem:[%s1 + $0x90] sm:$0xf]
  %v72 = vld [vmem:[%s1 + $0x94] sm:$0xf]
  %v73 = vld [vmem:[%s1 + $0x98] sm:$0xf]
  %v74 = vld [vmem:[%s1 + $0x9c] sm:$0xf]
  %v75 = vld [vmem:[%s1 + $0xa0] sm:$0xf]
  %v76 = vld [vmem:[%s1 + $0xa4] sm:$0xf]
  %v77 = vld [vmem:[%s1 + $0xa8] sm:$0xf]
  %v78 = vld [vmem:[%s1 + $0xac] sm:$0xf]
  %v79 = vld [vmem:[%s1 + $0xb0] sm:$0xf]
  %v80 = vld [vmem:[%s1 + $0xb4] sm:$0xf]
  %v81 = vld [vmem:[%s1 + $0xb8] sm:$0xf]
  %v82 = vld [vmem:[%s1 + $0xbc] sm:$0xf]
  %v91 = vunpack.c.l.b16 %v27
  %v92 = vunpack.c.h.b16 %v27
  %v93 = vunpack.c.l.b16 %v28
  %v94 = vunpack.c.l.b16 %v29
  %v95 = vunpack.c.h.b16 %v29
  %v96 = vunpack.c.l.b16 %v30
  %v97 = vunpack.c.l.b16 %v31
  %v98 = vunpack.c.h.b16 %v31
  %v99 = vunpack.c.l.b16 %v32
  %v100 = vunpack.c.l.b16 %v33
  %v101 = vunpack.c.h.b16 %v33
  %v102 = vunpack.c.l.b16 %v34
  %v103 = vpack.c.b16 %v94, %v91
  %v104 = vpack.c.b16 %v95, %v92
  %v105 = vpack.c.b16 %v96, %v93
  %v106 = vpack.c.b16 %v100, %v97
  %v107 = vpack.c.b16 %v101, %v98
  %v108 = vpack.c.b16 %v102, %v99
  %v163 = vunpack.c.l.b16 %v35
  %v164 = vunpack.c.l.b16 %v36
  %v165 = vunpack.c.l.b16 %v37
  %v166 = vunpack.c.l.b16 %v38
  %v167 = vunpack.c.l.b16 %v39
  %v168 = vunpack.c.l.b16 %v40
  %v169 = vunpack.c.l.b16 %v41
  %v170 = vunpack.c.l.b16 %v42
  %v171 = vunpack.c.l.b16 %v43
  %v172 = vunpack.c.l.b16 %v44
  %v173 = vunpack.c.l.b16 %v45
  %v174 = vunpack.c.l.b16 %v46
  %v175 = vunpack.c.l.b16 %v47
  %v176 = vunpack.c.l.b16 %v48
  %v177 = vunpack.c.l.b16 %v49
  %v178 = vunpack.c.l.b16 %v50
  %v179 = vunpack.c.l.b16 %v51
  %v180 = vunpack.c.l.b16 %v52
  %v181 = vunpack.c.l.b16 %v53
  %v182 = vunpack.c.l.b16 %v54
  %v183 = vunpack.c.l.b16 %v55
  %v184 = vunpack.c.l.b16 %v56
  %v185 = vunpack.c.l.b16 %v57
  %v186 = vunpack.c.l.b16 %v58
  %v187 = vunpack.c.l.b16 %v59
  %v188 = vunpack.c.l.b16 %v60
  %v189 = vunpack.c.l.b16 %v61
  %v190 = vunpack.c.l.b16 %v62
  %v191 = vunpack.c.l.b16 %v63
  %v192 = vunpack.c.l.b16 %v64
  %v193 = vunpack.c.l.b16 %v65
  %v194 = vunpack.c.l.b16 %v66
  %v195 = vunpack.c.l.b16 %v67
  %v196 = vunpack.c.l.b16 %v68
  %v197 = vunpack.c.l.b16 %v69
  %v198 = vunpack.c.l.b16 %v70
  %v199 = vunpack.c.l.b16 %v71
  %v200 = vunpack.c.l.b16 %v72
  %v201 = vunpack.c.l.b16 %v73
  %v202 = vunpack.c.l.b16 %v74
  %v203 = vunpack.c.l.b16 %v75
  %v204 = vunpack.c.l.b16 %v76
  %v205 = vunpack.c.l.b16 %v77
  %v206 = vunpack.c.l.b16 %v78
  %v207 = vunpack.c.l.b16 %v79
  %v208 = vunpack.c.l.b16 %v80
  %v209 = vunpack.c.l.b16 %v81
  %v210 = vunpack.c.l.b16 %v82
  %v211 = vpack.c.b16 %v164, %v163
  %v212 = vpack.c.b16 %v166, %v165
  %v213 = vpack.c.b16 %v168, %v167
  %v214 = vpack.c.b16 %v170, %v169
  %v215 = vpack.c.b16 %v172, %v171
  %v216 = vpack.c.b16 %v174, %v173
  %v217 = vpack.c.b16 %v176, %v175
  %v218 = vpack.c.b16 %v178, %v177
  %v219 = vpack.c.b16 %v180, %v179
  %v220 = vpack.c.b16 %v182, %v181
  %v221 = vpack.c.b16 %v184, %v183
  %v222 = vpack.c.b16 %v186, %v185
  %v223 = vpack.c.b16 %v188, %v187
  %v224 = vpack.c.b16 %v190, %v189
  %v225 = vpack.c.b16 %v192, %v191
  %v226 = vpack.c.b16 %v194, %v193
  %v227 = vpack.c.b16 %v196, %v195
  %v228 = vpack.c.b16 %v198, %v197
  %v229 = vpack.c.b16 %v200, %v199
  %v230 = vpack.c.b16 %v202, %v201
  %v231 = vpack.c.b16 %v204, %v203
  %v232 = vpack.c.b16 %v206, %v205
  %v233 = vpack.c.b16 %v208, %v207
  %v234 = vpack.c.b16 %v210, %v209
  %259 = vmatprep.subr.bf16.mxu0 0
  %260 = vmatpush1.bf16.msra.mxu0 %v211
  %261 = vmatprep.subr.bf16.mxu0 0
  %262 = vmatpush1.bf16.msra.mxu0 %v212
  %263 = vmatprep.subr.bf16.mxu0 0
  %264 = vmatpush1.bf16.msra.mxu0 %v213
  %265 = vmatprep.subr.bf16.mxu0 0
  %266 = vmatpush1.bf16.msra.mxu0 %v214
  %267 = vmatprep.subr.bf16.mxu0 0
  %268 = vmatpush1.bf16.msra.mxu0 %v215
  %269 = vmatprep.subr.bf16.mxu0 0
  %270 = vmatpush1.bf16.msra.mxu0 %v216
  %271 = vmatprep.subr.bf16.mxu0 0
  %272 = vmatpush1.bf16.msra.mxu0 %v217
  %273 = vmatprep.subr.bf16.mxu0 0
  %274 = vmatpush1.bf16.msra.mxu0 %v218
  %275 = vmatprep.subr.bf16.mxu0 0
  %276 = vmatpush1.bf16.msra.mxu0 %v219
  %277 = vmatprep.subr.bf16.mxu0 0
  %278 = vmatpush1.bf16.msra.mxu0 %v220
  %279 = vmatprep.subr.bf16.mxu0 0
  %280 = vmatpush1.bf16.msra.mxu0 %v221
  %281 = vmatprep.subr.bf16.mxu0 0
  %282 = vmatpush1.bf16.msra.mxu0 %v222
  %283 = vmatprep.subr.bf16.mxu0 0
  %284 = vmatpush1.bf16.msra.mxu0 %v223
  %285 = vmatprep.subr.bf16.mxu0 0
  %286 = vmatpush1.bf16.msra.mxu0 %v224
  %287 = vmatprep.subr.bf16.mxu0 0
  %288 = vmatpush1.bf16.msra.mxu0 %v225
  %289 = vmatprep.subr.bf16.mxu0 0
  %290 = vmatpush1.bf16.msra.mxu0 %v226
  %291 = vmatprep.mubr.bf16.mxu0 %v104
  %292 = vmatmul.mubr.bf16.gmra.mrb[0].mxu0 %v103
  %v293 = vpop.f32.mrb[0].mxu0
  %v294 = vadd.f32 0.0, %v293
  %v295 = vpop.f32.mrb[0].mxu0
  %v296 = vpop.f32.mrb[0].mxu0
  %v297 = vadd.f32 0.0, %v296
  %v298 = vpop.f32.mrb[0].mxu0
  %299 = vmatprep.mubr.bf16.mxu0 %v107
  %300 = vmatmul.mubr.bf16.gmra.mrb[0].mxu0 %v106
  %v301 = vpop.f32.mrb[0].mxu0
  %v302 = vadd.f32 0.0, %v301
  %v303 = vpop.f32.mrb[0].mxu0
  %v304 = vpop.f32.mrb[0].mxu0
  %v305 = vadd.f32 0.0, %v304
  %v306 = vpop.f32.mrb[0].mxu0
  %307 = vdwg.mxu0
  %308 = vmatprep.subr.bf16.mxu0 0
  %309 = vmatpush1.bf16.msra.mxu0 %v227
  %310 = vmatprep.subr.bf16.mxu0 0
  %311 = vmatpush1.bf16.msra.mxu0 %v228
  %312 = vmatprep.subr.bf16.mxu0 0
  %313 = vmatpush1.bf16.msra.mxu0 %v229
  %314 = vmatprep.subr.bf16.mxu0 0
  %315 = vmatpush1.bf16.msra.mxu0 %v230
  %316 = vmatprep.subr.bf16.mxu0 0
  %317 = vmatpush1.bf16.msra.mxu0 %v231
  %318 = vmatprep.subr.bf16.mxu0 0
  %319 = vmatpush1.bf16.msra.mxu0 %v232
  %320 = vmatprep.subr.bf16.mxu0 0
  %321 = vmatpush1.bf16.msra.mxu0 %v233
  %322 = vmatprep.subr.bf16.mxu0 0
  %323 = vmatpush1.bf16.msra.mxu0 %v234
  %324 = vmatprep.subr.bf16.mxu0 0
  %325 = vmatpush1.bf16.msra.mxu0 0
  %326 = vmatprep.subr.bf16.mxu0 0
  %327 = vmatpush1.bf16.msra.mxu0 0
  %328 = vmatprep.subr.bf16.mxu0 0
  %329 = vmatpush1.bf16.msra.mxu0 0
  %330 = vmatprep.subr.bf16.mxu0 0
  %331 = vmatpush1.bf16.msra.mxu0 0
  %332 = vmatprep.subr.bf16.mxu0 0
  %333 = vmatpush1.bf16.msra.mxu0 0
  %334 = vmatprep.subr.bf16.mxu0 0
  %335 = vmatpush1.bf16.msra.mxu0 0
  %336 = vmatprep.subr.bf16.mxu0 0
  %337 = vmatpush1.bf16.msra.mxu0 0
  %338 = vmatprep.subr.bf16.mxu0 0
  %339 = vmatpush1.bf16.msra.mxu0 0
  %340 = vmatprep.mubr.bf16.mxu0 0
  %341 = vmatmul.mubr.bf16.gmra.mrb[0].mxu0 %v105
  %v342 = vpop.f32.mrb[0].mxu0
  %v343 = vadd.f32 %v294, %v342
  %v344 = vpop.f32.mrb[0].mxu0
  %v345 = vpop.f32.mrb[0].mxu0
  %v346 = vadd.f32 %v297, %v345
  %v347 = vpop.f32.mrb[0].mxu0
  %348 = vmatprep.mubr.bf16.mxu0 0
  %349 = vmatmul.mubr.bf16.gmra.mrb[0].mxu0 %v108
  %v350 = vpop.f32.mrb[0].mxu0
  %v351 = vadd.f32 %v302, %v350
  %v352 = vpop.f32.mrb[0].mxu0
  %v353 = vpop.f32.mrb[0].mxu0
  %v354 = vadd.f32 %v305, %v353
  %v355 = vpop.f32.mrb[0].mxu0
  %356 = vdwg.mxu0
  %v357 = vadd.f32 %v23, %v343
  %v358 = vadd.f32 %v24, %v346
  %v359 = vadd.f32 %v25, %v351
  %v360 = vadd.f32 %v26, %v354
  %361 = vst [vmem:[#allocation2] sm:$0xff] %v357
  %362 = vst [vmem:[#allocation2 + $0x8] sm:$0xff] %v358
  %363 = vst [vmem:[#allocation2 + $0x10] sm:$0xff] %v359
  %364 = vst [vmem:[#allocation2 + $0x18] sm:$0xff] %v360
  // Predicated region
  $region18: #{forward.23} parent=0 // pred_check
    %p365 = pneg %p15
  $region19: #{forward.23} parent=0 // pred_check_branch
    %367 = sbr.rel (%p365) target = $region21
  $region20: #{forward.23} parent=0 // pred_region
    %v368 = vld [vmem:[#allocation2] sm:$0xff]
    %v369 = vld [vmem:[#allocation2 + $0x8] sm:$0xff]
    %v370 = vld [vmem:[#allocation2 + $0x10] sm:$0xff]
    %v371 = vld [vmem:[#allocation2 + $0x18] sm:$0xff]
    %v372 = vld [vmem:[%s2] sm:$0x1]
    %v374 = vlaneseq
    %v375 = vshrl.u32 %v374, 7
    %v376 = vsub.s32 0, %v375
    %v377 = vrot.slane %v372, %v376
    %v379 = vadd.f32 %v368, %v377
    %v380 = vadd.f32 %v369, %v377
    %v381 = vadd.f32 %v370, %v377
    %v382 = vadd.f32 %v371, %v377
    %v383 = vpack.c.bf16 %v380, %v379
    %v384 = vpack.c.bf16 %v382, %v381
    %v387 = vunpack.c.l.b16 %v383
    %v388 = vunpack.c.h.b16 %v383
    %v389 = vunpack.c.l.b16 %v384
    %v390 = vunpack.c.h.b16 %v384
    %v391 = vpack.c.b16 %v387, %v387
    %v392 = vpack.c.b16 %v388, %v388
    %v393 = vpack.c.b16 %v389, %v389
    %v394 = vpack.c.b16 %v390, %v390
    %399 = vst [vmem:[%s3] sm:$0xf] %v391
    %400 = vst [vmem:[%s3 + $0x4] sm:$0xf] %v392
    %401 = vst [vmem:[%s3 + $0x8] sm:$0xf] %v393
    %402 = vst [vmem:[%s3 + $0xc] sm:$0xf] %v394
  $region21: #{forward.23} parent=0 // pred_fallthru
    _
  // Predicated region
  $region22: #{forward.23} parent=0 // pred_check
    _
  $region23: #{forward.23} parent=0 // pred_check_branch
    %404 = sbr.rel (0) target = $region25
  $region24: #{forward.23} parent=0 // pred_region
    _
  $region25: #{forward.23} parent=0 // pred_fallthru
    _
  // Predicated region
  $region26: #{forward.23} parent=0 // pred_check
    _
  $region27: #{forward.23} parent=0 // pred_check_branch
    %406 = sbr.rel (0) target = $region29
  $region28: #{forward.23} parent=0 // pred_region
    _
  $region29: #{forward.23} parent=0 // pred_fallthru
    _

// kernel: forward.22
$region0: #{forward.22}
  #allocation0 [shape = 'u32[]', space=smem, size = 0x4, offset = 0x4, fixed_abs, tag = 'smem constant byte address 0x4 - core index']
  #allocation1 [shape = 'u32[144,128]{1,0:T(1,128)}', space=vmem, size = 0x12000, scoped, tag = 'internal scratch']
  #allocation2 [shape = 'f32[128,128]{1,0:T(8,128)}', space=vmem, size = 0x10000, scoped, tag = 'scratch operand']
  %s0 = inlined_call_operand.vmem [shape: bf16[128,384], index: 0, kind: input, shape index: {}]
  %s1 = inlined_call_operand.vmem [shape: bf16[384,128], index: 1, kind: input, shape index: {}]
  %s2 = inlined_call_operand.vmem [shape: f32[1,128], index: 2, kind: input, shape index: {}]
  %s3 = inlined_call_operand.vmem [shape: bf16[128,128], index: 3, kind: output, shape index: {}]
  %s4 = sld [smem:[#allocation0]]
  $region30: #{forward.22} parent=0
    _
  %s6 = ssub.s32 1, %s4
  %s7 = scalar_select 0, %s6, %s4
  // Predicated region
  $region2: #{forward.22} parent=0 // pred_check
    _
  $region3: #{forward.22} parent=0 // pred_check_branch
    %9 = sbr.rel (0) target = $region5
  $region4: #{forward.22} parent=0 // pred_region
    _
  $region5: #{forward.22} parent=0 // pred_fallthru
    _
  // Predicated region
  $region6: #{forward.22} parent=0 // pred_check
    _
  $region7: #{forward.22} parent=0 // pred_check_branch
    %11 = sbr.rel (0) target = $region9
  $region8: #{forward.22} parent=0 // pred_region
    _
  $region9: #{forward.22} parent=0 // pred_fallthru
    _
  // Predicated region
  $region10: #{forward.22} parent=0 // pred_check
    _
  $region11: #{forward.22} parent=0 // pred_check_branch
    %13 = sbr.rel (0) target = $region13
  $region12: #{forward.22} parent=0 // pred_region
    _
  $region13: #{forward.22} parent=0 // pred_fallthru
    _
  %p15 = scmp.eq.s32.totalorder 0, 0
  // Predicated region
  $region14: #{forward.22} parent=0 // pred_check
    %p16 = pneg %p15
  $region15: #{forward.22} parent=0 // pred_check_branch
    %18 = sbr.rel (%p16) target = $region17
  $region16: #{forward.22} parent=0 // pred_region
    %19 = vst [vmem:[#allocation2] sm:$0xff] 0.0
    %20 = vst [vmem:[#allocation2 + $0x8] sm:$0xff] 0.0
    %21 = vst [vmem:[#allocation2 + $0x10] sm:$0xff] 0.0
    %22 = vst [vmem:[#allocation2 + $0x18] sm:$0xff] 0.0
    %23 = vst [vmem:[#allocation2 + $0x20] sm:$0xff] 0.0
    %24 = vst [vmem:[#allocation2 + $0x28] sm:$0xff] 0.0
    %25 = vst [vmem:[#allocation2 + $0x30] sm:$0xff] 0.0
    %26 = vst [vmem:[#allocation2 + $0x38] sm:$0xff] 0.0
    %27 = vst [vmem:[#allocation2 + $0x40] sm:$0xff] 0.0
    %28 = vst [vmem:[#allocation2 + $0x48] sm:$0xff] 0.0
    %29 = vst [vmem:[#allocation2 + $0x50] sm:$0xff] 0.0
    %30 = vst [vmem:[#allocation2 + $0x58] sm:$0xff] 0.0
    %31 = vst [vmem:[#allocation2 + $0x60] sm:$0xff] 0.0
    %32 = vst [vmem:[#allocation2 + $0x68] sm:$0xff] 0.0
    %33 = vst [vmem:[#allocation2 + $0x70] sm:$0xff] 0.0
    %34 = vst [vmem:[#allocation2 + $0x78] sm:$0xff] 0.0
  $region17: #{forward.22} parent=0 // pred_fallthru
    _
  %v35 = vld [vmem:[#allocation2] sm:$0xff]
  %v36 = vld [vmem:[#allocation2 + $0x8] sm:$0xff]
  %v37 = vld [vmem:[#allocation2 + $0x10] sm:$0xff]
  %v38 = vld [vmem:[#allocation2 + $0x18] sm:$0xff]
  %v39 = vld [vmem:[#allocation2 + $0x20] sm:$0xff]
  %v40 = vld [vmem:[#allocation2 + $0x28] sm:$0xff]
  %v41 = vld [vmem:[#allocation2 + $0x30] sm:$0xff]
  %v42 = vld [vmem:[#allocation2 + $0x38] sm:$0xff]
  %v43 = vld [vmem:[#allocation2 + $0x40] sm:$0xff]
  %v44 = vld [vmem:[#allocation2 + $0x48] sm:$0xff]
  %v45 = vld [vmem:[#allocation2 + $0x50] sm:$0xff]
  %v46 = vld [vmem:[#allocation2 + $0x58] sm:$0xff]
  %v47 = vld [vmem:[#allocation2 + $0x60] sm:$0xff]
  %v48 = vld [vmem:[#allocation2 + $0x68] sm:$0xff]
  %v49 = vld [vmem:[#allocation2 + $0x70] sm:$0xff]
  %v50 = vld [vmem:[#allocation2 + $0x78] sm:$0xff]
  %v51 = vld [vmem:[%s0] sm:$0xff]
  %v52 = vld [vmem:[%s0 + $0x8] sm:$0xf]
  %v53 = vld [vmem:[%s0 + $0xc] sm:$0xff]
  %v54 = vld [vmem:[%s0 + $0x14] sm:$0xf]
  %v55 = vld [vmem:[%s0 + $0x18] sm:$0xff]
  %v56 = vld [vmem:[%s0 + $0x20] sm:$0xf]
  %v57 = vld [vmem:[%s0 + $0x24] sm:$0xff]
  %v58 = vld [vmem:[%s0 + $0x2c] sm:$0xf]
  %v59 = vld [vmem:[%s0 + $0x30] sm:$0xff]
  %v60 = vld [vmem:[%s0 + $0x38] sm:$0xf]
  %v61 = vld [vmem:[%s0 + $0x3c] sm:$0xff]
  %v62 = vld [vmem:[%s0 + $0x44] sm:$0xf]
  %v63 = vld [vmem:[%s0 + $0x48] sm:$0xff]
  %v64 = vld [vmem:[%s0 + $0x50] sm:$0xf]
  %v65 = vld [vmem:[%s0 + $0x54] sm:$0xff]
  %v66 = vld [vmem:[%s0 + $0x5c] sm:$0xf]
  %v67 = vld [vmem:[%s0 + $0x60] sm:$0xff]
  %v68 = vld [vmem:[%s0 + $0x68] sm:$0xf]
  %v69 = vld [vmem:[%s0 + $0x6c] sm:$0xff]
  %v70 = vld [vmem:[%s0 + $0x74] sm:$0xf]
  %v71 = vld [vmem:[%s0 + $0x78] sm:$0xff]
  %v72 = vld [vmem:[%s0 + $0x80] sm:$0xf]
  %v73 = vld [vmem:[%s0 + $0x84] sm:$0xff]
  %v74 = vld [vmem:[%s0 + $0x8c] sm:$0xf]
  %v75 = vld [vmem:[%s0 + $0x90] sm:$0xff]
  %v76 = vld [vmem:[%s0 + $0x98] sm:$0xf]
  %v77 = vld [vmem:[%s0 + $0x9c] sm:$0xff]
  %v78 = vld [vmem:[%s0 + $0xa4] sm:$0xf]
  %v79 = vld [vmem:[%s0 + $0xa8] sm:$0xff]
  %v80 = vld [vmem:[%s0 + $0xb0] sm:$0xf]
  %v81 = vld [vmem:[%s0 + $0xb4] sm:$0xff]
  %v82 = vld [vmem:[%s0 + $0xbc] sm:$0xf]
  %v83 = vld [vmem:[%s1] sm:$0xf]
  %v84 = vld [vmem:[%s1 + $0x4] sm:$0xf]
  %v85 = vld [vmem:[%s1 + $0x8] sm:$0xf]
  %v86 = vld [vmem:[%s1 + $0xc] sm:$0xf]
  %v87 = vld [vmem:[%s1 + $0x10] sm:$0xf]
  %v88 = vld [vmem:[%s1 + $0x14] sm:$0xf]
  %v89 = vld [vmem:[%s1 + $0x18] sm:$0xf]
  %v90 = vld [vmem:[%s1 + $0x1c] sm:$0xf]
  %v91 = vld [vmem:[%s1 + $0x20] sm:$0xf]
  %v92 = vld [vmem:[%s1 + $0x24] sm:$0xf]
  %v93 = vld [vmem:[%s1 + $0x28] sm:$0xf]
  %v94 = vld [vmem:[%s1 + $0x2c] sm:$0xf]
  %v95 = vld [vmem:[%s1 + $0x30] sm:$0xf]
  %v96 = vld [vmem:[%s1 + $0x34] sm:$0xf]
  %v97 = vld [vmem:[%s1 + $0x38] sm:$0xf]
  %v98 = vld [vmem:[%s1 + $0x3c] sm:$0xf]
  %v99 = vld [vmem:[%s1 + $0x40] sm:$0xf]
  %v100 = vld [vmem:[%s1 + $0x44] sm:$0xf]
  %v101 = vld [vmem:[%s1 + $0x48] sm:$0xf]
  %v102 = vld [vmem:[%s1 + $0x4c] sm:$0xf]
  %v103 = vld [vmem:[%s1 + $0x50] sm:$0xf]
  %v104 = vld [vmem:[%s1 + $0x54] sm:$0xf]
  %v105 = vld [vmem:[%s1 + $0x58] sm:$0xf]
  %v106 = vld [vmem:[%s1 + $0x5c] sm:$0xf]
  %v107 = vld [vmem:[%s1 + $0x60] sm:$0xf]
  %v108 = vld [vmem:[%s1 + $0x64] sm:$0xf]
  %v109 = vld [vmem:[%s1 + $0x68] sm:$0xf]
  %v110 = vld [vmem:[%s1 + $0x6c] sm:$0xf]
  %v111 = vld [vmem:[%s1 + $0x70] sm:$0xf]
  %v112 = vld [vmem:[%s1 + $0x74] sm:$0xf]
  %v113 = vld [vmem:[%s1 + $0x78] sm:$0xf]
  %v114 = vld [vmem:[%s1 + $0x7c] sm:$0xf]
  %v115 = vld [vmem:[%s1 + $0x80] sm:$0xf]
  %v116 = vld [vmem:[%s1 + $0x84] sm:$0xf]
  %v117 = vld [vmem:[%s1 + $0x88] sm:$0xf]
  %v118 = vld [vmem:[%s1 + $0x8c] sm:$0xf]
  %v119 = vld [vmem:[%s1 + $0x90] sm:$0xf]
  %v120 = vld [vmem:[%s1 + $0x94] sm:$0xf]
  %v121 = vld [vmem:[%s1 + $0x98] sm:$0xf]
  %v122 = vld [vmem:[%s1 + $0x9c] sm:$0xf]
  %v123 = vld [vmem:[%s1 + $0xa0] sm:$0xf]
  %v124 = vld [vmem:[%s1 + $0xa4] sm:$0xf]
  %v125 = vld [vmem:[%s1 + $0xa8] sm:$0xf]
  %v126 = vld [vmem:[%s1 + $0xac] sm:$0xf]
  %v127 = vld [vmem:[%s1 + $0xb0] sm:$0xf]
  %v128 = vld [vmem:[%s1 + $0xb4] sm:$0xf]
  %v129 = vld [vmem:[%s1 + $0xb8] sm:$0xf]
  %v130 = vld [vmem:[%s1 + $0xbc] sm:$0xf]
  %v163 = vunpack.c.l.b16 %v51
  %v164 = vunpack.c.h.b16 %v51
  %v165 = vunpack.c.l.b16 %v52
  %v166 = vunpack.c.l.b16 %v53
  %v167 = vunpack.c.h.b16 %v53
  %v168 = vunpack.c.l.b16 %v54
  %v169 = vunpack.c.l.b16 %v55
  %v170 = vunpack.c.h.b16 %v55
  %v171 = vunpack.c.l.b16 %v56
  %v172 = vunpack.c.l.b16 %v57
  %v173 = vunpack.c.h.b16 %v57
  %v174 = vunpack.c.l.b16 %v58
  %v175 = vunpack.c.l.b16 %v59
  %v176 = vunpack.c.h.b16 %v59
  %v177 = vunpack.c.l.b16 %v60
  %v178 = vunpack.c.l.b16 %v61
  %v179 = vunpack.c.h.b16 %v61
  %v180 = vunpack.c.l.b16 %v62
  %v181 = vunpack.c.l.b16 %v63
  %v182 = vunpack.c.h.b16 %v63
  %v183 = vunpack.c.l.b16 %v64
  %v184 = vunpack.c.l.b16 %v65
  %v185 = vunpack.c.h.b16 %v65
  %v186 = vunpack.c.l.b16 %v66
  %v187 = vunpack.c.l.b16 %v67
  %v188 = vunpack.c.h.b16 %v67
  %v189 = vunpack.c.l.b16 %v68
  %v190 = vunpack.c.l.b16 %v69
  %v191 = vunpack.c.h.b16 %v69
  %v192 = vunpack.c.l.b16 %v70
  %v193 = vunpack.c.l.b16 %v71
  %v194 = vunpack.c.h.b16 %v71
  %v195 = vunpack.c.l.b16 %v72
  %v196 = vunpack.c.l.b16 %v73
  %v197 = vunpack.c.h.b16 %v73
  %v198 = vunpack.c.l.b16 %v74
  %v199 = vunpack.c.l.b16 %v75
  %v200 = vunpack.c.h.b16 %v75
  %v201 = vunpack.c.l.b16 %v76
  %v202 = vunpack.c.l.b16 %v77
  %v203 = vunpack.c.h.b16 %v77
  %v204 = vunpack.c.l.b16 %v78
  %v205 = vunpack.c.l.b16 %v79
  %v206 = vunpack.c.h.b16 %v79
  %v207 = vunpack.c.l.b16 %v80
  %v208 = vunpack.c.l.b16 %v81
  %v209 = vunpack.c.h.b16 %v81
  %v210 = vunpack.c.l.b16 %v82
  %v211 = vpack.c.b16 %v166, %v163
  %v212 = vpack.c.b16 %v167, %v164
  %v213 = vpack.c.b16 %v168, %v165
  %v214 = vpack.c.b16 %v172, %v169
  %v215 = vpack.c.b16 %v173, %v170
  %v216 = vpack.c.b16 %v174, %v171
  %v217 = vpack.c.b16 %v178, %v175
  %v218 = vpack.c.b16 %v179, %v176
  %v219 = vpack.c.b16 %v180, %v177
  %v220 = vpack.c.b16 %v184, %v181
  %v221 = vpack.c.b16 %v185, %v182
  %v222 = vpack.c.b16 %v186, %v183
  %v223 = vpack.c.b16 %v190, %v187
  %v224 = vpack.c.b16 %v191, %v188
  %v225 = vpack.c.b16 %v192, %v189
  %v226 = vpack.c.b16 %v196, %v193
  %v227 = vpack.c.b16 %v197, %v194
  %v228 = vpack.c.b16 %v198, %v195
  %v229 = vpack.c.b16 %v202, %v199
  %v230 = vpack.c.b16 %v203, %v200
  %v231 = vpack.c.b16 %v204, %v201
  %v232 = vpack.c.b16 %v208, %v205
  %v233 = vpack.c.b16 %v209, %v206
  %v234 = vpack.c.b16 %v210, %v207
  %v307 = vunpack.c.l.b16 %v83
  %v308 = vunpack.c.l.b16 %v84
  %v309 = vunpack.c.l.b16 %v85
  %v310 = vunpack.c.l.b16 %v86
  %v311 = vunpack.c.l.b16 %v87
  %v312 = vunpack.c.l.b16 %v88
  %v313 = vunpack.c.l.b16 %v89
  %v314 = vunpack.c.l.b16 %v90
  %v315 = vunpack.c.l.b16 %v91
  %v316 = vunpack.c.l.b16 %v92
  %v317 = vunpack.c.l.b16 %v93
  %v318 = vunpack.c.l.b16 %v94
  %v319 = vunpack.c.l.b16 %v95
  %v320 = vunpack.c.l.b16 %v96
  %v321 = vunpack.c.l.b16 %v97
  %v322 = vunpack.c.l.b16 %v98
  %v323 = vunpack.c.l.b16 %v99
  %v324 = vunpack.c.l.b16 %v100
  %v325 = vunpack.c.l.b16 %v101
  %v326 = vunpack.c.l.b16 %v102
  %v327 = vunpack.c.l.b16 %v103
  %v328 = vunpack.c.l.b16 %v104
  %v329 = vunpack.c.l.b16 %v105
  %v330 = vunpack.c.l.b16 %v106
  %v331 = vunpack.c.l.b16 %v107
  %v332 = vunpack.c.l.b16 %v108
  %v333 = vunpack.c.l.b16 %v109
  %v334 = vunpack.c.l.b16 %v110
  %v335 = vunpack.c.l.b16 %v111
  %v336 = vunpack.c.l.b16 %v112
  %v337 = vunpack.c.l.b16 %v113
  %v338 = vunpack.c.l.b16 %v114
  %v339 = vunpack.c.l.b16 %v115
  %v340 = vunpack.c.l.b16 %v116
  %v341 = vunpack.c.l.b16 %v117
  %v342 = vunpack.c.l.b16 %v118
  %v343 = vunpack.c.l.b16 %v119
  %v344 = vunpack.c.l.b16 %v120
  %v345 = vunpack.c.l.b16 %v121
  %v346 = vunpack.c.l.b16 %v122
  %v347 = vunpack.c.l.b16 %v123
  %v348 = vunpack.c.l.b16 %v124
  %v349 = vunpack.c.l.b16 %v125
  %v350 = vunpack.c.l.b16 %v126
  %v351 = vunpack.c.l.b16 %v127
  %v352 = vunpack.c.l.b16 %v128
  %v353 = vunpack.c.l.b16 %v129
  %v354 = vunpack.c.l.b16 %v130
  %v355 = vpack.c.b16 %v308, %v307
  %v356 = vpack.c.b16 %v310, %v309
  %v357 = vpack.c.b16 %v312, %v311
  %v358 = vpack.c.b16 %v314, %v313
  %v359 = vpack.c.b16 %v316, %v315
  %v360 = vpack.c.b16 %v318, %v317
  %v361 = vpack.c.b16 %v320, %v319
  %v362 = vpack.c.b16 %v322, %v321
  %v363 = vpack.c.b16 %v324, %v323
  %v364 = vpack.c.b16 %v326, %v325
  %v365 = vpack.c.b16 %v328, %v327
  %v366 = vpack.c.b16 %v330, %v329
  %v367 = vpack.c.b16 %v332, %v331
  %v368 = vpack.c.b16 %v334, %v333
  %v369 = vpack.c.b16 %v336, %v335
  %v370 = vpack.c.b16 %v338, %v337
  %v371 = vpack.c.b16 %v340, %v339
  %v372 = vpack.c.b16 %v342, %v341
  %v373 = vpack.c.b16 %v344, %v343
  %v374 = vpack.c.b16 %v346, %v345
  %v375 = vpack.c.b16 %v348, %v347
  %v376 = vpack.c.b16 %v350, %v349
  %v377 = vpack.c.b16 %v352, %v351
  %v378 = vpack.c.b16 %v354, %v353
  %403 = vmatprep.subr.bf16.mxu0 0
  %404 = vmatpush1.bf16.msra.mxu0 %v355
  %405 = vmatprep.subr.bf16.mxu0 0
  %406 = vmatpush1.bf16.msra.mxu0 %v356
  %407 = vmatprep.subr.bf16.mxu0 0
  %408 = vmatpush1.bf16.msra.mxu0 %v357
  %409 = vmatprep.subr.bf16.mxu0 0
  %410 = vmatpush1.bf16.msra.mxu0 %v358
  %411 = vmatprep.subr.bf16.mxu0 0
  %412 = vmatpush1.bf16.msra.mxu0 %v359
  %413 = vmatprep.subr.bf16.mxu0 0
  %414 = vmatpush1.bf16.msra.mxu0 %v360
  %415 = vmatprep.subr.bf16.mxu0 0
  %416 = vmatpush1.bf16.msra.mxu0 %v361
  %417 = vmatprep.subr.bf16.mxu0 0
  %418 = vmatpush1.bf16.msra.mxu0 %v362
  %419 = vmatprep.subr.bf16.mxu0 0
  %420 = vmatpush1.bf16.msra.mxu0 %v363
  %421 = vmatprep.subr.bf16.mxu0 0
  %422 = vmatpush1.bf16.msra.mxu0 %v364
  %423 = vmatprep.subr.bf16.mxu0 0
  %424 = vmatpush1.bf16.msra.mxu0 %v365
  %425 = vmatprep.subr.bf16.mxu0 0
  %426 = vmatpush1.bf16.msra.mxu0 %v366
  %427 = vmatprep.subr.bf16.mxu0 0
  %428 = vmatpush1.bf16.msra.mxu0 %v367
  %429 = vmatprep.subr.bf16.mxu0 0
  %430 = vmatpush1.bf16.msra.mxu0 %v368
  %431 = vmatprep.subr.bf16.mxu0 0
  %432 = vmatpush1.bf16.msra.mxu0 %v369
  %433 = vmatprep.subr.bf16.mxu0 0
  %434 = vmatpush1.bf16.msra.mxu0 %v370
  %435 = vmatprep.mubr.bf16.mxu0 %v212
  %436 = vmatmul.mubr.bf16.gmra.mrb[0].mxu0 %v211
  %v437 = vpop.f32.mrb[0].mxu0
  %v438 = vadd.f32 0.0, %v437
  %v439 = vpop.f32.mrb[0].mxu0
  %v440 = vpop.f32.mrb[0].mxu0
  %v441 = vadd.f32 0.0, %v440
  %v442 = vpop.f32.mrb[0].mxu0
  %443 = vmatprep.mubr.bf16.mxu0 %v215
  %444 = vmatmul.mubr.bf16.gmra.mrb[0].mxu0 %v214
  %v445 = vpop.f32.mrb[0].mxu0
  %v446 = vadd.f32 0.0, %v445
  %v447 = vpop.f32.mrb[0].mxu0
  %v448 = vpop.f32.mrb[0].mxu0
  %v449 = vadd.f32 0.0, %v448
  %v450 = vpop.f32.mrb[0].mxu0
  %451 = vmatprep.mubr.bf16.mxu0 %v218
  %452 = vmatmul.mubr.bf16.gmra.mrb[0].mxu0 %v217
  %v453 = vpop.f32.mrb[0].mxu0
  %v454 = vadd.f32 0.0, %v453
  %v455 = vpop.f32.mrb[0].mxu0
  %v456 = vpop.f32.mrb[0].mxu0
  %v457 = vadd.f32 0.0, %v456
  %v458 = vpop.f32.mrb[0].mxu0
  %459 = vmatprep.mubr.bf16.mxu0 %v221
  %460 = vmatmul.mubr.bf16.gmra.mrb[0].mxu0 %v220
  %v461 = vpop.f32.mrb[0].mxu0
  %v462 = vadd.f32 0.0, %v461
  %v463 = vpop.f32.mrb[0].mxu0
  %v464 = vpop.f32.mrb[0].mxu0
  %v465 = vadd.f32 0.0, %v464
  %v466 = vpop.f32.mrb[0].mxu0
  %467 = vmatprep.mubr.bf16.mxu0 %v224
  %468 = vmatmul.mubr.bf16.gmra.mrb[0].mxu0 %v223
  %v469 = vpop.f32.mrb[0].mxu0
  %v470 = vadd.f32 0.0, %v469
  %v471 = vpop.f32.mrb[0].mxu0
  %v472 = vpop.f32.mrb[0].mxu0
  %v473 = vadd.f32 0.0, %v472
  %v474 = vpop.f32.mrb[0].mxu0
  %475 = vmatprep.mubr.bf16.mxu0 %v227
  %476 = vmatmul.mubr.bf16.gmra.mrb[0].mxu0 %v226
  %v477 = vpop.f32.mrb[0].mxu0
  %v478 = vadd.f32 0.0, %v477
  %v479 = vpop.f32.mrb[0].mxu0
  %v480 = vpop.f32.mrb[0].mxu0
  %v481 = vadd.f32 0.0, %v480
  %v482 = vpop.f32.mrb[0].mxu0
  %483 = vmatprep.mubr.bf16.mxu0 %v230
  %484 = vmatmul.mubr.bf16.gmra.mrb[0].mxu0 %v229
  %v485 = vpop.f32.mrb[0].mxu0
  %v486 = vadd.f32 0.0, %v485
  %v487 = vpop.f32.mrb[0].mxu0
  %v488 = vpop.f32.mrb[0].mxu0
  %v489 = vadd.f32 0.0, %v488
  %v490 = vpop.f32.mrb[0].mxu0
  %491 = vmatprep.mubr.bf16.mxu0 %v233
  %492 = vmatmul.mubr.bf16.gmra.mrb[0].mxu0 %v232
  %v493 = vpop.f32.mrb[0].mxu0
  %v494 = vadd.f32 0.0, %v493
  %v495 = vpop.f32.mrb[0].mxu0
  %v496 = vpop.f32.mrb[0].mxu0
  %v497 = vadd.f32 0.0, %v496
  %v498 = vpop.f32.mrb[0].mxu0
  %499 = vdwg.mxu0
  %500 = vmatprep.subr.bf16.mxu0 0
  %501 = vmatpush1.bf16.msra.mxu0 %v371
  %502 = vmatprep.subr.bf16.mxu0 0
  %503 = vmatpush1.bf16.msra.mxu0 %v372
  %504 = vmatprep.subr.bf16.mxu0 0
  %505 = vmatpush1.bf16.msra.mxu0 %v373
  %506 = vmatprep.subr.bf16.mxu0 0
  %507 = vmatpush1.bf16.msra.mxu0 %v374
  %508 = vmatprep.subr.bf16.mxu0 0
  %509 = vmatpush1.bf16.msra.mxu0 %v375
  %510 = vmatprep.subr.bf16.mxu0 0
  %511 = vmatpush1.bf16.msra.mxu0 %v376
  %512 = vmatprep.subr.bf16.mxu0 0
  %513 = vmatpush1.bf16.msra.mxu0 %v377
  %514 = vmatprep.subr.bf16.mxu0 0
  %515 = vmatpush1.bf16.msra.mxu0 %v378
  %516 = vmatprep.subr.bf16.mxu0 0
  %517 = vmatpush1.bf16.msra.mxu0 0
  %518 = vmatprep.subr.bf16.mxu0 0
  %519 = vmatpush1.bf16.msra.mxu0 0
  %520 = vmatprep.subr.bf16.mxu0 0
  %521 = vmatpush1.bf16.msra.mxu0 0
  %522 = vmatprep.subr.bf16.mxu0 0
  %523 = vmatpush1.bf16.msra.mxu0 0
  %524 = vmatprep.subr.bf16.mxu0 0
  %525 = vmatpush1.bf16.msra.mxu0 0
  %526 = vmatprep.subr.bf16.mxu0 0
  %527 = vmatpush1.bf16.msra.mxu0 0
  %528 = vmatprep.subr.bf16.mxu0 0
  %529 = vmatpush1.bf16.msra.mxu0 0
  %530 = vmatprep.subr.bf16.mxu0 0
  %531 = vmatpush1.bf16.msra.mxu0 0
  %532 = vmatprep.mubr.bf16.mxu0 0
  %533 = vmatmul.mubr.bf16.gmra.mrb[0].mxu0 %v213
  %v534 = vpop.f32.mrb[0].mxu0
  %v535 = vadd.f32 %v438, %v534
  %v536 = vpop.f32.mrb[0].mxu0
  %v537 = vpop.f32.mrb[0].mxu0
  %v538 = vadd.f32 %v441, %v537
  %v539 = vpop.f32.mrb[0].mxu0
  %540 = vmatprep.mubr.bf16.mxu0 0
  %541 = vmatmul.mubr.bf16.gmra.mrb[0].mxu0 %v216
  %v542 = vpop.f32.mrb[0].mxu0
  %v543 = vadd.f32 %v446, %v542
  %v544 = vpop.f32.mrb[0].mxu0
  %v545 = vpop.f32.mrb[0].mxu0
  %v546 = vadd.f32 %v449, %v545
  %v547 = vpop.f32.mrb[0].mxu0
  %548 = vmatprep.mubr.bf16.mxu0 0
  %549 = vmatmul.mubr.bf16.gmra.mrb[0].mxu0 %v219
  %v550 = vpop.f32.mrb[0].mxu0
  %v551 = vadd.f32 %v454, %v550
  %v552 = vpop.f32.mrb[0].mxu0
  %v553 = vpop.f32.mrb[0].mxu0
  %v554 = vadd.f32 %v457, %v553
  %v555 = vpop.f32.mrb[0].mxu0
  %556 = vmatprep.mubr.bf16.mxu0 0
  %557 = vmatmul.mubr.bf16.gmra.mrb[0].mxu0 %v222
  %v558 = vpop.f32.mrb[0].mxu0
  %v559 = vadd.f32 %v462, %v558
  %v560 = vpop.f32.mrb[0].mxu0
  %v561 = vpop.f32.mrb[0].mxu0
  %v562 = vadd.f32 %v465, %v561
  %v563 = vpop.f32.mrb[0].mxu0
  %564 = vmatprep.mubr.bf16.mxu0 0
  %565 = vmatmul.mubr.bf16.gmra.mrb[0].mxu0 %v225
  %v566 = vpop.f32.mrb[0].mxu0
  %v567 = vadd.f32 %v470, %v566
  %v568 = vpop.f32.mrb[0].mxu0
  %v569 = vpop.f32.mrb[0].mxu0
  %v570 = vadd.f32 %v473, %v569
  %v571 = vpop.f32.mrb[0].mxu0
  %572 = vmatprep.mubr.bf16.mxu0 0
  %573 = vmatmul.mubr.bf16.gmra.mrb[0].mxu0 %v228
  %v574 = vpop.f32.mrb[0].mxu0
  %v575 = vadd.f32 %v478, %v574
  %v576 = vpop.f32.mrb[0].mxu0
  %v577 = vpop.f32.mrb[0].mxu0
  %v578 = vadd.f32 %v481, %v577
  %v579 = vpop.f32.mrb[0].mxu0
  %580 = vmatprep.mubr.bf16.mxu0 0
  %581 = vmatmul.mubr.bf16.gmra.mrb[0].mxu0 %v231
  %v582 = vpop.f32.mrb[0].mxu0
  %v583 = vadd.f32 %v486, %v582
  %v584 = vpop.f32.mrb[0].mxu0
  %v585 = vpop.f32.mrb[0].mxu0
  %v586 = vadd.f32 %v489, %v585
  %v587 = vpop.f32.mrb[0].mxu0
  %588 = vmatprep.mubr.bf16.mxu0 0
  %589 = vmatmul.mubr.bf16.gmra.mrb[0].mxu0 %v234
  %v590 = vpop.f32.mrb[0].mxu0
  %v591 = vadd.f32 %v494, %v590
  %v592 = vpop.f32.mrb[0].mxu0
  %v593 = vpop.f32.mrb[0].mxu0
  %v594 = vadd.f32 %v497, %v593
  %v595 = vpop.f32.mrb[0].mxu0
  %596 = vdwg.mxu0
  %v597 = vadd.f32 %v35, %v535
  %v598 = vadd.f32 %v36, %v538
  %v599 = vadd.f32 %v37, %v543
  %v600 = vadd.f32 %v38, %v546
  %v601 = vadd.f32 %v39, %v551
  %v602 = vadd.f32 %v40, %v554
  %v603 = vadd.f32 %v41, %v559
  %v604 = vadd.f32 %v42, %v562
  %v605 = vadd.f32 %v43, %v567
  %v606 = vadd.f32 %v44, %v570
  %v607 = vadd.f32 %v45, %v575
  %v608 = vadd.f32 %v46, %v578
  %v609 = vadd.f32 %v47, %v583
  %v610 = vadd.f32 %v48, %v586
  %v611 = vadd.f32 %v49, %v591
  %v612 = vadd.f32 %v50, %v594
  %613 = vst [vmem:[#allocation2] sm:$0xff] %v597
  %614 = vst [vmem:[#allocation2 + $0x8] sm:$0xff] %v598
  %615 = vst [vmem:[#allocation2 + $0x10] sm:$0xff] %v599
  %616 = vst [vmem:[#allocation2 + $0x18] sm:$0xff] %v600
  %617 = vst [vmem:[#allocation2 + $0x20] sm:$0xff] %v601
  %618 = vst [vmem:[#allocation2 + $0x28] sm:$0xff] %v602
  %619 = vst [vmem:[#allocation2 + $0x30] sm:$0xff] %v603
  %620 = vst [vmem:[#allocation2 + $0x38] sm:$0xff] %v604
  %621 = vst [vmem:[#allocation2 + $0x40] sm:$0xff] %v605
  %622 = vst [vmem:[#allocation2 + $0x48] sm:$0xff] %v606
  %623 = vst [vmem:[#allocation2 + $0x50] sm:$0xff] %v607
  %624 = vst [vmem:[#allocation2 + $0x58] sm:$0xff] %v608
  %625 = vst [vmem:[#allocation2 + $0x60] sm:$0xff] %v609
  %626 = vst [vmem:[#allocation2 + $0x68] sm:$0xff] %v610
  %627 = vst [vmem:[#allocation2 + $0x70] sm:$0xff] %v611
  %628 = vst [vmem:[#allocation2 + $0x78] sm:$0xff] %v612
  // Predicated region
  $region18: #{forward.22} parent=0 // pred_check
    %p629 = pneg %p15
  $region19: #{forward.22} parent=0 // pred_check_branch
    %631 = sbr.rel (%p629) target = $region21
  $region20: #{forward.22} parent=0 // pred_region
    %v632 = vld [vmem:[#allocation2] sm:$0xff]
    %v633 = vld [vmem:[#allocation2 + $0x8] sm:$0xff]
    %v634 = vld [vmem:[#allocation2 + $0x10] sm:$0xff]
    %v635 = vld [vmem:[#allocation2 + $0x18] sm:$0xff]
    %v636 = vld [vmem:[#allocation2 + $0x20] sm:$0xff]
    %v637 = vld [vmem:[#allocation2 + $0x28] sm:$0xff]
    %v638 = vld [vmem:[#allocation2 + $0x30] sm:$0xff]
    %v639 = vld [vmem:[#allocation2 + $0x38] sm:$0xff]
    %v640 = vld [vmem:[#allocation2 + $0x40] sm:$0xff]
    %v641 = vld [vmem:[#allocation2 + $0x48] sm:$0xff]
    %v642 = vld [vmem:[#allocation2 + $0x50] sm:$0xff]
    %v643 = vld [vmem:[#allocation2 + $0x58] sm:$0xff]
    %v644 = vld [vmem:[#allocation2 + $0x60] sm:$0xff]
    %v645 = vld [vmem:[#allocation2 + $0x68] sm:$0xff]
    %v646 = vld [vmem:[#allocation2 + $0x70] sm:$0xff]
    %v647 = vld [vmem:[#allocation2 + $0x78] sm:$0xff]
    %v648 = vld [vmem:[%s2] sm:$0x1]
    %v650 = vlaneseq
    %v651 = vshrl.u32 %v650, 7
    %v652 = vsub.s32 0, %v651
    %v653 = vrot.slane %v648, %v652
    %v655 = vadd.f32 %v632, %v653
    %v656 = vadd.f32 %v633, %v653
    %v657 = vadd.f32 %v634, %v653
    %v658 = vadd.f32 %v635, %v653
    %v659 = vadd.f32 %v636, %v653
    %v660 = vadd.f32 %v637, %v653
    %v661 = vadd.f32 %v638, %v653
    %v662 = vadd.f32 %v639, %v653
    %v663 = vadd.f32 %v640, %v653
    %v664 = vadd.f32 %v641, %v653
    %v665 = vadd.f32 %v642, %v653
    %v666 = vadd.f32 %v643, %v653
    %v667 = vadd.f32 %v644, %v653
    %v668 = vadd.f32 %v645, %v653
    %v669 = vadd.f32 %v646, %v653
    %v670 = vadd.f32 %v647, %v653
    %v671 = vpack.c.bf16 %v656, %v655
    %v672 = vpack.c.bf16 %v658, %v657
    %v673 = vpack.c.bf16 %v660, %v659
    %v674 = vpack.c.bf16 %v662, %v661
    %v675 = vpack.c.bf16 %v664, %v663
    %v676 = vpack.c.bf16 %v666, %v665
    %v677 = vpack.c.bf16 %v668, %v667
    %v678 = vpack.c.bf16 %v670, %v669
    %v687 = vunpack.c.l.b16 %v671
    %v688 = vunpack.c.h.b16 %v671
    %v689 = vunpack.c.l.b16 %v672
    %v690 = vunpack.c.h.b16 %v672
    %v691 = vunpack.c.l.b16 %v673
    %v692 = vunpack.c.h.b16 %v673
    %v693 = vunpack.c.l.b16 %v674
    %v694 = vunpack.c.h.b16 %v674
    %v695 = vunpack.c.l.b16 %v675
    %v696 = vunpack.c.h.b16 %v675
    %v697 = vunpack.c.l.b16 %v676
    %v698 = vunpack.c.h.b16 %v676
    %v699 = vunpack.c.l.b16 %v677
    %v700 = vunpack.c.h.b16 %v677
    %v701 = vunpack.c.l.b16 %v678
    %v702 = vunpack.c.h.b16 %v678
    %v703 = vpack.c.b16 %v687, %v687
    %v704 = vpack.c.b16 %v688, %v688
    %v705 = vpack.c.b16 %v689, %v689
    %v706 = vpack.c.b16 %v690, %v690
    %v707 = vpack.c.b16 %v691, %v691
    %v708 = vpack.c.b16 %v692, %v692
    %v709 = vpack.c.b16 %v693, %v693
    %v710 = vpack.c.b16 %v694, %v694
    %v711 = vpack.c.b16 %v695, %v695
    %v712 = vpack.c.b16 %v696, %v696
    %v713 = vpack.c.b16 %v697, %v697
    %v714 = vpack.c.b16 %v698, %v698
    %v715 = vpack.c.b16 %v699, %v699
    %v716 = vpack.c.b16 %v700, %v700
    %v717 = vpack.c.b16 %v701, %v701
    %v718 = vpack.c.b16 %v702, %v702
    %735 = vst [vmem:[%s3] sm:$0xf] %v703
    %736 = vst [vmem:[%s3 + $0x4] sm:$0xf] %v704
    %737 = vst [vmem:[%s3 + $0x8] sm:$0xf] %v705
    %738 = vst [vmem:[%s3 + $0xc] sm:$0xf] %v706
    %739 = vst [vmem:[%s3 + $0x10] sm:$0xf] %v707
    %740 = vst [vmem:[%s3 + $0x14] sm:$0xf] %v708
    %741 = vst [vmem:[%s3 + $0x18] sm:$0xf] %v709
    %742 = vst [vmem:[%s3 + $0x1c] sm:$0xf] %v710
    %743 = vst [vmem:[%s3 + $0x20] sm:$0xf] %v711
    %744 = vst [vmem:[%s3 + $0x24] sm:$0xf] %v712
    %745 = vst [vmem:[%s3 + $0x28] sm:$0xf] %v713
    %746 = vst [vmem:[%s3 + $0x2c] sm:$0xf] %v714
    %747 = vst [vmem:[%s3 + $0x30] sm:$0xf] %v715
    %748 = vst [vmem:[%s3 + $0x34] sm:$0xf] %v716
    %749 = vst [vmem:[%s3 + $0x38] sm:$0xf] %v717
    %750 = vst [vmem:[%s3 + $0x3c] sm:$0xf] %v718
  $region21: #{forward.22} parent=0 // pred_fallthru
    _
  // Predicated region
  $region22: #{forward.22} parent=0 // pred_check
    _
  $region23: #{forward.22} parent=0 // pred_check_branch
    %752 = sbr.rel (0) target = $region25
  $region24: #{forward.22} parent=0 // pred_region
    _
  $region25: #{forward.22} parent=0 // pred_fallthru
    _
  // Predicated region
  $region26: #{forward.22} parent=0 // pred_check
    _
  $region27: #{forward.22} parent=0 // pred_check_branch
    %754 = sbr.rel (0) target = $region29
  $region28: #{forward.22} parent=0 // pred_region
    _
  $region29: #{forward.22} parent=0 // pred_fallthru
    _

// kernel: forward.25
$region0: #{forward.25}
  #allocation0 [shape = 'u32[]', space=smem, size = 0x4, offset = 0x4, fixed_abs, tag = 'smem constant byte address 0x4 - core index']
  #allocation1 [shape = 'u32[144,128]{1,0:T(1,128)}', space=vmem, size = 0x12000, scoped, tag = 'internal scratch']
  #allocation2 [shape = 'f32[176,128]{1,0:T(8,128)}', space=vmem, size = 0x16000, scoped, tag = 'scratch operand']
  %s0 = inlined_call_operand.vmem [shape: bf16[176,384], index: 0, kind: input, shape index: {}]
  %s1 = inlined_call_operand.vmem [shape: bf16[384,128], index: 1, kind: input, shape index: {}]
  %s2 = inlined_call_operand.vmem [shape: f32[1,128], index: 2, kind: input, shape index: {}]
  %s3 = inlined_call_operand.vmem [shape: bf16[176,128], index: 3, kind: output, shape index: {}]
  %s4 = sld [smem:[#allocation0]]
  $region30: #{forward.25} parent=0
    _
  %s6 = ssub.s32 1, %s4
  %s7 = scalar_select 0, %s6, %s4
  // Predicated region
  $region2: #{forward.25} parent=0 // pred_check
    _
  $region3: #{forward.25} parent=0 // pred_check_branch
    %9 = sbr.rel (0) target = $region5
  $region4: #{forward.25} parent=0 // pred_region
    _
  $region5: #{forward.25} parent=0 // pred_fallthru
    _
  // Predicated region
  $region6: #{forward.25} parent=0 // pred_check
    _
  $region7: #{forward.25} parent=0 // pred_check_branch
    %11 = sbr.rel (0) target = $region9
  $region8: #{forward.25} parent=0 // pred_region
    _
  $region9: #{forward.25} parent=0 // pred_fallthru
    _
  // Predicated region
  $region10: #{forward.25} parent=0 // pred_check
    _
  $region11: #{forward.25} parent=0 // pred_check_branch
    %13 = sbr.rel (0) target = $region13
  $region12: #{forward.25} parent=0 // pred_region
    _
  $region13: #{forward.25} parent=0 // pred_fallthru
    _
  %p15 = scmp.eq.s32.totalorder 0, 0
  // Predicated region
  $region14: #{forward.25} parent=0 // pred_check
    %p16 = pneg %p15
  $region15: #{forward.25} parent=0 // pred_check_branch
    %18 = sbr.rel (%p16) target = $region17
  $region16: #{forward.25} parent=0 // pred_region
    %19 = vst [vmem:[#allocation2] sm:$0xff] 0.0
    %20 = vst [vmem:[#allocation2 + $0x8] sm:$0xff] 0.0
    %21 = vst [vmem:[#allocation2 + $0x10] sm:$0xff] 0.0
    %22 = vst [vmem:[#allocation2 + $0x18] sm:$0xff] 0.0
    %23 = vst [vmem:[#allocation2 + $0x20] sm:$0xff] 0.0
    %24 = vst [vmem:[#allocation2 + $0x28] sm:$0xff] 0.0
    %25 = vst [vmem:[#allocation2 + $0x30] sm:$0xff] 0.0
    %26 = vst [vmem:[#allocation2 + $0x38] sm:$0xff] 0.0
    %27 = vst [vmem:[#allocation2 + $0x40] sm:$0xff] 0.0
    %28 = vst [vmem:[#allocation2 + $0x48] sm:$0xff] 0.0
    %29 = vst [vmem:[#allocation2 + $0x50] sm:$0xff] 0.0
    %30 = vst [vmem:[#allocation2 + $0x58] sm:$0xff] 0.0
    %31 = vst [vmem:[#allocation2 + $0x60] sm:$0xff] 0.0
    %32 = vst [vmem:[#allocation2 + $0x68] sm:$0xff] 0.0
    %33 = vst [vmem:[#allocation2 + $0x70] sm:$0xff] 0.0
    %34 = vst [vmem:[#allocation2 + $0x78] sm:$0xff] 0.0
    %35 = vst [vmem:[#allocation2 + $0x80] sm:$0xff] 0.0
    %36 = vst [vmem:[#allocation2 + $0x88] sm:$0xff] 0.0
    %37 = vst [vmem:[#allocation2 + $0x90] sm:$0xff] 0.0
    %38 = vst [vmem:[#allocation2 + $0x98] sm:$0xff] 0.0
    %39 = vst [vmem:[#allocation2 + $0xa0] sm:$0xff] 0.0
    %40 = vst [vmem:[#allocation2 + $0xa8] sm:$0xff] 0.0
  $region17: #{forward.25} parent=0 // pred_fallthru
    _
  %v41 = vld [vmem:[#allocation2] sm:$0xff]
  %v42 = vld [vmem:[#allocation2 + $0x8] sm:$0xff]
  %v43 = vld [vmem:[#allocation2 + $0x10] sm:$0xff]
  %v44 = vld [vmem:[#allocation2 + $0x18] sm:$0xff]
  %v45 = vld [vmem:[#allocation2 + $0x20] sm:$0xff]
  %v46 = vld [vmem:[#allocation2 + $0x28] sm:$0xff]
  %v47 = vld [vmem:[#allocation2 + $0x30] sm:$0xff]
  %v48 = vld [vmem:[#allocation2 + $0x38] sm:$0xff]
  %v49 = vld [vmem:[#allocation2 + $0x40] sm:$0xff]
  %v50 = vld [vmem:[#allocation2 + $0x48] sm:$0xff]
  %v51 = vld [vmem:[#allocation2 + $0x50] sm:$0xff]
  %v52 = vld [vmem:[#allocation2 + $0x58] sm:$0xff]
  %v53 = vld [vmem:[#allocation2 + $0x60] sm:$0xff]
  %v54 = vld [vmem:[#allocation2 + $0x68] sm:$0xff]
  %v55 = vld [vmem:[#allocation2 + $0x70] sm:$0xff]
  %v56 = vld [vmem:[#allocation2 + $0x78] sm:$0xff]
  %v57 = vld [vmem:[#allocation2 + $0x80] sm:$0xff]
  %v58 = vld [vmem:[#allocation2 + $0x88] sm:$0xff]
  %v59 = vld [vmem:[#allocation2 + $0x90] sm:$0xff]
  %v60 = vld [vmem:[#allocation2 + $0x98] sm:$0xff]
  %v61 = vld [vmem:[#allocation2 + $0xa0] sm:$0xff]
  %v62 = vld [vmem:[#allocation2 + $0xa8] sm:$0xff]
  %v63 = vld [vmem:[%s0] sm:$0xff]
  %v64 = vld [vmem:[%s0 + $0x8] sm:$0xf]
  %v65 = vld [vmem:[%s0 + $0xc] sm:$0xff]
  %v66 = vld [vmem:[%s0 + $0x14] sm:$0xf]
  %v67 = vld [vmem:[%s0 + $0x18] sm:$0xff]
  %v68 = vld [vmem:[%s0 + $0x20] sm:$0xf]
  %v69 = vld [vmem:[%s0 + $0x24] sm:$0xff]
  %v70 = vld [vmem:[%s0 + $0x2c] sm:$0xf]
  %v71 = vld [vmem:[%s0 + $0x30] sm:$0xff]
  %v72 = vld [vmem:[%s0 + $0x38] sm:$0xf]
  %v73 = vld [vmem:[%s0 + $0x3c] sm:$0xff]
  %v74 = vld [vmem:[%s0 + $0x44] sm:$0xf]
  %v75 = vld [vmem:[%s0 + $0x48] sm:$0xff]
  %v76 = vld [vmem:[%s0 + $0x50] sm:$0xf]
  %v77 = vld [vmem:[%s0 + $0x54] sm:$0xff]
  %v78 = vld [vmem:[%s0 + $0x5c] sm:$0xf]
  %v79 = vld [vmem:[%s0 + $0x60] sm:$0xff]
  %v80 = vld [vmem:[%s0 + $0x68] sm:$0xf]
  %v81 = vld [vmem:[%s0 + $0x6c] sm:$0xff]
  %v82 = vld [vmem:[%s0 + $0x74] sm:$0xf]
  %v83 = vld [vmem:[%s0 + $0x78] sm:$0xff]
  %v84 = vld [vmem:[%s0 + $0x80] sm:$0xf]
  %v85 = vld [vmem:[%s0 + $0x84] sm:$0xff]
  %v86 = vld [vmem:[%s0 + $0x8c] sm:$0xf]
  %v87 = vld [vmem:[%s0 + $0x90] sm:$0xff]
  %v88 = vld [vmem:[%s0 + $0x98] sm:$0xf]
  %v89 = vld [vmem:[%s0 + $0x9c] sm:$0xff]
  %v90 = vld [vmem:[%s0 + $0xa4] sm:$0xf]
  %v91 = vld [vmem:[%s0 + $0xa8] sm:$0xff]
  %v92 = vld [vmem:[%s0 + $0xb0] sm:$0xf]
  %v93 = vld [vmem:[%s0 + $0xb4] sm:$0xff]
  %v94 = vld [vmem:[%s0 + $0xbc] sm:$0xf]
  %v95 = vld [vmem:[%s0 + $0xc0] sm:$0xff]
  %v96 = vld [vmem:[%s0 + $0xc8] sm:$0xf]
  %v97 = vld [vmem:[%s0 + $0xcc] sm:$0xff]
  %v98 = vld [vmem:[%s0 + $0xd4] sm:$0xf]
  %v99 = vld [vmem:[%s0 + $0xd8] sm:$0xff]
  %v100 = vld [vmem:[%s0 + $0xe0] sm:$0xf]
  %v101 = vld [vmem:[%s0 + $0xe4] sm:$0xff]
  %v102 = vld [vmem:[%s0 + $0xec] sm:$0xf]
  %v103 = vld [vmem:[%s0 + $0xf0] sm:$0xff]
  %v104 = vld [vmem:[%s0 + $0xf8] sm:$0xf]
  %v105 = vld [vmem:[%s0 + $0xfc] sm:$0xff]
  %v106 = vld [vmem:[%s0 + $0x104] sm:$0xf]
  %v107 = vld [vmem:[%s1] sm:$0xf]
  %v108 = vld [vmem:[%s1 + $0x4] sm:$0xf]
  %v109 = vld [vmem:[%s1 + $0x8] sm:$0xf]
  %v110 = vld [vmem:[%s1 + $0xc] sm:$0xf]
  %v111 = vld [vmem:[%s1 + $0x10] sm:$0xf]
  %v112 = vld [vmem:[%s1 + $0x14] sm:$0xf]
  %v113 = vld [vmem:[%s1 + $0x18] sm:$0xf]
  %v114 = vld [vmem:[%s1 + $0x1c] sm:$0xf]
  %v115 = vld [vmem:[%s1 + $0x20] sm:$0xf]
  %v116 = vld [vmem:[%s1 + $0x24] sm:$0xf]
  %v117 = vld [vmem:[%s1 + $0x28] sm:$0xf]
  %v118 = vld [vmem:[%s1 + $0x2c] sm:$0xf]
  %v119 = vld [vmem:[%s1 + $0x30] sm:$0xf]
  %v120 = vld [vmem:[%s1 + $0x34] sm:$0xf]
  %v121 = vld [vmem:[%s1 + $0x38] sm:$0xf]
  %v122 = vld [vmem:[%s1 + $0x3c] sm:$0xf]
  %v123 = vld [vmem:[%s1 + $0x40] sm:$0xf]
  %v124 = vld [vmem:[%s1 + $0x44] sm:$0xf]
  %v125 = vld [vmem:[%s1 + $0x48] sm:$0xf]
  %v126 = vld [vmem:[%s1 + $0x4c] sm:$0xf]
  %v127 = vld [vmem:[%s1 + $0x50] sm:$0xf]
  %v128 = vld [vmem:[%s1 + $0x54] sm:$0xf]
  %v129 = vld [vmem:[%s1 + $0x58] sm:$0xf]
  %v130 = vld [vmem:[%s1 + $0x5c] sm:$0xf]
  %v131 = vld [vmem:[%s1 + $0x60] sm:$0xf]
  %v132 = vld [vmem:[%s1 + $0x64] sm:$0xf]
  %v133 = vld [vmem:[%s1 + $0x68] sm:$0xf]
  %v134 = vld [vmem:[%s1 + $0x6c] sm:$0xf]
  %v135 = vld [vmem:[%s1 + $0x70] sm:$0xf]
  %v136 = vld [vmem:[%s1 + $0x74] sm:$0xf]
  %v137 = vld [vmem:[%s1 + $0x78] sm:$0xf]
  %v138 = vld [vmem:[%s1 + $0x7c] sm:$0xf]
  %v139 = vld [vmem:[%s1 + $0x80] sm:$0xf]
  %v140 = vld [vmem:[%s1 + $0x84] sm:$0xf]
  %v141 = vld [vmem:[%s1 + $0x88] sm:$0xf]
  %v142 = vld [vmem:[%s1 + $0x8c] sm:$0xf]
  %v143 = vld [vmem:[%s1 + $0x90] sm:$0xf]
  %v144 = vld [vmem:[%s1 + $0x94] sm:$0xf]
  %v145 = vld [vmem:[%s1 + $0x98] sm:$0xf]
  %v146 = vld [vmem:[%s1 + $0x9c] sm:$0xf]
  %v147 = vld [vmem:[%s1 + $0xa0] sm:$0xf]
  %v148 = vld [vmem:[%s1 + $0xa4] sm:$0xf]
  %v149 = vld [vmem:[%s1 + $0xa8] sm:$0xf]
  %v150 = vld [vmem:[%s1 + $0xac] sm:$0xf]
  %v151 = vld [vmem:[%s1 + $0xb0] sm:$0xf]
  %v152 = vld [vmem:[%s1 + $0xb4] sm:$0xf]
  %v153 = vld [vmem:[%s1 + $0xb8] sm:$0xf]
  %v154 = vld [vmem:[%s1 + $0xbc] sm:$0xf]
  %v199 = vunpack.c.l.b16 %v63
  %v200 = vunpack.c.h.b16 %v63
  %v201 = vunpack.c.l.b16 %v64
  %v202 = vunpack.c.l.b16 %v65
  %v203 = vunpack.c.h.b16 %v65
  %v204 = vunpack.c.l.b16 %v66
  %v205 = vunpack.c.l.b16 %v67
  %v206 = vunpack.c.h.b16 %v67
  %v207 = vunpack.c.l.b16 %v68
  %v208 = vunpack.c.l.b16 %v69
  %v209 = vunpack.c.h.b16 %v69
  %v210 = vunpack.c.l.b16 %v70
  %v211 = vunpack.c.l.b16 %v71
  %v212 = vunpack.c.h.b16 %v71
  %v213 = vunpack.c.l.b16 %v72
  %v214 = vunpack.c.l.b16 %v73
  %v215 = vunpack.c.h.b16 %v73
  %v216 = vunpack.c.l.b16 %v74
  %v217 = vunpack.c.l.b16 %v75
  %v218 = vunpack.c.h.b16 %v75
  %v219 = vunpack.c.l.b16 %v76
  %v220 = vunpack.c.l.b16 %v77
  %v221 = vunpack.c.h.b16 %v77
  %v222 = vunpack.c.l.b16 %v78
  %v223 = vunpack.c.l.b16 %v79
  %v224 = vunpack.c.h.b16 %v79
  %v225 = vunpack.c.l.b16 %v80
  %v226 = vunpack.c.l.b16 %v81
  %v227 = vunpack.c.h.b16 %v81
  %v228 = vunpack.c.l.b16 %v82
  %v229 = vunpack.c.l.b16 %v83
  %v230 = vunpack.c.h.b16 %v83
  %v231 = vunpack.c.l.b16 %v84
  %v232 = vunpack.c.l.b16 %v85
  %v233 = vunpack.c.h.b16 %v85
  %v234 = vunpack.c.l.b16 %v86
  %v235 = vunpack.c.l.b16 %v87
  %v236 = vunpack.c.h.b16 %v87
  %v237 = vunpack.c.l.b16 %v88
  %v238 = vunpack.c.l.b16 %v89
  %v239 = vunpack.c.h.b16 %v89
  %v240 = vunpack.c.l.b16 %v90
  %v241 = vunpack.c.l.b16 %v91
  %v242 = vunpack.c.h.b16 %v91
  %v243 = vunpack.c.l.b16 %v92
  %v244 = vunpack.c.l.b16 %v93
  %v245 = vunpack.c.h.b16 %v93
  %v246 = vunpack.c.l.b16 %v94
  %v247 = vunpack.c.l.b16 %v95
  %v248 = vunpack.c.h.b16 %v95
  %v249 = vunpack.c.l.b16 %v96
  %v250 = vunpack.c.l.b16 %v97
  %v251 = vunpack.c.h.b16 %v97
  %v252 = vunpack.c.l.b16 %v98
  %v253 = vunpack.c.l.b16 %v99
  %v254 = vunpack.c.h.b16 %v99
  %v255 = vunpack.c.l.b16 %v100
  %v256 = vunpack.c.l.b16 %v101
  %v257 = vunpack.c.h.b16 %v101
  %v258 = vunpack.c.l.b16 %v102
  %v259 = vunpack.c.l.b16 %v103
  %v260 = vunpack.c.h.b16 %v103
  %v261 = vunpack.c.l.b16 %v104
  %v262 = vunpack.c.l.b16 %v105
  %v263 = vunpack.c.h.b16 %v105
  %v264 = vunpack.c.l.b16 %v106
  %v265 = vpack.c.b16 %v202, %v199
  %v266 = vpack.c.b16 %v203, %v200
  %v267 = vpack.c.b16 %v204, %v201
  %v268 = vpack.c.b16 %v208, %v205
  %v269 = vpack.c.b16 %v209, %v206
  %v270 = vpack.c.b16 %v210, %v207
  %v271 = vpack.c.b16 %v214, %v211
  %v272 = vpack.c.b16 %v215, %v212
  %v273 = vpack.c.b16 %v216, %v213
  %v274 = vpack.c.b16 %v220, %v217
  %v275 = vpack.c.b16 %v221, %v218
  %v276 = vpack.c.b16 %v222, %v219
  %v277 = vpack.c.b16 %v226, %v223
  %v278 = vpack.c.b16 %v227, %v224
  %v279 = vpack.c.b16 %v228, %v225
  %v280 = vpack.c.b16 %v232, %v229
  %v281 = vpack.c.b16 %v233, %v230
  %v282 = vpack.c.b16 %v234, %v231
  %v283 = vpack.c.b16 %v238, %v235
  %v284 = vpack.c.b16 %v239, %v236
  %v285 = vpack.c.b16 %v240, %v237
  %v286 = vpack.c.b16 %v244, %v241
  %v287 = vpack.c.b16 %v245, %v242
  %v288 = vpack.c.b16 %v246, %v243
  %v289 = vpack.c.b16 %v250, %v247
  %v290 = vpack.c.b16 %v251, %v248
  %v291 = vpack.c.b16 %v252, %v249
  %v292 = vpack.c.b16 %v256, %v253
  %v293 = vpack.c.b16 %v257, %v254
  %v294 = vpack.c.b16 %v258, %v255
  %v295 = vpack.c.b16 %v262, %v259
  %v296 = vpack.c.b16 %v263, %v260
  %v297 = vpack.c.b16 %v264, %v261
  %v379 = vunpack.c.l.b16 %v107
  %v380 = vunpack.c.l.b16 %v108
  %v381 = vunpack.c.l.b16 %v109
  %v382 = vunpack.c.l.b16 %v110
  %v383 = vunpack.c.l.b16 %v111
  %v384 = vunpack.c.l.b16 %v112
  %v385 = vunpack.c.l.b16 %v113
  %v386 = vunpack.c.l.b16 %v114
  %v387 = vunpack.c.l.b16 %v115
  %v388 = vunpack.c.l.b16 %v116
  %v389 = vunpack.c.l.b16 %v117
  %v390 = vunpack.c.l.b16 %v118
  %v391 = vunpack.c.l.b16 %v119
  %v392 = vunpack.c.l.b16 %v120
  %v393 = vunpack.c.l.b16 %v121
  %v394 = vunpack.c.l.b16 %v122
  %v395 = vunpack.c.l.b16 %v123
  %v396 = vunpack.c.l.b16 %v124
  %v397 = vunpack.c.l.b16 %v125
  %v398 = vunpack.c.l.b16 %v126
  %v399 = vunpack.c.l.b16 %v127
  %v400 = vunpack.c.l.b16 %v128
  %v401 = vunpack.c.l.b16 %v129
  %v402 = vunpack.c.l.b16 %v130
  %v403 = vunpack.c.l.b16 %v131
  %v404 = vunpack.c.l.b16 %v132
  %v405 = vunpack.c.l.b16 %v133
  %v406 = vunpack.c.l.b16 %v134
  %v407 = vunpack.c.l.b16 %v135
  %v408 = vunpack.c.l.b16 %v136
  %v409 = vunpack.c.l.b16 %v137
  %v410 = vunpack.c.l.b16 %v138
  %v411 = vunpack.c.l.b16 %v139
  %v412 = vunpack.c.l.b16 %v140
  %v413 = vunpack.c.l.b16 %v141
  %v414 = vunpack.c.l.b16 %v142
  %v415 = vunpack.c.l.b16 %v143
  %v416 = vunpack.c.l.b16 %v144
  %v417 = vunpack.c.l.b16 %v145
  %v418 = vunpack.c.l.b16 %v146
  %v419 = vunpack.c.l.b16 %v147
  %v420 = vunpack.c.l.b16 %v148
  %v421 = vunpack.c.l.b16 %v149
  %v422 = vunpack.c.l.b16 %v150
  %v423 = vunpack.c.l.b16 %v151
  %v424 = vunpack.c.l.b16 %v152
  %v425 = vunpack.c.l.b16 %v153
  %v426 = vunpack.c.l.b16 %v154
  %v427 = vpack.c.b16 %v380, %v379
  %v428 = vpack.c.b16 %v382, %v381
  %v429 = vpack.c.b16 %v384, %v383
  %v430 = vpack.c.b16 %v386, %v385
  %v431 = vpack.c.b16 %v388, %v387
  %v432 = vpack.c.b16 %v390, %v389
  %v433 = vpack.c.b16 %v392, %v391
  %v434 = vpack.c.b16 %v394, %v393
  %v435 = vpack.c.b16 %v396, %v395
  %v436 = vpack.c.b16 %v398, %v397
  %v437 = vpack.c.b16 %v400, %v399
  %v438 = vpack.c.b16 %v402, %v401
  %v439 = vpack.c.b16 %v404, %v403
  %v440 = vpack.c.b16 %v406, %v405
  %v441 = vpack.c.b16 %v408, %v407
  %v442 = vpack.c.b16 %v410, %v409
  %v443 = vpack.c.b16 %v412, %v411
  %v444 = vpack.c.b16 %v414, %v413
  %v445 = vpack.c.b16 %v416, %v415
  %v446 = vpack.c.b16 %v418, %v417
  %v447 = vpack.c.b16 %v420, %v419
  %v448 = vpack.c.b16 %v422, %v421
  %v449 = vpack.c.b16 %v424, %v423
  %v450 = vpack.c.b16 %v426, %v425
  %475 = vmatprep.subr.bf16.mxu0 0
  %476 = vmatpush1.bf16.msra.mxu0 %v427
  %477 = vmatprep.subr.bf16.mxu0 0
  %478 = vmatpush1.bf16.msra.mxu0 %v428
  %479 = vmatprep.subr.bf16.mxu0 0
  %480 = vmatpush1.bf16.msra.mxu0 %v429
  %481 = vmatprep.subr.bf16.mxu0 0
  %482 = vmatpush1.bf16.msra.mxu0 %v430
  %483 = vmatprep.subr.bf16.mxu0 0
  %484 = vmatpush1.bf16.msra.mxu0 %v431
  %485 = vmatprep.subr.bf16.mxu0 0
  %486 = vmatpush1.bf16.msra.mxu0 %v432
  %487 = vmatprep.subr.bf16.mxu0 0
  %488 = vmatpush1.bf16.msra.mxu0 %v433
  %489 = vmatprep.subr.bf16.mxu0 0
  %490 = vmatpush1.bf16.msra.mxu0 %v434
  %491 = vmatprep.subr.bf16.mxu0 0
  %492 = vmatpush1.bf16.msra.mxu0 %v435
  %493 = vmatprep.subr.bf16.mxu0 0
  %494 = vmatpush1.bf16.msra.mxu0 %v436
  %495 = vmatprep.subr.bf16.mxu0 0
  %496 = vmatpush1.bf16.msra.mxu0 %v437
  %497 = vmatprep.subr.bf16.mxu0 0
  %498 = vmatpush1.bf16.msra.mxu0 %v438
  %499 = vmatprep.subr.bf16.mxu0 0
  %500 = vmatpush1.bf16.msra.mxu0 %v439
  %501 = vmatprep.subr.bf16.mxu0 0
  %502 = vmatpush1.bf16.msra.mxu0 %v440
  %503 = vmatprep.subr.bf16.mxu0 0
  %504 = vmatpush1.bf16.msra.mxu0 %v441
  %505 = vmatprep.subr.bf16.mxu0 0
  %506 = vmatpush1.bf16.msra.mxu0 %v442
  %507 = vmatprep.mubr.bf16.mxu0 %v266
  %508 = vmatmul.mubr.bf16.gmra.mrb[0].mxu0 %v265
  %v509 = vpop.f32.mrb[0].mxu0
  %v510 = vadd.f32 0.0, %v509
  %v511 = vpop.f32.mrb[0].mxu0
  %v512 = vpop.f32.mrb[0].mxu0
  %v513 = vadd.f32 0.0, %v512
  %v514 = vpop.f32.mrb[0].mxu0
  %515 = vmatprep.mubr.bf16.mxu0 %v269
  %516 = vmatmul.mubr.bf16.gmra.mrb[0].mxu0 %v268
  %v517 = vpop.f32.mrb[0].mxu0
  %v518 = vadd.f32 0.0, %v517
  %v519 = vpop.f32.mrb[0].mxu0
  %v520 = vpop.f32.mrb[0].mxu0
  %v521 = vadd.f32 0.0, %v520
  %v522 = vpop.f32.mrb[0].mxu0
  %523 = vmatprep.mubr.bf16.mxu0 %v272
  %524 = vmatmul.mubr.bf16.gmra.mrb[0].mxu0 %v271
  %v525 = vpop.f32.mrb[0].mxu0
  %v526 = vadd.f32 0.0, %v525
  %v527 = vpop.f32.mrb[0].mxu0
  %v528 = vpop.f32.mrb[0].mxu0
  %v529 = vadd.f32 0.0, %v528
  %v530 = vpop.f32.mrb[0].mxu0
  %531 = vmatprep.mubr.bf16.mxu0 %v275
  %532 = vmatmul.mubr.bf16.gmra.mrb[0].mxu0 %v274
  %v533 = vpop.f32.mrb[0].mxu0
  %v534 = vadd.f32 0.0, %v533
  %v535 = vpop.f32.mrb[0].mxu0
  %v536 = vpop.f32.mrb[0].mxu0
  %v537 = vadd.f32 0.0, %v536
  %v538 = vpop.f32.mrb[0].mxu0
  %539 = vmatprep.mubr.bf16.mxu0 %v278
  %540 = vmatmul.mubr.bf16.gmra.mrb[0].mxu0 %v277
  %v541 = vpop.f32.mrb[0].mxu0
  %v542 = vadd.f32 0.0, %v541
  %v543 = vpop.f32.mrb[0].mxu0
  %v544 = vpop.f32.mrb[0].mxu0
  %v545 = vadd.f32 0.0, %v544
  %v546 = vpop.f32.mrb[0].mxu0
  %547 = vmatprep.mubr.bf16.mxu0 %v281
  %548 = vmatmul.mubr.bf16.gmra.mrb[0].mxu0 %v280
  %v549 = vpop.f32.mrb[0].mxu0
  %v550 = vadd.f32 0.0, %v549
  %v551 = vpop.f32.mrb[0].mxu0
  %v552 = vpop.f32.mrb[0].mxu0
  %v553 = vadd.f32 0.0, %v552
  %v554 = vpop.f32.mrb[0].mxu0
  %555 = vmatprep.mubr.bf16.mxu0 %v284
  %556 = vmatmul.mubr.bf16.gmra.mrb[0].mxu0 %v283
  %v557 = vpop.f32.mrb[0].mxu0
  %v558 = vadd.f32 0.0, %v557
  %v559 = vpop.f32.mrb[0].mxu0
  %v560 = vpop.f32.mrb[0].mxu0
  %v561 = vadd.f32 0.0, %v560
  %v562 = vpop.f32.mrb[0].mxu0
  %563 = vmatprep.mubr.bf16.mxu0 %v287
  %564 = vmatmul.mubr.bf16.gmra.mrb[0].mxu0 %v286
  %v565 = vpop.f32.mrb[0].mxu0
  %v566 = vadd.f32 0.0, %v565
  %v567 = vpop.f32.mrb[0].mxu0
  %v568 = vpop.f32.mrb[0].mxu0
  %v569 = vadd.f32 0.0, %v568
  %v570 = vpop.f32.mrb[0].mxu0
  %571 = vmatprep.mubr.bf16.mxu0 %v290
  %572 = vmatmul.mubr.bf16.gmra.mrb[0].mxu0 %v289
  %v573 = vpop.f32.mrb[0].mxu0
  %v574 = vadd.f32 0.0, %v573
  %v575 = vpop.f32.mrb[0].mxu0
  %v576 = vpop.f32.mrb[0].mxu0
  %v577 = vadd.f32 0.0, %v576
  %v578 = vpop.f32.mrb[0].mxu0
  %579 = vmatprep.mubr.bf16.mxu0 %v293
  %580 = vmatmul.mubr.bf16.gmra.mrb[0].mxu0 %v292
  %v581 = vpop.f32.mrb[0].mxu0
  %v582 = vadd.f32 0.0, %v581
  %v583 = vpop.f32.mrb[0].mxu0
  %v584 = vpop.f32.mrb[0].mxu0
  %v585 = vadd.f32 0.0, %v584
  %v586 = vpop.f32.mrb[0].mxu0
  %587 = vmatprep.mubr.bf16.mxu0 %v296
  %588 = vmatmul.mubr.bf16.gmra.mrb[0].mxu0 %v295
  %v589 = vpop.f32.mrb[0].mxu0
  %v590 = vadd.f32 0.0, %v589
  %v591 = vpop.f32.mrb[0].mxu0
  %v592 = vpop.f32.mrb[0].mxu0
  %v593 = vadd.f32 0.0, %v592
  %v594 = vpop.f32.mrb[0].mxu0
  %595 = vdwg.mxu0
  %596 = vmatprep.subr.bf16.mxu0 0
  %597 = vmatpush1.bf16.msra.mxu0 %v443
  %598 = vmatprep.subr.bf16.mxu0 0
  %599 = vmatpush1.bf16.msra.mxu0 %v444
  %600 = vmatprep.subr.bf16.mxu0 0
  %601 = vmatpush1.bf16.msra.mxu0 %v445
  %602 = vmatprep.subr.bf16.mxu0 0
  %603 = vmatpush1.bf16.msra.mxu0 %v446
  %604 = vmatprep.subr.bf16.mxu0 0
  %605 = vmatpush1.bf16.msra.mxu0 %v447
  %606 = vmatprep.subr.bf16.mxu0 0
  %607 = vmatpush1.bf16.msra.mxu0 %v448
  %608 = vmatprep.subr.bf16.mxu0 0
  %609 = vmatpush1.bf16.msra.mxu0 %v449
  %610 = vmatprep.subr.bf16.mxu0 0
  %611 = vmatpush1.bf16.msra.mxu0 %v450
  %612 = vmatprep.subr.bf16.mxu0 0
  %613 = vmatpush1.bf16.msra.mxu0 0
  %614 = vmatprep.subr.bf16.mxu0 0
  %615 = vmatpush1.bf16.msra.mxu0 0
  %616 = vmatprep.subr.bf16.mxu0 0
  %617 = vmatpush1.bf16.msra.mxu0 0
  %618 = vmatprep.subr.bf16.mxu0 0
  %619 = vmatpush1.bf16.msra.mxu0 0
  %620 = vmatprep.subr.bf16.mxu0 0
  %621 = vmatpush1.bf16.msra.mxu0 0
  %622 = vmatprep.subr.bf16.mxu0 0
  %623 = vmatpush1.bf16.msra.mxu0 0
  %624 = vmatprep.subr.bf16.mxu0 0
  %625 = vmatpush1.bf16.msra.mxu0 0
  %626 = vmatprep.subr.bf16.mxu0 0
  %627 = vmatpush1.bf16.msra.mxu0 0
  %628 = vmatprep.mubr.bf16.mxu0 0
  %629 = vmatmul.mubr.bf16.gmra.mrb[0].mxu0 %v267
  %v630 = vpop.f32.mrb[0].mxu0
  %v631 = vadd.f32 %v510, %v630
  %v632 = vpop.f32.mrb[0].mxu0
  %v633 = vpop.f32.mrb[0].mxu0
  %v634 = vadd.f32 %v513, %v633
  %v635 = vpop.f32.mrb[0].mxu0
  %636 = vmatprep.mubr.bf16.mxu0 0
  %637 = vmatmul.mubr.bf16.gmra.mrb[0].mxu0 %v270
  %v638 = vpop.f32.mrb[0].mxu0
  %v639 = vadd.f32 %v518, %v638
  %v640 = vpop.f32.mrb[0].mxu0
  %v641 = vpop.f32.mrb[0].mxu0
  %v642 = vadd.f32 %v521, %v641
  %v643 = vpop.f32.mrb[0].mxu0
  %644 = vmatprep.mubr.bf16.mxu0 0
  %645 = vmatmul.mubr.bf16.gmra.mrb[0].mxu0 %v273
  %v646 = vpop.f32.mrb[0].mxu0
  %v647 = vadd.f32 %v526, %v646
  %v648 = vpop.f32.mrb[0].mxu0
  %v649 = vpop.f32.mrb[0].mxu0
  %v650 = vadd.f32 %v529, %v649
  %v651 = vpop.f32.mrb[0].mxu0
  %652 = vmatprep.mubr.bf16.mxu0 0
  %653 = vmatmul.mubr.bf16.gmra.mrb[0].mxu0 %v276
  %v654 = vpop.f32.mrb[0].mxu0
  %v655 = vadd.f32 %v534, %v654
  %v656 = vpop.f32.mrb[0].mxu0
  %v657 = vpop.f32.mrb[0].mxu0
  %v658 = vadd.f32 %v537, %v657
  %v659 = vpop.f32.mrb[0].mxu0
  %660 = vmatprep.mubr.bf16.mxu0 0
  %661 = vmatmul.mubr.bf16.gmra.mrb[0].mxu0 %v279
  %v662 = vpop.f32.mrb[0].mxu0
  %v663 = vadd.f32 %v542, %v662
  %v664 = vpop.f32.mrb[0].mxu0
  %v665 = vpop.f32.mrb[0].mxu0
  %v666 = vadd.f32 %v545, %v665
  %v667 = vpop.f32.mrb[0].mxu0
  %668 = vmatprep.mubr.bf16.mxu0 0
  %669 = vmatmul.mubr.bf16.gmra.mrb[0].mxu0 %v282
  %v670 = vpop.f32.mrb[0].mxu0
  %v671 = vadd.f32 %v550, %v670
  %v672 = vpop.f32.mrb[0].mxu0
  %v673 = vpop.f32.mrb[0].mxu0
  %v674 = vadd.f32 %v553, %v673
  %v675 = vpop.f32.mrb[0].mxu0
  %676 = vmatprep.mubr.bf16.mxu0 0
  %677 = vmatmul.mubr.bf16.gmra.mrb[0].mxu0 %v285
  %v678 = vpop.f32.mrb[0].mxu0
  %v679 = vadd.f32 %v558, %v678
  %v680 = vpop.f32.mrb[0].mxu0
  %v681 = vpop.f32.mrb[0].mxu0
  %v682 = vadd.f32 %v561, %v681
  %v683 = vpop.f32.mrb[0].mxu0
  %684 = vmatprep.mubr.bf16.mxu0 0
  %685 = vmatmul.mubr.bf16.gmra.mrb[0].mxu0 %v288
  %v686 = vpop.f32.mrb[0].mxu0
  %v687 = vadd.f32 %v566, %v686
  %v688 = vpop.f32.mrb[0].mxu0
  %v689 = vpop.f32.mrb[0].mxu0
  %v690 = vadd.f32 %v569, %v689
  %v691 = vpop.f32.mrb[0].mxu0
  %692 = vmatprep.mubr.bf16.mxu0 0
  %693 = vmatmul.mubr.bf16.gmra.mrb[0].mxu0 %v291
  %v694 = vpop.f32.mrb[0].mxu0
  %v695 = vadd.f32 %v574, %v694
  %v696 = vpop.f32.mrb[0].mxu0
  %v697 = vpop.f32.mrb[0].mxu0
  %v698 = vadd.f32 %v577, %v697
  %v699 = vpop.f32.mrb[0].mxu0
  %700 = vmatprep.mubr.bf16.mxu0 0
  %701 = vmatmul.mubr.bf16.gmra.mrb[0].mxu0 %v294
  %v702 = vpop.f32.mrb[0].mxu0
  %v703 = vadd.f32 %v582, %v702
  %v704 = vpop.f32.mrb[0].mxu0
  %v705 = vpop.f32.mrb[0].mxu0
  %v706 = vadd.f32 %v585, %v705
  %v707 = vpop.f32.mrb[0].mxu0
  %708 = vmatprep.mubr.bf16.mxu0 0
  %709 = vmatmul.mubr.bf16.gmra.mrb[0].mxu0 %v297
  %v710 = vpop.f32.mrb[0].mxu0
  %v711 = vadd.f32 %v590, %v710
  %v712 = vpop.f32.mrb[0].mxu0
  %v713 = vpop.f32.mrb[0].mxu0
  %v714 = vadd.f32 %v593, %v713
  %v715 = vpop.f32.mrb[0].mxu0
  %716 = vdwg.mxu0
  %v717 = vadd.f32 %v41, %v631
  %v718 = vadd.f32 %v42, %v634
  %v719 = vadd.f32 %v43, %v639
  %v720 = vadd.f32 %v44, %v642
  %v721 = vadd.f32 %v45, %v647
  %v722 = vadd.f32 %v46, %v650
  %v723 = vadd.f32 %v47, %v655
  %v724 = vadd.f32 %v48, %v658
  %v725 = vadd.f32 %v49, %v663
  %v726 = vadd.f32 %v50, %v666
  %v727 = vadd.f32 %v51, %v671
  %v728 = vadd.f32 %v52, %v674
  %v729 = vadd.f32 %v53, %v679
  %v730 = vadd.f32 %v54, %v682
  %v731 = vadd.f32 %v55, %v687
  %v732 = vadd.f32 %v56, %v690
  %v733 = vadd.f32 %v57, %v695
  %v734 = vadd.f32 %v58, %v698
  %v735 = vadd.f32 %v59, %v703
  %v736 = vadd.f32 %v60, %v706
  %v737 = vadd.f32 %v61, %v711
  %v738 = vadd.f32 %v62, %v714
  %739 = vst [vmem:[#allocation2] sm:$0xff] %v717
  %740 = vst [vmem:[#allocation2 + $0x8] sm:$0xff] %v718
  %741 = vst [vmem:[#allocation2 + $0x10] sm:$0xff] %v719
  %742 = vst [vmem:[#allocation2 + $0x18] sm:$0xff] %v720
  %743 = vst [vmem:[#allocation2 + $0x20] sm:$0xff] %v721
  %744 = vst [vmem:[#allocation2 + $0x28] sm:$0xff] %v722
  %745 = vst [vmem:[#allocation2 + $0x30] sm:$0xff] %v723
  %746 = vst [vmem:[#allocation2 + $0x38] sm:$0xff] %v724
  %747 = vst [vmem:[#allocation2 + $0x40] sm:$0xff] %v725
  %748 = vst [vmem:[#allocation2 + $0x48] sm:$0xff] %v726
  %749 = vst [vmem:[#allocation2 + $0x50] sm:$0xff] %v727
  %750 = vst [vmem:[#allocation2 + $0x58] sm:$0xff] %v728
  %751 = vst [vmem:[#allocation2 + $0x60] sm:$0xff] %v729
  %752 = vst [vmem:[#allocation2 + $0x68] sm:$0xff] %v730
  %753 = vst [vmem:[#allocation2 + $0x70] sm:$0xff] %v731
  %754 = vst [vmem:[#allocation2 + $0x78] sm:$0xff] %v732
  %755 = vst [vmem:[#allocation2 + $0x80] sm:$0xff] %v733
  %756 = vst [vmem:[#allocation2 + $0x88] sm:$0xff] %v734
  %757 = vst [vmem:[#allocation2 + $0x90] sm:$0xff] %v735
  %758 = vst [vmem:[#allocation2 + $0x98] sm:$0xff] %v736
  %759 = vst [vmem:[#allocation2 + $0xa0] sm:$0xff] %v737
  %760 = vst [vmem:[#allocation2 + $0xa8] sm:$0xff] %v738
  // Predicated region
  $region18: #{forward.25} parent=0 // pred_check
    %p761 = pneg %p15
  $region19: #{forward.25} parent=0 // pred_check_branch
    %763 = sbr.rel (%p761) target = $region21
  $region20: #{forward.25} parent=0 // pred_region
    %v764 = vld [vmem:[#allocation2] sm:$0xff]
    %v765 = vld [vmem:[#allocation2 + $0x8] sm:$0xff]
    %v766 = vld [vmem:[#allocation2 + $0x10] sm:$0xff]
    %v767 = vld [vmem:[#allocation2 + $0x18] sm:$0xff]
    %v768 = vld [vmem:[#allocation2 + $0x20] sm:$0xff]
    %v769 = vld [vmem:[#allocation2 + $0x28] sm:$0xff]
    %v770 = vld [vmem:[#allocation2 + $0x30] sm:$0xff]
    %v771 = vld [vmem:[#allocation2 + $0x38] sm:$0xff]
    %v772 = vld [vmem:[#allocation2 + $0x40] sm:$0xff]
    %v773 = vld [vmem:[#allocation2 + $0x48] sm:$0xff]
    %v774 = vld [vmem:[#allocation2 + $0x50] sm:$0xff]
    %v775 = vld [vmem:[#allocation2 + $0x58] sm:$0xff]
    %v776 = vld [vmem:[#allocation2 + $0x60] sm:$0xff]
    %v777 = vld [vmem:[#allocation2 + $0x68] sm:$0xff]
    %v778 = vld [vmem:[#allocation2 + $0x70] sm:$0xff]
    %v779 = vld [vmem:[#allocation2 + $0x78] sm:$0xff]
    %v780 = vld [vmem:[#allocation2 + $0x80] sm:$0xff]
    %v781 = vld [vmem:[#allocation2 + $0x88] sm:$0xff]
    %v782 = vld [vmem:[#allocation2 + $0x90] sm:$0xff]
    %v783 = vld [vmem:[#allocation2 + $0x98] sm:$0xff]
    %v784 = vld [vmem:[#allocation2 + $0xa0] sm:$0xff]
    %v785 = vld [vmem:[#allocation2 + $0xa8] sm:$0xff]
    %v786 = vld [vmem:[%s2] sm:$0x1]
    %v788 = vlaneseq
    %v789 = vshrl.u32 %v788, 7
    %v790 = vsub.s32 0, %v789
    %v791 = vrot.slane %v786, %v790
    %v793 = vadd.f32 %v764, %v791
    %v794 = vadd.f32 %v765, %v791
    %v795 = vadd.f32 %v766, %v791
    %v796 = vadd.f32 %v767, %v791
    %v797 = vadd.f32 %v768, %v791
    %v798 = vadd.f32 %v769, %v791
    %v799 = vadd.f32 %v770, %v791
    %v800 = vadd.f32 %v771, %v791
    %v801 = vadd.f32 %v772, %v791
    %v802 = vadd.f32 %v773, %v791
    %v803 = vadd.f32 %v774, %v791
    %v804 = vadd.f32 %v775, %v791
    %v805 = vadd.f32 %v776, %v791
    %v806 = vadd.f32 %v777, %v791
    %v807 = vadd.f32 %v778, %v791
    %v808 = vadd.f32 %v779, %v791
    %v809 = vadd.f32 %v780, %v791
    %v810 = vadd.f32 %v781, %v791
    %v811 = vadd.f32 %v782, %v791
    %v812 = vadd.f32 %v783, %v791
    %v813 = vadd.f32 %v784, %v791
    %v814 = vadd.f32 %v785, %v791
    %v815 = vmax.f32 %v793, 0.0
    %v816 = vmax.f32 %v794, 0.0
    %v817 = vmax.f32 %v795, 0.0
    %v818 = vmax.f32 %v796, 0.0
    %v819 = vmax.f32 %v797, 0.0
    %v820 = vmax.f32 %v798, 0.0
    %v821 = vmax.f32 %v799, 0.0
    %v822 = vmax.f32 %v800, 0.0
    %v823 = vmax.f32 %v801, 0.0
    %v824 = vmax.f32 %v802, 0.0
    %v825 = vmax.f32 %v803, 0.0
    %v826 = vmax.f32 %v804, 0.0
    %v827 = vmax.f32 %v805, 0.0
    %v828 = vmax.f32 %v806, 0.0
    %v829 = vmax.f32 %v807, 0.0
    %v830 = vmax.f32 %v808, 0.0
    %v831 = vmax.f32 %v809, 0.0
    %v832 = vmax.f32 %v810, 0.0
    %v833 = vmax.f32 %v811, 0.0
    %v834 = vmax.f32 %v812, 0.0
    %v835 = vmax.f32 %v813, 0.0
    %v836 = vmax.f32 %v814, 0.0
    %v837 = vpack.c.bf16 %v816, %v815
    %v838 = vpack.c.bf16 %v818, %v817
    %v839 = vpack.c.bf16 %v820, %v819
    %v840 = vpack.c.bf16 %v822, %v821
    %v841 = vpack.c.bf16 %v824, %v823
    %v842 = vpack.c.bf16 %v826, %v825
    %v843 = vpack.c.bf16 %v828, %v827
    %v844 = vpack.c.bf16 %v830, %v829
    %v845 = vpack.c.bf16 %v832, %v831
    %v846 = vpack.c.bf16 %v834, %v833
    %v847 = vpack.c.bf16 %v836, %v835
    %v859 = vunpack.c.l.b16 %v837
    %v860 = vunpack.c.h.b16 %v837
    %v861 = vunpack.c.l.b16 %v838
    %v862 = vunpack.c.h.b16 %v838
    %v863 = vunpack.c.l.b16 %v839
    %v864 = vunpack.c.h.b16 %v839
    %v865 = vunpack.c.l.b16 %v840
    %v866 = vunpack.c.h.b16 %v840
    %v867 = vunpack.c.l.b16 %v841
    %v868 = vunpack.c.h.b16 %v841
    %v869 = vunpack.c.l.b16 %v842
    %v870 = vunpack.c.h.b16 %v842
    %v871 = vunpack.c.l.b16 %v843
    %v872 = vunpack.c.h.b16 %v843
    %v873 = vunpack.c.l.b16 %v844
    %v874 = vunpack.c.h.b16 %v844
    %v875 = vunpack.c.l.b16 %v845
    %v876 = vunpack.c.h.b16 %v845
    %v877 = vunpack.c.l.b16 %v846
    %v878 = vunpack.c.h.b16 %v846
    %v879 = vunpack.c.l.b16 %v847
    %v880 = vunpack.c.h.b16 %v847
    %v881 = vpack.c.b16 %v859, %v859
    %v882 = vpack.c.b16 %v860, %v860
    %v883 = vpack.c.b16 %v861, %v861
    %v884 = vpack.c.b16 %v862, %v862
    %v885 = vpack.c.b16 %v863, %v863
    %v886 = vpack.c.b16 %v864, %v864
    %v887 = vpack.c.b16 %v865, %v865
    %v888 = vpack.c.b16 %v866, %v866
    %v889 = vpack.c.b16 %v867, %v867
    %v890 = vpack.c.b16 %v868, %v868
    %v891 = vpack.c.b16 %v869, %v869
    %v892 = vpack.c.b16 %v870, %v870
    %v893 = vpack.c.b16 %v871, %v871
    %v894 = vpack.c.b16 %v872, %v872
    %v895 = vpack.c.b16 %v873, %v873
    %v896 = vpack.c.b16 %v874, %v874
    %v897 = vpack.c.b16 %v875, %v875
    %v898 = vpack.c.b16 %v876, %v876
    %v899 = vpack.c.b16 %v877, %v877
    %v900 = vpack.c.b16 %v878, %v878
    %v901 = vpack.c.b16 %v879, %v879
    %v902 = vpack.c.b16 %v880, %v880
    %925 = vst [vmem:[%s3] sm:$0xf] %v881
    %926 = vst [vmem:[%s3 + $0x4] sm:$0xf] %v882
    %927 = vst [vmem:[%s3 + $0x8] sm:$0xf] %v883
    %928 = vst [vmem:[%s3 + $0xc] sm:$0xf] %v884
    %929 = vst [vmem:[%s3 + $0x10] sm:$0xf] %v885
    %930 = vst [vmem:[%s3 + $0x14] sm:$0xf] %v886
    %931 = vst [vmem:[%s3 + $0x18] sm:$0xf] %v887
    %932 = vst [vmem:[%s3 + $0x1c] sm:$0xf] %v888
    %933 = vst [vmem:[%s3 + $0x20] sm:$0xf] %v889
    %934 = vst [vmem:[%s3 + $0x24] sm:$0xf] %v890
    %935 = vst [vmem:[%s3 + $0x28] sm:$0xf] %v891
    %936 = vst [vmem:[%s3 + $0x2c] sm:$0xf] %v892
    %937 = vst [vmem:[%s3 + $0x30] sm:$0xf] %v893
    %938 = vst [vmem:[%s3 + $0x34] sm:$0xf] %v894
    %939 = vst [vmem:[%s3 + $0x38] sm:$0xf] %v895
    %940 = vst [vmem:[%s3 + $0x3c] sm:$0xf] %v896
    %941 = vst [vmem:[%s3 + $0x40] sm:$0xf] %v897
    %942 = vst [vmem:[%s3 + $0x44] sm:$0xf] %v898
    %943 = vst [vmem:[%s3 + $0x48] sm:$0xf] %v899
    %944 = vst [vmem:[%s3 + $0x4c] sm:$0xf] %v900
    %945 = vst [vmem:[%s3 + $0x50] sm:$0xf] %v901
    %946 = vst [vmem:[%s3 + $0x54] sm:$0xf] %v902
  $region21: #{forward.25} parent=0 // pred_fallthru
    _
  // Predicated region
  $region22: #{forward.25} parent=0 // pred_check
    _
  $region23: #{forward.25} parent=0 // pred_check_branch
    %948 = sbr.rel (0) target = $region25
  $region24: #{forward.25} parent=0 // pred_region
    _
  $region25: #{forward.25} parent=0 // pred_fallthru
    _
  // Predicated region
  $region26: #{forward.25} parent=0 // pred_check
    _
  $region27: #{forward.25} parent=0 // pred_check_branch
    %950 = sbr.rel (0) target = $region29
  $region28: #{forward.25} parent=0 // pred_region
    _
  $region29: #{forward.25} parent=0 // pred_fallthru
    _

// kernel: forward.27
$region0: #{forward.27}
  #allocation0 [shape = 'u32[]', space=smem, size = 0x4, offset = 0x4, fixed_abs, tag = 'smem constant byte address 0x4 - core index']
  #allocation1 [shape = 'u32[144,128]{1,0:T(1,128)}', space=vmem, size = 0x12000, scoped, tag = 'internal scratch']
  #allocation2 [shape = 'f32[176,128]{1,0:T(8,128)}', space=vmem, size = 0x16000, scoped, tag = 'scratch operand']
  %s0 = inlined_call_operand.vmem [shape: bf16[176,384], index: 0, kind: input, shape index: {}]
  %s1 = inlined_call_operand.vmem [shape: bf16[384,128], index: 1, kind: input, shape index: {}]
  %s2 = inlined_call_operand.vmem [shape: f32[1,128], index: 2, kind: input, shape index: {}]
  %s3 = inlined_call_operand.vmem [shape: f32[176,128], index: 3, kind: output, shape index: {}]
  %s4 = sld [smem:[#allocation0]]
  $region30: #{forward.27} parent=0
    _
  %s6 = ssub.s32 1, %s4
  %s7 = scalar_select 0, %s6, %s4
  // Predicated region
  $region2: #{forward.27} parent=0 // pred_check
    _
  $region3: #{forward.27} parent=0 // pred_check_branch
    %9 = sbr.rel (0) target = $region5
  $region4: #{forward.27} parent=0 // pred_region
    _
  $region5: #{forward.27} parent=0 // pred_fallthru
    _
  // Predicated region
  $region6: #{forward.27} parent=0 // pred_check
    _
  $region7: #{forward.27} parent=0 // pred_check_branch
    %11 = sbr.rel (0) target = $region9
  $region8: #{forward.27} parent=0 // pred_region
    _
  $region9: #{forward.27} parent=0 // pred_fallthru
    _
  // Predicated region
  $region10: #{forward.27} parent=0 // pred_check
    _
  $region11: #{forward.27} parent=0 // pred_check_branch
    %13 = sbr.rel (0) target = $region13
  $region12: #{forward.27} parent=0 // pred_region
    _
  $region13: #{forward.27} parent=0 // pred_fallthru
    _
  %p15 = scmp.eq.s32.totalorder 0, 0
  // Predicated region
  $region14: #{forward.27} parent=0 // pred_check
    %p16 = pneg %p15
  $region15: #{forward.27} parent=0 // pred_check_branch
    %18 = sbr.rel (%p16) target = $region17
  $region16: #{forward.27} parent=0 // pred_region
    %19 = vst [vmem:[#allocation2] sm:$0xff] 0.0
    %20 = vst [vmem:[#allocation2 + $0x8] sm:$0xff] 0.0
    %21 = vst [vmem:[#allocation2 + $0x10] sm:$0xff] 0.0
    %22 = vst [vmem:[#allocation2 + $0x18] sm:$0xff] 0.0
    %23 = vst [vmem:[#allocation2 + $0x20] sm:$0xff] 0.0
    %24 = vst [vmem:[#allocation2 + $0x28] sm:$0xff] 0.0
    %25 = vst [vmem:[#allocation2 + $0x30] sm:$0xff] 0.0
    %26 = vst [vmem:[#allocation2 + $0x38] sm:$0xff] 0.0
    %27 = vst [vmem:[#allocation2 + $0x40] sm:$0xff] 0.0
    %28 = vst [vmem:[#allocation2 + $0x48] sm:$0xff] 0.0
    %29 = vst [vmem:[#allocation2 + $0x50] sm:$0xff] 0.0
    %30 = vst [vmem:[#allocation2 + $0x58] sm:$0xff] 0.0
    %31 = vst [vmem:[#allocation2 + $0x60] sm:$0xff] 0.0
    %32 = vst [vmem:[#allocation2 + $0x68] sm:$0xff] 0.0
    %33 = vst [vmem:[#allocation2 + $0x70] sm:$0xff] 0.0
    %34 = vst [vmem:[#allocation2 + $0x78] sm:$0xff] 0.0
    %35 = vst [vmem:[#allocation2 + $0x80] sm:$0xff] 0.0
    %36 = vst [vmem:[#allocation2 + $0x88] sm:$0xff] 0.0
    %37 = vst [vmem:[#allocation2 + $0x90] sm:$0xff] 0.0
    %38 = vst [vmem:[#allocation2 + $0x98] sm:$0xff] 0.0
    %39 = vst [vmem:[#allocation2 + $0xa0] sm:$0xff] 0.0
    %40 = vst [vmem:[#allocation2 + $0xa8] sm:$0xff] 0.0
  $region17: #{forward.27} parent=0 // pred_fallthru
    _
  %v41 = vld [vmem:[#allocation2] sm:$0xff]
  %v42 = vld [vmem:[#allocation2 + $0x8] sm:$0xff]
  %v43 = vld [vmem:[#allocation2 + $0x10] sm:$0xff]
  %v44 = vld [vmem:[#allocation2 + $0x18] sm:$0xff]
  %v45 = vld [vmem:[#allocation2 + $0x20] sm:$0xff]
  %v46 = vld [vmem:[#allocation2 + $0x28] sm:$0xff]
  %v47 = vld [vmem:[#allocation2 + $0x30] sm:$0xff]
  %v48 = vld [vmem:[#allocation2 + $0x38] sm:$0xff]
  %v49 = vld [vmem:[#allocation2 + $0x40] sm:$0xff]
  %v50 = vld [vmem:[#allocation2 + $0x48] sm:$0xff]
  %v51 = vld [vmem:[#allocation2 + $0x50] sm:$0xff]
  %v52 = vld [vmem:[#allocation2 + $0x58] sm:$0xff]
  %v53 = vld [vmem:[#allocation2 + $0x60] sm:$0xff]
  %v54 = vld [vmem:[#allocation2 + $0x68] sm:$0xff]
  %v55 = vld [vmem:[#allocation2 + $0x70] sm:$0xff]
  %v56 = vld [vmem:[#allocation2 + $0x78] sm:$0xff]
  %v57 = vld [vmem:[#allocation2 + $0x80] sm:$0xff]
  %v58 = vld [vmem:[#allocation2 + $0x88] sm:$0xff]
  %v59 = vld [vmem:[#allocation2 + $0x90] sm:$0xff]
  %v60 = vld [vmem:[#allocation2 + $0x98] sm:$0xff]
  %v61 = vld [vmem:[#allocation2 + $0xa0] sm:$0xff]
  %v62 = vld [vmem:[#allocation2 + $0xa8] sm:$0xff]
  %v63 = vld [vmem:[%s0] sm:$0xff]
  %v64 = vld [vmem:[%s0 + $0x8] sm:$0xf]
  %v65 = vld [vmem:[%s0 + $0xc] sm:$0xff]
  %v66 = vld [vmem:[%s0 + $0x14] sm:$0xf]
  %v67 = vld [vmem:[%s0 + $0x18] sm:$0xff]
  %v68 = vld [vmem:[%s0 + $0x20] sm:$0xf]
  %v69 = vld [vmem:[%s0 + $0x24] sm:$0xff]
  %v70 = vld [vmem:[%s0 + $0x2c] sm:$0xf]
  %v71 = vld [vmem:[%s0 + $0x30] sm:$0xff]
  %v72 = vld [vmem:[%s0 + $0x38] sm:$0xf]
  %v73 = vld [vmem:[%s0 + $0x3c] sm:$0xff]
  %v74 = vld [vmem:[%s0 + $0x44] sm:$0xf]
  %v75 = vld [vmem:[%s0 + $0x48] sm:$0xff]
  %v76 = vld [vmem:[%s0 + $0x50] sm:$0xf]
  %v77 = vld [vmem:[%s0 + $0x54] sm:$0xff]
  %v78 = vld [vmem:[%s0 + $0x5c] sm:$0xf]
  %v79 = vld [vmem:[%s0 + $0x60] sm:$0xff]
  %v80 = vld [vmem:[%s0 + $0x68] sm:$0xf]
  %v81 = vld [vmem:[%s0 + $0x6c] sm:$0xff]
  %v82 = vld [vmem:[%s0 + $0x74] sm:$0xf]
  %v83 = vld [vmem:[%s0 + $0x78] sm:$0xff]
  %v84 = vld [vmem:[%s0 + $0x80] sm:$0xf]
  %v85 = vld [vmem:[%s0 + $0x84] sm:$0xff]
  %v86 = vld [vmem:[%s0 + $0x8c] sm:$0xf]
  %v87 = vld [vmem:[%s0 + $0x90] sm:$0xff]
  %v88 = vld [vmem:[%s0 + $0x98] sm:$0xf]
  %v89 = vld [vmem:[%s0 + $0x9c] sm:$0xff]
  %v90 = vld [vmem:[%s0 + $0xa4] sm:$0xf]
  %v91 = vld [vmem:[%s0 + $0xa8] sm:$0xff]
  %v92 = vld [vmem:[%s0 + $0xb0] sm:$0xf]
  %v93 = vld [vmem:[%s0 + $0xb4] sm:$0xff]
  %v94 = vld [vmem:[%s0 + $0xbc] sm:$0xf]
  %v95 = vld [vmem:[%s0 + $0xc0] sm:$0xff]
  %v96 = vld [vmem:[%s0 + $0xc8] sm:$0xf]
  %v97 = vld [vmem:[%s0 + $0xcc] sm:$0xff]
  %v98 = vld [vmem:[%s0 + $0xd4] sm:$0xf]
  %v99 = vld [vmem:[%s0 + $0xd8] sm:$0xff]
  %v100 = vld [vmem:[%s0 + $0xe0] sm:$0xf]
  %v101 = vld [vmem:[%s0 + $0xe4] sm:$0xff]
  %v102 = vld [vmem:[%s0 + $0xec] sm:$0xf]
  %v103 = vld [vmem:[%s0 + $0xf0] sm:$0xff]
  %v104 = vld [vmem:[%s0 + $0xf8] sm:$0xf]
  %v105 = vld [vmem:[%s0 + $0xfc] sm:$0xff]
  %v106 = vld [vmem:[%s0 + $0x104] sm:$0xf]
  %v107 = vld [vmem:[%s1] sm:$0xf]
  %v108 = vld [vmem:[%s1 + $0x4] sm:$0xf]
  %v109 = vld [vmem:[%s1 + $0x8] sm:$0xf]
  %v110 = vld [vmem:[%s1 + $0xc] sm:$0xf]
  %v111 = vld [vmem:[%s1 + $0x10] sm:$0xf]
  %v112 = vld [vmem:[%s1 + $0x14] sm:$0xf]
  %v113 = vld [vmem:[%s1 + $0x18] sm:$0xf]
  %v114 = vld [vmem:[%s1 + $0x1c] sm:$0xf]
  %v115 = vld [vmem:[%s1 + $0x20] sm:$0xf]
  %v116 = vld [vmem:[%s1 + $0x24] sm:$0xf]
  %v117 = vld [vmem:[%s1 + $0x28] sm:$0xf]
  %v118 = vld [vmem:[%s1 + $0x2c] sm:$0xf]
  %v119 = vld [vmem:[%s1 + $0x30] sm:$0xf]
  %v120 = vld [vmem:[%s1 + $0x34] sm:$0xf]
  %v121 = vld [vmem:[%s1 + $0x38] sm:$0xf]
  %v122 = vld [vmem:[%s1 + $0x3c] sm:$0xf]
  %v123 = vld [vmem:[%s1 + $0x40] sm:$0xf]
  %v124 = vld [vmem:[%s1 + $0x44] sm:$0xf]
  %v125 = vld [vmem:[%s1 + $0x48] sm:$0xf]
  %v126 = vld [vmem:[%s1 + $0x4c] sm:$0xf]
  %v127 = vld [vmem:[%s1 + $0x50] sm:$0xf]
  %v128 = vld [vmem:[%s1 + $0x54] sm:$0xf]
  %v129 = vld [vmem:[%s1 + $0x58] sm:$0xf]
  %v130 = vld [vmem:[%s1 + $0x5c] sm:$0xf]
  %v131 = vld [vmem:[%s1 + $0x60] sm:$0xf]
  %v132 = vld [vmem:[%s1 + $0x64] sm:$0xf]
  %v133 = vld [vmem:[%s1 + $0x68] sm:$0xf]
  %v134 = vld [vmem:[%s1 + $0x6c] sm:$0xf]
  %v135 = vld [vmem:[%s1 + $0x70] sm:$0xf]
  %v136 = vld [vmem:[%s1 + $0x74] sm:$0xf]
  %v137 = vld [vmem:[%s1 + $0x78] sm:$0xf]
  %v138 = vld [vmem:[%s1 + $0x7c] sm:$0xf]
  %v139 = vld [vmem:[%s1 + $0x80] sm:$0xf]
  %v140 = vld [vmem:[%s1 + $0x84] sm:$0xf]
  %v141 = vld [vmem:[%s1 + $0x88] sm:$0xf]
  %v142 = vld [vmem:[%s1 + $0x8c] sm:$0xf]
  %v143 = vld [vmem:[%s1 + $0x90] sm:$0xf]
  %v144 = vld [vmem:[%s1 + $0x94] sm:$0xf]
  %v145 = vld [vmem:[%s1 + $0x98] sm:$0xf]
  %v146 = vld [vmem:[%s1 + $0x9c] sm:$0xf]
  %v147 = vld [vmem:[%s1 + $0xa0] sm:$0xf]
  %v148 = vld [vmem:[%s1 + $0xa4] sm:$0xf]
  %v149 = vld [vmem:[%s1 + $0xa8] sm:$0xf]
  %v150 = vld [vmem:[%s1 + $0xac] sm:$0xf]
  %v151 = vld [vmem:[%s1 + $0xb0] sm:$0xf]
  %v152 = vld [vmem:[%s1 + $0xb4] sm:$0xf]
  %v153 = vld [vmem:[%s1 + $0xb8] sm:$0xf]
  %v154 = vld [vmem:[%s1 + $0xbc] sm:$0xf]
  %v199 = vunpack.c.l.b16 %v63
  %v200 = vunpack.c.h.b16 %v63
  %v201 = vunpack.c.l.b16 %v64
  %v202 = vunpack.c.l.b16 %v65
  %v203 = vunpack.c.h.b16 %v65
  %v204 = vunpack.c.l.b16 %v66
  %v205 = vunpack.c.l.b16 %v67
  %v206 = vunpack.c.h.b16 %v67
  %v207 = vunpack.c.l.b16 %v68
  %v208 = vunpack.c.l.b16 %v69
  %v209 = vunpack.c.h.b16 %v69
  %v210 = vunpack.c.l.b16 %v70
  %v211 = vunpack.c.l.b16 %v71
  %v212 = vunpack.c.h.b16 %v71
  %v213 = vunpack.c.l.b16 %v72
  %v214 = vunpack.c.l.b16 %v73
  %v215 = vunpack.c.h.b16 %v73
  %v216 = vunpack.c.l.b16 %v74
  %v217 = vunpack.c.l.b16 %v75
  %v218 = vunpack.c.h.b16 %v75
  %v219 = vunpack.c.l.b16 %v76
  %v220 = vunpack.c.l.b16 %v77
  %v221 = vunpack.c.h.b16 %v77
  %v222 = vunpack.c.l.b16 %v78
  %v223 = vunpack.c.l.b16 %v79
  %v224 = vunpack.c.h.b16 %v79
  %v225 = vunpack.c.l.b16 %v80
  %v226 = vunpack.c.l.b16 %v81
  %v227 = vunpack.c.h.b16 %v81
  %v228 = vunpack.c.l.b16 %v82
  %v229 = vunpack.c.l.b16 %v83
  %v230 = vunpack.c.h.b16 %v83
  %v231 = vunpack.c.l.b16 %v84
  %v232 = vunpack.c.l.b16 %v85
  %v233 = vunpack.c.h.b16 %v85
  %v234 = vunpack.c.l.b16 %v86
  %v235 = vunpack.c.l.b16 %v87
  %v236 = vunpack.c.h.b16 %v87
  %v237 = vunpack.c.l.b16 %v88
  %v238 = vunpack.c.l.b16 %v89
  %v239 = vunpack.c.h.b16 %v89
  %v240 = vunpack.c.l.b16 %v90
  %v241 = vunpack.c.l.b16 %v91
  %v242 = vunpack.c.h.b16 %v91
  %v243 = vunpack.c.l.b16 %v92
  %v244 = vunpack.c.l.b16 %v93
  %v245 = vunpack.c.h.b16 %v93
  %v246 = vunpack.c.l.b16 %v94
  %v247 = vunpack.c.l.b16 %v95
  %v248 = vunpack.c.h.b16 %v95
  %v249 = vunpack.c.l.b16 %v96
  %v250 = vunpack.c.l.b16 %v97
  %v251 = vunpack.c.h.b16 %v97
  %v252 = vunpack.c.l.b16 %v98
  %v253 = vunpack.c.l.b16 %v99
  %v254 = vunpack.c.h.b16 %v99
  %v255 = vunpack.c.l.b16 %v100
  %v256 = vunpack.c.l.b16 %v101
  %v257 = vunpack.c.h.b16 %v101
  %v258 = vunpack.c.l.b16 %v102
  %v259 = vunpack.c.l.b16 %v103
  %v260 = vunpack.c.h.b16 %v103
  %v261 = vunpack.c.l.b16 %v104
  %v262 = vunpack.c.l.b16 %v105
  %v263 = vunpack.c.h.b16 %v105
  %v264 = vunpack.c.l.b16 %v106
  %v265 = vpack.c.b16 %v202, %v199
  %v266 = vpack.c.b16 %v203, %v200
  %v267 = vpack.c.b16 %v204, %v201
  %v268 = vpack.c.b16 %v208, %v205
  %v269 = vpack.c.b16 %v209, %v206
  %v270 = vpack.c.b16 %v210, %v207
  %v271 = vpack.c.b16 %v214, %v211
  %v272 = vpack.c.b16 %v215, %v212
  %v273 = vpack.c.b16 %v216, %v213
  %v274 = vpack.c.b16 %v220, %v217
  %v275 = vpack.c.b16 %v221, %v218
  %v276 = vpack.c.b16 %v222, %v219
  %v277 = vpack.c.b16 %v226, %v223
  %v278 = vpack.c.b16 %v227, %v224
  %v279 = vpack.c.b16 %v228, %v225
  %v280 = vpack.c.b16 %v232, %v229
  %v281 = vpack.c.b16 %v233, %v230
  %v282 = vpack.c.b16 %v234, %v231
  %v283 = vpack.c.b16 %v238, %v235
  %v284 = vpack.c.b16 %v239, %v236
  %v285 = vpack.c.b16 %v240, %v237
  %v286 = vpack.c.b16 %v244, %v241
  %v287 = vpack.c.b16 %v245, %v242
  %v288 = vpack.c.b16 %v246, %v243
  %v289 = vpack.c.b16 %v250, %v247
  %v290 = vpack.c.b16 %v251, %v248
  %v291 = vpack.c.b16 %v252, %v249
  %v292 = vpack.c.b16 %v256, %v253
  %v293 = vpack.c.b16 %v257, %v254
  %v294 = vpack.c.b16 %v258, %v255
  %v295 = vpack.c.b16 %v262, %v259
  %v296 = vpack.c.b16 %v263, %v260
  %v297 = vpack.c.b16 %v264, %v261
  %v379 = vunpack.c.l.b16 %v107
  %v380 = vunpack.c.l.b16 %v108
  %v381 = vunpack.c.l.b16 %v109
  %v382 = vunpack.c.l.b16 %v110
  %v383 = vunpack.c.l.b16 %v111
  %v384 = vunpack.c.l.b16 %v112
  %v385 = vunpack.c.l.b16 %v113
  %v386 = vunpack.c.l.b16 %v114
  %v387 = vunpack.c.l.b16 %v115
  %v388 = vunpack.c.l.b16 %v116
  %v389 = vunpack.c.l.b16 %v117
  %v390 = vunpack.c.l.b16 %v118
  %v391 = vunpack.c.l.b16 %v119
  %v392 = vunpack.c.l.b16 %v120
  %v393 = vunpack.c.l.b16 %v121
  %v394 = vunpack.c.l.b16 %v122
  %v395 = vunpack.c.l.b16 %v123
  %v396 = vunpack.c.l.b16 %v124
  %v397 = vunpack.c.l.b16 %v125
  %v398 = vunpack.c.l.b16 %v126
  %v399 = vunpack.c.l.b16 %v127
  %v400 = vunpack.c.l.b16 %v128
  %v401 = vunpack.c.l.b16 %v129
  %v402 = vunpack.c.l.b16 %v130
  %v403 = vunpack.c.l.b16 %v131
  %v404 = vunpack.c.l.b16 %v132
  %v405 = vunpack.c.l.b16 %v133
  %v406 = vunpack.c.l.b16 %v134
  %v407 = vunpack.c.l.b16 %v135
  %v408 = vunpack.c.l.b16 %v136
  %v409 = vunpack.c.l.b16 %v137
  %v410 = vunpack.c.l.b16 %v138
  %v411 = vunpack.c.l.b16 %v139
  %v412 = vunpack.c.l.b16 %v140
  %v413 = vunpack.c.l.b16 %v141
  %v414 = vunpack.c.l.b16 %v142
  %v415 = vunpack.c.l.b16 %v143
  %v416 = vunpack.c.l.b16 %v144
  %v417 = vunpack.c.l.b16 %v145
  %v418 = vunpack.c.l.b16 %v146
  %v419 = vunpack.c.l.b16 %v147
  %v420 = vunpack.c.l.b16 %v148
  %v421 = vunpack.c.l.b16 %v149
  %v422 = vunpack.c.l.b16 %v150
  %v423 = vunpack.c.l.b16 %v151
  %v424 = vunpack.c.l.b16 %v152
  %v425 = vunpack.c.l.b16 %v153
  %v426 = vunpack.c.l.b16 %v154
  %v427 = vpack.c.b16 %v380, %v379
  %v428 = vpack.c.b16 %v382, %v381
  %v429 = vpack.c.b16 %v384, %v383
  %v430 = vpack.c.b16 %v386, %v385
  %v431 = vpack.c.b16 %v388, %v387
  %v432 = vpack.c.b16 %v390, %v389
  %v433 = vpack.c.b16 %v392, %v391
  %v434 = vpack.c.b16 %v394, %v393
  %v435 = vpack.c.b16 %v396, %v395
  %v436 = vpack.c.b16 %v398, %v397
  %v437 = vpack.c.b16 %v400, %v399
  %v438 = vpack.c.b16 %v402, %v401
  %v439 = vpack.c.b16 %v404, %v403
  %v440 = vpack.c.b16 %v406, %v405
  %v441 = vpack.c.b16 %v408, %v407
  %v442 = vpack.c.b16 %v410, %v409
  %v443 = vpack.c.b16 %v412, %v411
  %v444 = vpack.c.b16 %v414, %v413
  %v445 = vpack.c.b16 %v416, %v415
  %v446 = vpack.c.b16 %v418, %v417
  %v447 = vpack.c.b16 %v420, %v419
  %v448 = vpack.c.b16 %v422, %v421
  %v449 = vpack.c.b16 %v424, %v423
  %v450 = vpack.c.b16 %v426, %v425
  %475 = vmatprep.subr.bf16.mxu0 0
  %476 = vmatpush1.bf16.msra.mxu0 %v427
  %477 = vmatprep.subr.bf16.mxu0 0
  %478 = vmatpush1.bf16.msra.mxu0 %v428
  %479 = vmatprep.subr.bf16.mxu0 0
  %480 = vmatpush1.bf16.msra.mxu0 %v429
  %481 = vmatprep.subr.bf16.mxu0 0
  %482 = vmatpush1.bf16.msra.mxu0 %v430
  %483 = vmatprep.subr.bf16.mxu0 0
  %484 = vmatpush1.bf16.msra.mxu0 %v431
  %485 = vmatprep.subr.bf16.mxu0 0
  %486 = vmatpush1.bf16.msra.mxu0 %v432
  %487 = vmatprep.subr.bf16.mxu0 0
  %488 = vmatpush1.bf16.msra.mxu0 %v433
  %489 = vmatprep.subr.bf16.mxu0 0
  %490 = vmatpush1.bf16.msra.mxu0 %v434
  %491 = vmatprep.subr.bf16.mxu0 0
  %492 = vmatpush1.bf16.msra.mxu0 %v435
  %493 = vmatprep.subr.bf16.mxu0 0
  %494 = vmatpush1.bf16.msra.mxu0 %v436
  %495 = vmatprep.subr.bf16.mxu0 0
  %496 = vmatpush1.bf16.msra.mxu0 %v437
  %497 = vmatprep.subr.bf16.mxu0 0
  %498 = vmatpush1.bf16.msra.mxu0 %v438
  %499 = vmatprep.subr.bf16.mxu0 0
  %500 = vmatpush1.bf16.msra.mxu0 %v439
  %501 = vmatprep.subr.bf16.mxu0 0
  %502 = vmatpush1.bf16.msra.mxu0 %v440
  %503 = vmatprep.subr.bf16.mxu0 0
  %504 = vmatpush1.bf16.msra.mxu0 %v441
  %505 = vmatprep.subr.bf16.mxu0 0
  %506 = vmatpush1.bf16.msra.mxu0 %v442
  %507 = vmatprep.mubr.bf16.mxu0 %v266
  %508 = vmatmul.mubr.bf16.gmra.mrb[0].mxu0 %v265
  %v509 = vpop.f32.mrb[0].mxu0
  %v510 = vadd.f32 0.0, %v509
  %v511 = vpop.f32.mrb[0].mxu0
  %v512 = vpop.f32.mrb[0].mxu0
  %v513 = vadd.f32 0.0, %v512
  %v514 = vpop.f32.mrb[0].mxu0
  %515 = vmatprep.mubr.bf16.mxu0 %v269
  %516 = vmatmul.mubr.bf16.gmra.mrb[0].mxu0 %v268
  %v517 = vpop.f32.mrb[0].mxu0
  %v518 = vadd.f32 0.0, %v517
  %v519 = vpop.f32.mrb[0].mxu0
  %v520 = vpop.f32.mrb[0].mxu0
  %v521 = vadd.f32 0.0, %v520
  %v522 = vpop.f32.mrb[0].mxu0
  %523 = vmatprep.mubr.bf16.mxu0 %v272
  %524 = vmatmul.mubr.bf16.gmra.mrb[0].mxu0 %v271
  %v525 = vpop.f32.mrb[0].mxu0
  %v526 = vadd.f32 0.0, %v525
  %v527 = vpop.f32.mrb[0].mxu0
  %v528 = vpop.f32.mrb[0].mxu0
  %v529 = vadd.f32 0.0, %v528
  %v530 = vpop.f32.mrb[0].mxu0
  %531 = vmatprep.mubr.bf16.mxu0 %v275
  %532 = vmatmul.mubr.bf16.gmra.mrb[0].mxu0 %v274
  %v533 = vpop.f32.mrb[0].mxu0
  %v534 = vadd.f32 0.0, %v533
  %v535 = vpop.f32.mrb[0].mxu0
  %v536 = vpop.f32.mrb[0].mxu0
  %v537 = vadd.f32 0.0, %v536
  %v538 = vpop.f32.mrb[0].mxu0
  %539 = vmatprep.mubr.bf16.mxu0 %v278
  %540 = vmatmul.mubr.bf16.gmra.mrb[0].mxu0 %v277
  %v541 = vpop.f32.mrb[0].mxu0
  %v542 = vadd.f32 0.0, %v541
  %v543 = vpop.f32.mrb[0].mxu0
  %v544 = vpop.f32.mrb[0].mxu0
  %v545 = vadd.f32 0.0, %v544
  %v546 = vpop.f32.mrb[0].mxu0
  %547 = vmatprep.mubr.bf16.mxu0 %v281
  %548 = vmatmul.mubr.bf16.gmra.mrb[0].mxu0 %v280
  %v549 = vpop.f32.mrb[0].mxu0
  %v550 = vadd.f32 0.0, %v549
  %v551 = vpop.f32.mrb[0].mxu0
  %v552 = vpop.f32.mrb[0].mxu0
  %v553 = vadd.f32 0.0, %v552
  %v554 = vpop.f32.mrb[0].mxu0
  %555 = vmatprep.mubr.bf16.mxu0 %v284
  %556 = vmatmul.mubr.bf16.gmra.mrb[0].mxu0 %v283
  %v557 = vpop.f32.mrb[0].mxu0
  %v558 = vadd.f32 0.0, %v557
  %v559 = vpop.f32.mrb[0].mxu0
  %v560 = vpop.f32.mrb[0].mxu0
  %v561 = vadd.f32 0.0, %v560
  %v562 = vpop.f32.mrb[0].mxu0
  %563 = vmatprep.mubr.bf16.mxu0 %v287
  %564 = vmatmul.mubr.bf16.gmra.mrb[0].mxu0 %v286
  %v565 = vpop.f32.mrb[0].mxu0
  %v566 = vadd.f32 0.0, %v565
  %v567 = vpop.f32.mrb[0].mxu0
  %v568 = vpop.f32.mrb[0].mxu0
  %v569 = vadd.f32 0.0, %v568
  %v570 = vpop.f32.mrb[0].mxu0
  %571 = vmatprep.mubr.bf16.mxu0 %v290
  %572 = vmatmul.mubr.bf16.gmra.mrb[0].mxu0 %v289
  %v573 = vpop.f32.mrb[0].mxu0
  %v574 = vadd.f32 0.0, %v573
  %v575 = vpop.f32.mrb[0].mxu0
  %v576 = vpop.f32.mrb[0].mxu0
  %v577 = vadd.f32 0.0, %v576
  %v578 = vpop.f32.mrb[0].mxu0
  %579 = vmatprep.mubr.bf16.mxu0 %v293
  %580 = vmatmul.mubr.bf16.gmra.mrb[0].mxu0 %v292
  %v581 = vpop.f32.mrb[0].mxu0
  %v582 = vadd.f32 0.0, %v581
  %v583 = vpop.f32.mrb[0].mxu0
  %v584 = vpop.f32.mrb[0].mxu0
  %v585 = vadd.f32 0.0, %v584
  %v586 = vpop.f32.mrb[0].mxu0
  %587 = vmatprep.mubr.bf16.mxu0 %v296
  %588 = vmatmul.mubr.bf16.gmra.mrb[0].mxu0 %v295
  %v589 = vpop.f32.mrb[0].mxu0
  %v590 = vadd.f32 0.0, %v589
  %v591 = vpop.f32.mrb[0].mxu0
  %v592 = vpop.f32.mrb[0].mxu0
  %v593 = vadd.f32 0.0, %v592
  %v594 = vpop.f32.mrb[0].mxu0
  %595 = vdwg.mxu0
  %596 = vmatprep.subr.bf16.mxu0 0
  %597 = vmatpush1.bf16.msra.mxu0 %v443
  %598 = vmatprep.subr.bf16.mxu0 0
  %599 = vmatpush1.bf16.msra.mxu0 %v444
  %600 = vmatprep.subr.bf16.mxu0 0
  %601 = vmatpush1.bf16.msra.mxu0 %v445
  %602 = vmatprep.subr.bf16.mxu0 0
  %603 = vmatpush1.bf16.msra.mxu0 %v446
  %604 = vmatprep.subr.bf16.mxu0 0
  %605 = vmatpush1.bf16.msra.mxu0 %v447
  %606 = vmatprep.subr.bf16.mxu0 0
  %607 = vmatpush1.bf16.msra.mxu0 %v448
  %608 = vmatprep.subr.bf16.mxu0 0
  %609 = vmatpush1.bf16.msra.mxu0 %v449
  %610 = vmatprep.subr.bf16.mxu0 0
  %611 = vmatpush1.bf16.msra.mxu0 %v450
  %612 = vmatprep.subr.bf16.mxu0 0
  %613 = vmatpush1.bf16.msra.mxu0 0
  %614 = vmatprep.subr.bf16.mxu0 0
  %615 = vmatpush1.bf16.msra.mxu0 0
  %616 = vmatprep.subr.bf16.mxu0 0
  %617 = vmatpush1.bf16.msra.mxu0 0
  %618 = vmatprep.subr.bf16.mxu0 0
  %619 = vmatpush1.bf16.msra.mxu0 0
  %620 = vmatprep.subr.bf16.mxu0 0
  %621 = vmatpush1.bf16.msra.mxu0 0
  %622 = vmatprep.subr.bf16.mxu0 0
  %623 = vmatpush1.bf16.msra.mxu0 0
  %624 = vmatprep.subr.bf16.mxu0 0
  %625 = vmatpush1.bf16.msra.mxu0 0
  %626 = vmatprep.subr.bf16.mxu0 0
  %627 = vmatpush1.bf16.msra.mxu0 0
  %628 = vmatprep.mubr.bf16.mxu0 0
  %629 = vmatmul.mubr.bf16.gmra.mrb[0].mxu0 %v267
  %v630 = vpop.f32.mrb[0].mxu0
  %v631 = vadd.f32 %v510, %v630
  %v632 = vpop.f32.mrb[0].mxu0
  %v633 = vpop.f32.mrb[0].mxu0
  %v634 = vadd.f32 %v513, %v633
  %v635 = vpop.f32.mrb[0].mxu0
  %636 = vmatprep.mubr.bf16.mxu0 0
  %637 = vmatmul.mubr.bf16.gmra.mrb[0].mxu0 %v270
  %v638 = vpop.f32.mrb[0].mxu0
  %v639 = vadd.f32 %v518, %v638
  %v640 = vpop.f32.mrb[0].mxu0
  %v641 = vpop.f32.mrb[0].mxu0
  %v642 = vadd.f32 %v521, %v641
  %v643 = vpop.f32.mrb[0].mxu0
  %644 = vmatprep.mubr.bf16.mxu0 0
  %645 = vmatmul.mubr.bf16.gmra.mrb[0].mxu0 %v273
  %v646 = vpop.f32.mrb[0].mxu0
  %v647 = vadd.f32 %v526, %v646
  %v648 = vpop.f32.mrb[0].mxu0
  %v649 = vpop.f32.mrb[0].mxu0
  %v650 = vadd.f32 %v529, %v649
  %v651 = vpop.f32.mrb[0].mxu0
  %652 = vmatprep.mubr.bf16.mxu0 0
  %653 = vmatmul.mubr.bf16.gmra.mrb[0].mxu0 %v276
  %v654 = vpop.f32.mrb[0].mxu0
  %v655 = vadd.f32 %v534, %v654
  %v656 = vpop.f32.mrb[0].mxu0
  %v657 = vpop.f32.mrb[0].mxu0
  %v658 = vadd.f32 %v537, %v657
  %v659 = vpop.f32.mrb[0].mxu0
  %660 = vmatprep.mubr.bf16.mxu0 0
  %661 = vmatmul.mubr.bf16.gmra.mrb[0].mxu0 %v279
  %v662 = vpop.f32.mrb[0].mxu0
  %v663 = vadd.f32 %v542, %v662
  %v664 = vpop.f32.mrb[0].mxu0
  %v665 = vpop.f32.mrb[0].mxu0
  %v666 = vadd.f32 %v545, %v665
  %v667 = vpop.f32.mrb[0].mxu0
  %668 = vmatprep.mubr.bf16.mxu0 0
  %669 = vmatmul.mubr.bf16.gmra.mrb[0].mxu0 %v282
  %v670 = vpop.f32.mrb[0].mxu0
  %v671 = vadd.f32 %v550, %v670
  %v672 = vpop.f32.mrb[0].mxu0
  %v673 = vpop.f32.mrb[0].mxu0
  %v674 = vadd.f32 %v553, %v673
  %v675 = vpop.f32.mrb[0].mxu0
  %676 = vmatprep.mubr.bf16.mxu0 0
  %677 = vmatmul.mubr.bf16.gmra.mrb[0].mxu0 %v285
  %v678 = vpop.f32.mrb[0].mxu0
  %v679 = vadd.f32 %v558, %v678
  %v680 = vpop.f32.mrb[0].mxu0
  %v681 = vpop.f32.mrb[0].mxu0
  %v682 = vadd.f32 %v561, %v681
  %v683 = vpop.f32.mrb[0].mxu0
  %684 = vmatprep.mubr.bf16.mxu0 0
  %685 = vmatmul.mubr.bf16.gmra.mrb[0].mxu0 %v288
  %v686 = vpop.f32.mrb[0].mxu0
  %v687 = vadd.f32 %v566, %v686
  %v688 = vpop.f32.mrb[0].mxu0
  %v689 = vpop.f32.mrb[0].mxu0
  %v690 = vadd.f32 %v569, %v689
  %v691 = vpop.f32.mrb[0].mxu0
  %692 = vmatprep.mubr.bf16.mxu0 0
  %693 = vmatmul.mubr.bf16.gmra.mrb[0].mxu0 %v291
  %v694 = vpop.f32.mrb[0].mxu0
  %v695 = vadd.f32 %v574, %v694
  %v696 = vpop.f32.mrb[0].mxu0
  %v697 = vpop.f32.mrb[0].mxu0
  %v698 = vadd.f32 %v577, %v697
  %v699 = vpop.f32.mrb[0].mxu0
  %700 = vmatprep.mubr.bf16.mxu0 0
  %701 = vmatmul.mubr.bf16.gmra.mrb[0].mxu0 %v294
  %v702 = vpop.f32.mrb[0].mxu0
  %v703 = vadd.f32 %v582, %v702
  %v704 = vpop.f32.mrb[0].mxu0
  %v705 = vpop.f32.mrb[0].mxu0
  %v706 = vadd.f32 %v585, %v705
  %v707 = vpop.f32.mrb[0].mxu0
  %708 = vmatprep.mubr.bf16.mxu0 0
  %709 = vmatmul.mubr.bf16.gmra.mrb[0].mxu0 %v297
  %v710 = vpop.f32.mrb[0].mxu0
  %v711 = vadd.f32 %v590, %v710
  %v712 = vpop.f32.mrb[0].mxu0
  %v713 = vpop.f32.mrb[0].mxu0
  %v714 = vadd.f32 %v593, %v713
  %v715 = vpop.f32.mrb[0].mxu0
  %716 = vdwg.mxu0
  %v717 = vadd.f32 %v41, %v631
  %v718 = vadd.f32 %v42, %v634
  %v719 = vadd.f32 %v43, %v639
  %v720 = vadd.f32 %v44, %v642
  %v721 = vadd.f32 %v45, %v647
  %v722 = vadd.f32 %v46, %v650
  %v723 = vadd.f32 %v47, %v655
  %v724 = vadd.f32 %v48, %v658
  %v725 = vadd.f32 %v49, %v663
  %v726 = vadd.f32 %v50, %v666
  %v727 = vadd.f32 %v51, %v671
  %v728 = vadd.f32 %v52, %v674
  %v729 = vadd.f32 %v53, %v679
  %v730 = vadd.f32 %v54, %v682
  %v731 = vadd.f32 %v55, %v687
  %v732 = vadd.f32 %v56, %v690
  %v733 = vadd.f32 %v57, %v695
  %v734 = vadd.f32 %v58, %v698
  %v735 = vadd.f32 %v59, %v703
  %v736 = vadd.f32 %v60, %v706
  %v737 = vadd.f32 %v61, %v711
  %v738 = vadd.f32 %v62, %v714
  %739 = vst [vmem:[#allocation2] sm:$0xff] %v717
  %740 = vst [vmem:[#allocation2 + $0x8] sm:$0xff] %v718
  %741 = vst [vmem:[#allocation2 + $0x10] sm:$0xff] %v719
  %742 = vst [vmem:[#allocation2 + $0x18] sm:$0xff] %v720
  %743 = vst [vmem:[#allocation2 + $0x20] sm:$0xff] %v721
  %744 = vst [vmem:[#allocation2 + $0x28] sm:$0xff] %v722
  %745 = vst [vmem:[#allocation2 + $0x30] sm:$0xff] %v723
  %746 = vst [vmem:[#allocation2 + $0x38] sm:$0xff] %v724
  %747 = vst [vmem:[#allocation2 + $0x40] sm:$0xff] %v725
  %748 = vst [vmem:[#allocation2 + $0x48] sm:$0xff] %v726
  %749 = vst [vmem:[#allocation2 + $0x50] sm:$0xff] %v727
  %750 = vst [vmem:[#allocation2 + $0x58] sm:$0xff] %v728
  %751 = vst [vmem:[#allocation2 + $0x60] sm:$0xff] %v729
  %752 = vst [vmem:[#allocation2 + $0x68] sm:$0xff] %v730
  %753 = vst [vmem:[#allocation2 + $0x70] sm:$0xff] %v731
  %754 = vst [vmem:[#allocation2 + $0x78] sm:$0xff] %v732
  %755 = vst [vmem:[#allocation2 + $0x80] sm:$0xff] %v733
  %756 = vst [vmem:[#allocation2 + $0x88] sm:$0xff] %v734
  %757 = vst [vmem:[#allocation2 + $0x90] sm:$0xff] %v735
  %758 = vst [vmem:[#allocation2 + $0x98] sm:$0xff] %v736
  %759 = vst [vmem:[#allocation2 + $0xa0] sm:$0xff] %v737
  %760 = vst [vmem:[#allocation2 + $0xa8] sm:$0xff] %v738
  // Predicated region
  $region18: #{forward.27} parent=0 // pred_check
    %p761 = pneg %p15
  $region19: #{forward.27} parent=0 // pred_check_branch
    %763 = sbr.rel (%p761) target = $region21
  $region20: #{forward.27} parent=0 // pred_region
    %v764 = vld [vmem:[#allocation2] sm:$0xff]
    %v765 = vld [vmem:[#allocation2 + $0x8] sm:$0xff]
    %v766 = vld [vmem:[#allocation2 + $0x10] sm:$0xff]
    %v767 = vld [vmem:[#allocation2 + $0x18] sm:$0xff]
    %v768 = vld [vmem:[#allocation2 + $0x20] sm:$0xff]
    %v769 = vld [vmem:[#allocation2 + $0x28] sm:$0xff]
    %v770 = vld [vmem:[#allocation2 + $0x30] sm:$0xff]
    %v771 = vld [vmem:[#allocation2 + $0x38] sm:$0xff]
    %v772 = vld [vmem:[#allocation2 + $0x40] sm:$0xff]
    %v773 = vld [vmem:[#allocation2 + $0x48] sm:$0xff]
    %v774 = vld [vmem:[#allocation2 + $0x50] sm:$0xff]
    %v775 = vld [vmem:[#allocation2 + $0x58] sm:$0xff]
    %v776 = vld [vmem:[#allocation2 + $0x60] sm:$0xff]
    %v777 = vld [vmem:[#allocation2 + $0x68] sm:$0xff]
    %v778 = vld [vmem:[#allocation2 + $0x70] sm:$0xff]
    %v779 = vld [vmem:[#allocation2 + $0x78] sm:$0xff]
    %v780 = vld [vmem:[#allocation2 + $0x80] sm:$0xff]
    %v781 = vld [vmem:[#allocation2 + $0x88] sm:$0xff]
    %v782 = vld [vmem:[#allocation2 + $0x90] sm:$0xff]
    %v783 = vld [vmem:[#allocation2 + $0x98] sm:$0xff]
    %v784 = vld [vmem:[#allocation2 + $0xa0] sm:$0xff]
    %v785 = vld [vmem:[#allocation2 + $0xa8] sm:$0xff]
    %v786 = vld [vmem:[%s2] sm:$0x1]
    %v788 = vlaneseq
    %v789 = vshrl.u32 %v788, 7
    %v790 = vsub.s32 0, %v789
    %v791 = vrot.slane %v786, %v790
    %v793 = vadd.f32 %v764, %v791
    %v794 = vadd.f32 %v765, %v791
    %v795 = vadd.f32 %v766, %v791
    %v796 = vadd.f32 %v767, %v791
    %v797 = vadd.f32 %v768, %v791
    %v798 = vadd.f32 %v769, %v791
    %v799 = vadd.f32 %v770, %v791
    %v800 = vadd.f32 %v771, %v791
    %v801 = vadd.f32 %v772, %v791
    %v802 = vadd.f32 %v773, %v791
    %v803 = vadd.f32 %v774, %v791
    %v804 = vadd.f32 %v775, %v791
    %v805 = vadd.f32 %v776, %v791
    %v806 = vadd.f32 %v777, %v791
    %v807 = vadd.f32 %v778, %v791
    %v808 = vadd.f32 %v779, %v791
    %v809 = vadd.f32 %v780, %v791
    %v810 = vadd.f32 %v781, %v791
    %v811 = vadd.f32 %v782, %v791
    %v812 = vadd.f32 %v783, %v791
    %v813 = vadd.f32 %v784, %v791
    %v814 = vadd.f32 %v785, %v791
    %815 = vst [vmem:[%s3] sm:$0xff] %v793
    %816 = vst [vmem:[%s3 + $0x8] sm:$0xff] %v794
    %817 = vst [vmem:[%s3 + $0x10] sm:$0xff] %v795
    %818 = vst [vmem:[%s3 + $0x18] sm:$0xff] %v796
    %819 = vst [vmem:[%s3 + $0x20] sm:$0xff] %v797
    %820 = vst [vmem:[%s3 + $0x28] sm:$0xff] %v798
    %821 = vst [vmem:[%s3 + $0x30] sm:$0xff] %v799
    %822 = vst [vmem:[%s3 + $0x38] sm:$0xff] %v800
    %823 = vst [vmem:[%s3 + $0x40] sm:$0xff] %v801
    %824 = vst [vmem:[%s3 + $0x48] sm:$0xff] %v802
    %825 = vst [vmem:[%s3 + $0x50] sm:$0xff] %v803
    %826 = vst [vmem:[%s3 + $0x58] sm:$0xff] %v804
    %827 = vst [vmem:[%s3 + $0x60] sm:$0xff] %v805
    %828 = vst [vmem:[%s3 + $0x68] sm:$0xff] %v806
    %829 = vst [vmem:[%s3 + $0x70] sm:$0xff] %v807
    %830 = vst [vmem:[%s3 + $0x78] sm:$0xff] %v808
    %831 = vst [vmem:[%s3 + $0x80] sm:$0xff] %v809
    %832 = vst [vmem:[%s3 + $0x88] sm:$0xff] %v810
    %833 = vst [vmem:[%s3 + $0x90] sm:$0xff] %v811
    %834 = vst [vmem:[%s3 + $0x98] sm:$0xff] %v812
    %835 = vst [vmem:[%s3 + $0xa0] sm:$0xff] %v813
    %836 = vst [vmem:[%s3 + $0xa8] sm:$0xff] %v814
  $region21: #{forward.27} parent=0 // pred_fallthru
    _
  // Predicated region
  $region22: #{forward.27} parent=0 // pred_check
    _
  $region23: #{forward.27} parent=0 // pred_check_branch
    %838 = sbr.rel (0) target = $region25
  $region24: #{forward.27} parent=0 // pred_region
    _
  $region25: #{forward.27} parent=0 // pred_fallthru
    _
  // Predicated region
  $region26: #{forward.27} parent=0 // pred_check
    _
  $region27: #{forward.27} parent=0 // pred_check_branch
    %840 = sbr.rel (0) target = $region29
  $region28: #{forward.27} parent=0 // pred_region
    _
  $region29: #{forward.27} parent=0 // pred_fallthru
    _

// kernel: forward.31
$region0: #{forward.31}
  #allocation0 [shape = 'u32[]', space=smem, size = 0x4, offset = 0x4, fixed_abs, tag = 'smem constant byte address 0x4 - core index']
  #allocation1 [shape = 'u32[144,128]{1,0:T(1,128)}', space=vmem, size = 0x12000, scoped, tag = 'internal scratch']
  %s0 = inlined_call_operand.vmem [shape: f32[2,4,756], index: 0, kind: input, shape index: {}]
  %s1 = inlined_call_operand.hbm [shape: f32[2,4,756], index: 1, kind: output, shape index: {}]
  %s2 = sld [smem:[#allocation0]]
  $region37: #{forward.31} parent=0
    _
  %s4 = ssub.s32 1, %s2
  %s5 = scalar_select 0, %s4, %s2
  $region1: #{forward.31} parent=0
    #allocation2 [shape = 'u8[24576]{0}', space=vmem, size = 0x6000, scoped, tag = 'output window, operand 0']
    #allocation3 [shape = 's32[2]{0}', space=sflag, size = 0x8, scoped, tag = 'scoped memory for forward.31']
    %6 = vsyncpa [#allocation3], 0
    %s7 = scalar_lea.sflag [#allocation3], 1
    %8 = vsyncpa %s7, 0
    loop: start=0, step=1, limit=4
    $region2: #{forward.31} parent=1 // loop_pre_header
      _
    $region3: #{forward.31} parent=1 // loop_header
      %s10 = sphi 0, %s14
      %p11 = scmp.ge.s32.totalorder %s10, 4
      %s20 = sphi 0, %s22
      %s23 = sphi 0, %s20
      %s24 = sphi 0, %s23
      %s40 = sphi 0, %s24
      %s46 = sphi 0, %s48
      %s49 = sphi 0, %s46
      %s50 = sphi 0, %s49
      %s66 = sphi 0, %s50
    $region4: #{forward.31} parent=1 // loop_header_branch
      %13 = sbr.rel (%p11) target = $region8
    $region5: #{forward.31} parent=1 // loop_body
      %s15 = ssub.s32 %s10, 1
      %s16 = ssub.s32 %s10, 2
      %s17 = sadd.s32 %s10, 1
      %s18 = ssub.s32 %s10, %s17
      %p19 = scmp.eq.s32.totalorder %s18, 0
      %s21 = sadd.s32 %s20, 1
      %s22 = scalar_select %p19, %s20, %s21
      %p25 = pneg %p19
      %p26 = scmp.eq.s32.totalorder %s10, 1
      %p27 = por %p25, %p26
      %p28 = scmp.ne.s32.totalorder %s20, %s23
      %p29 = scmp.eq.s32.totalorder %s10, 0
      %p30 = por %p28, %p29
      %p31 = scmp.ne.s32.totalorder %s20, %s23
      %p32 = scmp.eq.s32.totalorder %s15, 1
      %p33 = por %p31, %p32
      %p34 = scmp.ne.s32.totalorder %s23, %s24
      %p35 = scmp.eq.s32.totalorder %s15, 0
      %p36 = por %p34, %p35
      %p37 = scmp.ne.s32.totalorder %s23, %s24
      %p38 = scmp.eq.s32.totalorder %s16, 1
      %p39 = por %p37, %p38
      %p41 = scmp.ne.s32.totalorder %s24, %s40
      %p42 = scmp.eq.s32.totalorder %s16, 0
      %p43 = por %p41, %p42
      %s44 = ssub.s32 %s10, %s17
      %p45 = scmp.eq.s32.totalorder %s44, 0
      %s47 = sadd.s32 %s46, 1
      %s48 = scalar_select %p45, %s46, %s47
      %p51 = pneg %p45
      %p52 = scmp.eq.s32.totalorder %s10, 1
      %p53 = por %p51, %p52
      %p54 = scmp.ne.s32.totalorder %s46, %s49
      %p55 = scmp.eq.s32.totalorder %s10, 0
      %p56 = por %p54, %p55
      %p57 = scmp.ne.s32.totalorder %s46, %s49
      %p58 = scmp.eq.s32.totalorder %s15, 1
      %p59 = por %p57, %p58
      %p60 = scmp.ne.s32.totalorder %s49, %s50
      %p61 = scmp.eq.s32.totalorder %s15, 0
      %p62 = por %p60, %p61
      %p63 = scmp.ne.s32.totalorder %s49, %s50
      %p64 = scmp.eq.s32.totalorder %s16, 1
      %p65 = por %p63, %p64
      %p67 = scmp.ne.s32.totalorder %s50, %s66
      %p68 = scmp.eq.s32.totalorder %s16, 0
      %p69 = por %p67, %p68
      %p70 = scmp.le.s32.totalorder 1, %s10
      %p71 = scmp.lt.s32.totalorder %s10, 3
      %p72 = pnand %p70, %p71
      %p73 = pneg %p72
      // Predicated region
      $region9: #{forward.31} parent=5 // pred_check
        _
      $region10: #{forward.31} parent=5 // pred_check_branch
        %75 = sbr.rel (%p72) target = $region12
      $region11: #{forward.31} parent=5 // pred_region
        %s76 = ssub.s32 %s10, 1
      $region12: #{forward.31} parent=5 // pred_fallthru
        _
      %p77 = scmp.lt.s32.totalorder %s10, 2
      // Predicated region
      $region13: #{forward.31} parent=5 // pred_check
        %p78 = pneg %p77
      $region14: #{forward.31} parent=5 // pred_check_branch
        %80 = sbr.rel (%p78) target = $region16
      $region15: #{forward.31} parent=5 // pred_region
        // Predicated region
        $region17: #{forward.31} parent=15 // pred_check
          %p81 = pneg %p30
        $region18: #{forward.31} parent=15 // pred_check_branch
          %83 = sbr.rel (%p81) target = $region20
        $region19: #{forward.31} parent=15 // pred_region
          %p84 = scmp.lt.s32.totalorder %s10, 1
          %s85 = scalar_select %p84, %s10, 1
          %s86 = smul.addr %s85, 6
          %s87 = smul.addr %s86, 4
          %s88 = scalar_lea.vmem %s0, %s87
        $region20: #{forward.31} parent=15 // pred_fallthru
          _
      $region16: #{forward.31} parent=5 // pred_fallthru
        _
      %p89 = scmp.le.s32.totalorder 1, %s10
      %p90 = scmp.lt.s32.totalorder %s10, 3
      %p91 = pnand %p89, %p90
      %p92 = pneg %p91
      // Predicated region
      $region21: #{forward.31} parent=5 // pred_check
        _
      $region22: #{forward.31} parent=5 // pred_check_branch
        %94 = sbr.rel (%p91) target = $region24
      $region23: #{forward.31} parent=5 // pred_region
        %s95 = ssub.s32 %s10, 1
        %p96 = scmp.lt.s32.totalorder %s15, 1
        %s97 = scalar_select %p96, %s15, 1
        %s98 = smul.addr %s97, 6
        %s99 = smul.addr %s98, 4
        %s100 = scalar_lea.vmem %s0, %s99
        %p101 = pneg %p36
        %p102 = pneg %p33
        %p103 = pneg %p62
        %p104 = pneg %p59
        %s105 = sand.u32 %s49, 1
        %s106 = scalar_lea.sflag [#allocation3], %s105
        %s107 = sand.u32 %s49, 1
        %s108 = smul.addr %s107, 24
        %s109 = scalar_lea.vmem [#allocation2], %s108
        %p110 = scmp.lt.s32.totalorder %s15, 1
        %s111 = scalar_select %p110, %s15, 1
        %s112 = smul.addr %s111, 6
        %s113 = smul.addr %s112, 4
        %s114 = scalar_lea.vmem %s0, %s113
        %v115 = vld [vmem:[%s114] sm:$0xff]
        %v116 = vld [vmem:[%s114 + $0x8] sm:$0xff]
        %v117 = vld [vmem:[%s114 + $0x10] sm:$0xff]
        %v121 = vcombine.high %v115, %v115
        %v122 = vcombine.high %v116, %v116
        %v123 = vcombine.high %v117, %v117
        %vm127 = vcmask 1043456
        %v128 = vsel %vm127, %v115, -inf
        %v129 = vrot.slane %v128, 4
        %v130 = vmax.f32 %v128, %v129
        %v131 = vrot.slane %v130, 2
        %v132 = vmax.f32 %v130, %v131
        %v133 = vrot.slane %v132, 1
        %v134 = vmax.f32 %v132, %v133
        %v135 = vsel %vm127, %v121, -inf
        %v136 = vrot.slane %v135, 4
        %v137 = vmax.f32 %v135, %v136
        %v138 = vrot.slane %v137, 2
        %v139 = vmax.f32 %v137, %v138
        %v140 = vrot.slane %v139, 1
        %v141 = vmax.f32 %v139, %v140
        %v142 = vsel %vm127, %v116, -inf
        %v143 = vrot.slane %v142, 4
        %v144 = vmax.f32 %v142, %v143
        %v145 = vrot.slane %v144, 2
        %v146 = vmax.f32 %v144, %v145
        %v147 = vrot.slane %v146, 1
        %v148 = vmax.f32 %v146, %v147
        %v149 = vsel %vm127, %v122, -inf
        %v150 = vrot.slane %v149, 4
        %v151 = vmax.f32 %v149, %v150
        %v152 = vrot.slane %v151, 2
        %v153 = vmax.f32 %v151, %v152
        %v154 = vrot.slane %v153, 1
        %v155 = vmax.f32 %v153, %v154
        %v156 = vsel %vm127, %v117, -inf
        %v157 = vrot.slane %v156, 4
        %v158 = vmax.f32 %v156, %v157
        %v159 = vrot.slane %v158, 2
        %v160 = vmax.f32 %v158, %v159
        %v161 = vrot.slane %v160, 1
        %v162 = vmax.f32 %v160, %v161
        %vm163 = vcmask 945152
        %v164 = vsel %vm163, %v123, -inf
        %v165 = vrot.slane %v164, 4
        %v166 = vmax.f32 %v164, %v165
        %v167 = vrot.slane %v166, 2
        %v168 = vmax.f32 %v166, %v167
        %v169 = vrot.slane %v168, 1
        %v170 = vmax.f32 %v168, %v169
        %v177 = vcombine.low %v134, %v141
        %v178 = vcombine.low %v148, %v155
        %v179 = vcombine.low %v162, %v170
        %v183 = vsub.f32 %v115, %v177
        %v184 = vsub.f32 %v116, %v178
        %v185 = vsub.f32 %v117, %v179
        %v186 = vmul.f32 %v183, 1.442695
        %v187 = vpow.pop %v186
        %v188 = vmul.f32 %v184, 1.442695
        %v189 = vpow.pop %v188
        %v190 = vmul.f32 %v185, 1.442695
        %v191 = vpow.pop %v190
        %v195 = vcombine.high %v187, %v187
        %v196 = vcombine.high %v189, %v189
        %v197 = vcombine.high %v191, %v191
        %v201 = vsel %vm127, %v187, 0.0
        %v202 = vrot.slane %v201, 4
        %v203 = vadd.f32 %v201, %v202
        %v204 = vrot.slane %v203, 2
        %v205 = vadd.f32 %v203, %v204
        %v206 = vrot.slane %v205, 1
        %v207 = vadd.f32 %v205, %v206
        %v208 = vsel %vm127, %v195, 0.0
        %v209 = vrot.slane %v208, 4
        %v210 = vadd.f32 %v208, %v209
        %v211 = vrot.slane %v210, 2
        %v212 = vadd.f32 %v210, %v211
        %v213 = vrot.slane %v212, 1
        %v214 = vadd.f32 %v212, %v213
        %v215 = vsel %vm127, %v189, 0.0
        %v216 = vrot.slane %v215, 4
        %v217 = vadd.f32 %v215, %v216
        %v218 = vrot.slane %v217, 2
        %v219 = vadd.f32 %v217, %v218
        %v220 = vrot.slane %v219, 1
        %v221 = vadd.f32 %v219, %v220
        %v222 = vsel %vm127, %v196, 0.0
        %v223 = vrot.slane %v222, 4
        %v224 = vadd.f32 %v222, %v223
        %v225 = vrot.slane %v224, 2
        %v226 = vadd.f32 %v224, %v225
        %v227 = vrot.slane %v226, 1
        %v228 = vadd.f32 %v226, %v227
        %v229 = vsel %vm127, %v191, 0.0
        %v230 = vrot.slane %v229, 4
        %v231 = vadd.f32 %v229, %v230
        %v232 = vrot.slane %v231, 2
        %v233 = vadd.f32 %v231, %v232
        %v234 = vrot.slane %v233, 1
        %v235 = vadd.f32 %v233, %v234
        %v236 = vsel %vm163, %v197, 0.0
        %v237 = vrot.slane %v236, 4
        %v238 = vadd.f32 %v236, %v237
        %v239 = vrot.slane %v238, 2
        %v240 = vadd.f32 %v238, %v239
        %v241 = vrot.slane %v240, 1
        %v242 = vadd.f32 %v240, %v241
        %v243 = vlog2.pop %v207
        %v244 = vmul.f32 %v243, 0.6931472
        %v245 = vlog2.pop %v214
        %v246 = vmul.f32 %v245, 0.6931472
        %v247 = vlog2.pop %v221
        %v248 = vmul.f32 %v247, 0.6931472
        %v249 = vlog2.pop %v228
        %v250 = vmul.f32 %v249, 0.6931472
        %v251 = vlog2.pop %v235
        %v252 = vmul.f32 %v251, 0.6931472
        %v253 = vlog2.pop %v242
        %v254 = vmul.f32 %v253, 0.6931472
        %v261 = vcombine.low %v244, %v246
        %v262 = vcombine.low %v248, %v250
        %v263 = vcombine.low %v252, %v254
        %v267 = vsub.f32 %v183, %v261
        %v268 = vsub.f32 %v184, %v262
        %v269 = vsub.f32 %v185, %v263
        %270 = vst [vmem:[%s109] sm:$0xff] %v267
        %271 = vst [vmem:[%s109 + $0x8] sm:$0xff] %v268
        %vm272 = vcmask 949252
        %vm273 = vmor %vm272, %vm127
        %274 = vst.msk [vmem:[%s109 + $0x10] sm:$0xff] %vm273, %v269
        %s275 = sand.u32 %s49, 1
        %s276 = scalar_lea.sflag [#allocation3], %s275
        %s277 = sand.u32 %s49, 1
        %s278 = smul.addr %s277, 24
        %s279 = scalar_lea.vmem [#allocation2], %s278
        // Predicated region
        $region25: #{forward.31} parent=23 // pred_check
          %p280 = pneg %p59
        $region26: #{forward.31} parent=23 // pred_check_branch
          %282 = sbr.rel (%p280) target = $region28
        $region27: #{forward.31} parent=23 // pred_region
          %s284 = ssub.s32 384, 384
          %285 = vsyncadd %s276, %s284
          %s286 = smul.addr %s15, 6
          %s287 = smul.addr %s286, 64
          %s288 = scalar_lea.hbm %s1, %s287
          %s290 = sshll.u32 %s279, 4
          %s291 = int_to_ptr.vmem [resolvable:$true] %s290
          %293 = dma.vmem_to_hbm [thread:$0]  %s291, 384, %s288, %s276
        $region28: #{forward.31} parent=23 // pred_fallthru
          _
      $region24: #{forward.31} parent=5 // pred_fallthru
        _
      %p294 = scmp.le.s32.totalorder 2, %s10
      // Predicated region
      $region29: #{forward.31} parent=5 // pred_check
        %p295 = pneg %p294
      $region30: #{forward.31} parent=5 // pred_check_branch
        %297 = sbr.rel (%p295) target = $region32
      $region31: #{forward.31} parent=5 // pred_region
        %s298 = ssub.s32 %s10, 2
        // Predicated region
        $region33: #{forward.31} parent=31 // pred_check
          %p299 = pneg %p65
        $region34: #{forward.31} parent=31 // pred_check_branch
          %301 = sbr.rel (%p299) target = $region36
        $region35: #{forward.31} parent=31 // pred_region
          %s302 = sand.u32 %s50, 1
          %s303 = scalar_lea.sflag [#allocation3], %s302
          %s304 = sand.u32 %s50, 1
          %s305 = smul.addr %s304, 24
          %s306 = scalar_lea.vmem [#allocation2], %s305
          %307 = dma.done %s303, 384
        $region36: #{forward.31} parent=31 // pred_fallthru
          _
      $region32: #{forward.31} parent=5 // pred_fallthru
        _
    $region6: #{forward.31} parent=1 // loop_footer
      %s14 = sadd.s32 1, %s10
    $region7: #{forward.31} parent=1 // loop_footer_branch
      %9 = sbr.rel target = $region3
    $region8: #{forward.31} parent=1 // loop_exit
      _
    %308 = vsyncpa [#allocation3], 1
    %s309 = scalar_lea.sflag [#allocation3], 1
    %310 = vsyncpa %s309, 1

</llo_original>
